<compile_context>
chip_gen: v7x
topology: tpu7x:2x2x1
jax: 0.10.0
libtpu: 0.0.40
codegen_flags: <defaults>
</compile_context>

<pallas_src>
import functools

import jax
import jax.numpy as jnp
from jax.experimental import pallas as pl
from jax.experimental.pallas import tpu as pltpu


# ----------------------------------------------------------------------------
# model-stub dimensions
# ----------------------------------------------------------------------------
PATCH = 8        # backbone stub spatial reduction (ResNet101 reduces by 8)
FEAT_CH = 128    # backbone feature channels (synthetic stand-in for 2048)
ENC_CH = 32      # per-branch channels; 4 fused ASPP branches -> 128-wide matmul
ROW_TILE = 512   # row tile for the (M, C) matmul kernels (mult. of 8).
                 # bf16 double-buffered tiles: 2*(512*192 + 512*128)*2B < 1 MiB,
                 # comfortably inside v7x's 32 MiB scoped VMEM.
H_TILE = 8       # output-row tile of the fused upsample+ordinal kernel


# ----------------------------------------------------------------------------
# Pallas kernels
# ----------------------------------------------------------------------------
def _backbone_kernel(x_ref, w_ref, b_ref, o_ref):
    """o = relu(x @ w + b); bf16 MXU inputs, f32 accumulation."""
    acc = jnp.dot(x_ref[...], w_ref[...], preferred_element_type=jnp.float32)
    acc = jnp.maximum(acc + b_ref[...], 0.0)
    o_ref[...] = acc.astype(o_ref.dtype)


def backbone_stub(patches, w, b, *, row_tile=ROW_TILE):
    """Patchify-conv backbone stub as a row-tiled Pallas matmul.

    TODO(synk): full ResNet101 backbone replaced by a single patchify-conv stub.
    """
    M, Cin = patches.shape
    Cout = w.shape[1]
    tm = min(row_tile, M)
    return pl.pallas_call(
        _backbone_kernel,
        out_shape=jax.ShapeDtypeStruct((M, Cout), jnp.bfloat16),
        grid=(pl.cdiv(M, tm),),
        in_specs=[
            pl.BlockSpec((tm, Cin), lambda i: (i, 0)),
            pl.BlockSpec((Cin, Cout), lambda i: (0, 0)),
            pl.BlockSpec((1, Cout), lambda i: (0, 0)),
        ],
        out_specs=pl.BlockSpec((tm, Cout), lambda i: (i, 0)),
        compiler_params=pltpu.CompilerParams(
            dimension_semantics=("parallel",)),
    )(patches.astype(jnp.bfloat16), w.astype(jnp.bfloat16),
      b.reshape(1, Cout).astype(jnp.float32))


def _scene_kernel(feat_ref, w_aspp_ref, b_aspp_ref, w_cat_ref, bias_ref, o_ref):
    """Fused ASPP (4 branches as one matmul) + concat projection.

    h   = relu(feat @ W_aspp_all + b_aspp_all)         # (tm, 4E)
    out = h @ W_cat_aspp + bias                        # bias = enc@W_cat_enc + b_cat
    """
    h = jnp.dot(feat_ref[...], w_aspp_ref[...],
                preferred_element_type=jnp.float32)
    h = jnp.maximum(h + b_aspp_ref[...], 0.0)
    out = jnp.dot(h.astype(jnp.bfloat16), w_cat_ref[...],
                  preferred_element_type=jnp.float32)
    o_ref[...] = (out + bias_ref[...]).astype(o_ref.dtype)


def scene_module(feat, w_aspp, b_aspp, w_cat, row_bias, *, row_tile=ROW_TILE):
    """TODO(synk): dilated 3x3 ASPP convs (rates 6/12/18) approximated by fused
    1x1 convs on the synthetic low-res feature map."""
    M, F = feat.shape
    C4 = w_aspp.shape[1]
    K2 = w_cat.shape[1]
    tm = min(row_tile, M)
    return pl.pallas_call(
        _scene_kernel,
        out_shape=jax.ShapeDtypeStruct((M, K2), jnp.float32),
        grid=(pl.cdiv(M, tm),),
        in_specs=[
            pl.BlockSpec((tm, F), lambda i: (i, 0)),
            pl.BlockSpec((F, C4), lambda i: (0, 0)),
            pl.BlockSpec((1, C4), lambda i: (0, 0)),
            pl.BlockSpec((C4, K2), lambda i: (0, 0)),
            pl.BlockSpec((tm, K2), lambda i: (i, 0)),
        ],
        out_specs=pl.BlockSpec((tm, K2), lambda i: (i, 0)),
        compiler_params=pltpu.CompilerParams(
            dimension_semantics=("parallel",)),
    )(feat.astype(jnp.bfloat16), w_aspp.astype(jnp.bfloat16),
      b_aspp.reshape(1, C4).astype(jnp.float32),
      w_cat.astype(jnp.bfloat16), row_bias.astype(jnp.float32))


def _upsample_ordinal_kernel(wy_ref, wxt_ref, f_ref, prob_ref, label_ref,
                             *, ord_num):
    """Fused bilinear upsample (align_corners=True) + ordinal regression + label.

    f_ref : (1, 2K, Hf, Wf) channel-major low-res ordinal logits of one image.
    wy_ref: (TH, Hf) row-interp weights for this output-row block.
    wxt_ref:(Wf, W)  column-interp weights (transposed).
    Channel layout is pair-major ([x0 block | x1 block], matching
    x.view(N, 2, K, H, W)); softmax over the pair -> sigmoid(x0 - x1).
    Upsample happens on the pre-softmax logits (matches the reference ordering).
    """
    f = f_ref[0]                                           # (2K, Hf, Wf) f32
    wy = wy_ref[...]                                       # (TH, Hf)
    wxt = wxt_ref[...]                                     # (Wf, W)
    c2 = f.shape[0]

    # upsample along H: batched (over channel) small MXU matmul
    wy_b = jnp.broadcast_to(wy[None], (c2,) + wy.shape)    # (2K, TH, Hf)
    t1 = jax.lax.dot_general(
        wy_b, f, dimension_numbers=(((2,), (1,)), ((0,), (0,))),
        preferred_element_type=jnp.float32)                # (2K, TH, Wf)

    # upsample along W
    wxt_b = jnp.broadcast_to(wxt[None], (c2,) + wxt.shape)  # (2K, Wf, W)
    up = jax.lax.dot_general(
        t1, wxt_b, dimension_numbers=(((2,), (1,)), ((0,), (0,))),
        preferred_element_type=jnp.float32)                # (2K, TH, W)

    # pair split along the MAJOR axis (lane-aligned, no cross-lane slicing)
    x0 = up[:ord_num]
    x1 = up[ord_num:]
    prob = jax.nn.sigmoid(x0 - x1)                         # (K, TH, W)
    prob_ref[...] = prob[None].astype(prob_ref.dtype)

    # label = sum(prob >= 0.5) over the ordinal axis; lane-dense (TH, W) store
    label = jnp.sum((prob >= 0.5).astype(jnp.int32), axis=0)   # (TH, W)
    label_ref[...] = label[None, None]


def upsample_ordinal(wy, wxt, f_cm, *, ord_num):
    N, K2, Hf, Wf = f_cm.shape
    H = wy.shape[0]
    W = wxt.shape[1]
    th = H_TILE if H % H_TILE == 0 else H
    grid = (N, H // th)
    return pl.pallas_call(
        functools.partial(_upsample_ordinal_kernel, ord_num=ord_num),
        out_shape=(jax.ShapeDtypeStruct((N, ord_num, H, W), jnp.float32),
                   jax.ShapeDtypeStruct((N, 1, H, W), jnp.int32)),
        grid=grid,
        in_specs=[
            pl.BlockSpec((th, Hf), lambda n, hb: (hb, 0)),
            pl.BlockSpec((Wf, W), lambda n, hb: (0, 0)),
            pl.BlockSpec((1, K2, Hf, Wf), lambda n, hb: (n, 0, 0, 0)),
        ],
        out_specs=(
            pl.BlockSpec((1, ord_num, th, W), lambda n, hb: (n, 0, hb, 0)),
            pl.BlockSpec((1, 1, th, W), lambda n, hb: (n, 0, hb, 0)),
        ),
        compiler_params=pltpu.CompilerParams(
            dimension_semantics=("parallel", "parallel")),
    )(wy.astype(jnp.float32), wxt.astype(jnp.float32),
      f_cm.astype(jnp.float32))


# ----------------------------------------------------------------------------
# plain-JAX glue
# ----------------------------------------------------------------------------
def _bilinear_weights(out_size, in_size):
    """Interpolation matrix (out, in) for bilinear, align_corners=True."""
    if in_size == 1:
        return jnp.ones((out_size, 1), jnp.float32)
    pos = jnp.arange(out_size, dtype=jnp.float32) * (in_size - 1) / (out_size - 1)
    lo = jnp.floor(pos).astype(jnp.int32)
    hi = jnp.minimum(lo + 1, in_size - 1)
    frac = pos - lo.astype(jnp.float32)
    w = jnp.zeros((out_size, in_size), jnp.float32)
    w = w.at[jnp.arange(out_size), lo].add(1.0 - frac)
    w = w.at[jnp.arange(out_size), hi].add(frac)
    return w


# ----------------------------------------------------------------------------
# DORN forward
# ----------------------------------------------------------------------------
def dorn_forward(image, params, *, ord_num):
    """image (N,3,H,W) f32 -> (prob (N,K,H,W) f32, label (N,1,H,W) i32)."""
    N, C, H, W = image.shape
    Hf, Wf = H // PATCH, W // PATCH
    M = N * Hf * Wf
    K2 = 2 * ord_num

    # --- backbone stub: patchify + Pallas matmul (row tiled, bf16 MXU) ---
    x = jnp.transpose(image, (0, 2, 3, 1))                               # NHWC
    x = x.reshape(N, Hf, PATCH, Wf, PATCH, C).transpose(0, 1, 3, 2, 4, 5)
    patches = x.reshape(M, PATCH * PATCH * C)
    feat = backbone_stub(patches, params["backbone_w"], params["backbone_b"])

    # --- full-image encoder: (N,F)x(F,E) is a few hundred FLOPs -> plain JAX,
    #     folded through the concat projection as a per-image additive bias ---
    pooled = jnp.mean(feat.astype(jnp.float32).reshape(N, Hf * Wf, FEAT_CH),
                      axis=1)                                            # (N,F)
    enc = jax.nn.relu(pooled @ params["fie_w"] + params["fie_b"])        # (N,E)
    enc_bias = enc @ params["concat_w_enc"] + params["concat_b"]         # (N,2K)
    row_bias = jnp.broadcast_to(enc_bias[:, None, :],
                                (N, Hf * Wf, K2)).reshape(M, K2)

    # --- fused ASPP(4) + concat projection (single Pallas call) ---
    ord_feat = scene_module(feat, params["aspp_w"], params["aspp_b"],
                            params["concat_w_aspp"], row_bias)           # (M,2K)

    # --- fused bilinear upsample + OrdinalRegressionLayer + label ---
    # channel-major per image so the pair split is along the major axis and
    # prob/label are written lane-dense in NCHW layout (low-res transpose only)
    f_cm = jnp.transpose(ord_feat.reshape(N, Hf, Wf, K2), (0, 3, 1, 2))  # (N,2K,Hf,Wf)
    wy = _bilinear_weights(H, Hf)            # (H, Hf)
    wxt = _bilinear_weights(W, Wf).T         # (Wf, W)
    prob, label = upsample_ordinal(wy, wxt, f_cm, ord_num=ord_num)
    return prob, label


# ----------------------------------------------------------------------------
# deterministic parameter init
# ----------------------------------------------------------------------------
def init_params(key, *, in_ch, ord_num):
    ks = jax.random.split(key, 5)

    def lin(k, cin, cout, scale=0.05):
        kw, kb = jax.random.split(k)
        return (jax.random.normal(kw, (cin, cout), jnp.float32) * scale,
                jax.random.normal(kb, (cout,), jnp.float32) * scale)

    p = {}
    p["backbone_w"], p["backbone_b"] = lin(ks[0], PATCH * PATCH * in_ch, FEAT_CH)
    p["fie_w"], p["fie_b"] = lin(ks[1], FEAT_CH, ENC_CH)
    # 4 ASPP branch weights pre-fused into one (F, 4E) matrix
    p["aspp_w"], p["aspp_b"] = lin(ks[2], FEAT_CH, 4 * ENC_CH)
    # concat projection split into its enc-rows and aspp-rows (cat = [enc, b1..b4])
    p["concat_w_enc"], p["concat_b"] = lin(ks[3], ENC_CH, 2 * ord_num)
    p["concat_w_aspp"], _ = lin(ks[4], 4 * ENC_CH, 2 * ord_num)
    return p


# ----------------------------------------------------------------------------
if __name__ == "__main__":
    N, C, H, W = 2, 3, 16, 16
    ORD_NUM = 8

    image = jax.random.normal(jax.random.PRNGKey(0), (N, C, H, W), jnp.float32)
    params = init_params(jax.random.PRNGKey(1), in_ch=C, ord_num=ORD_NUM)

    fwd = jax.jit(functools.partial(dorn_forward, ord_num=ORD_NUM))
    prob, label = fwd(image, params)
    jax.block_until_ready((prob, label))

    assert prob.shape == (N, ORD_NUM, H, W), prob.shape
    assert label.shape == (N, 1, H, W), label.shape
    assert prob.dtype == jnp.float32
    assert label.dtype == jnp.int32
    # sanity: prob is a valid probability; label = count of channels >= 0.5
    assert bool(jnp.all(jnp.isfinite(prob)))
    assert bool(jnp.all((prob >= 0.0) & (prob <= 1.0)))
    ref_label = jnp.sum((prob >= 0.5).astype(jnp.int32), axis=1, keepdims=True)
    assert bool(jnp.all(ref_label == label))

    print("KERNEL_OK")
</pallas_src>

<mosaic_0001>
module attributes {stable_mosaic.version = 11 : i64} {
  func.func private @main(%arg0: i32) attributes {dimension_semantics = [#tpu.dimension_semantics<core_parallel>], iteration_bounds = array<i64: 2>, tpu.core_type = #tpu.core_type<sc_scalar_subcore>, window_params = []} {
    return
  }
}

module attributes {stable_mosaic.version = 11 : i64} {
  func.func private @main(%arg0: i32) attributes {dimension_semantics = [#tpu.dimension_semantics<core_parallel>], iteration_bounds = array<i64: 2>, tpu.core_type = #tpu.core_type<sc_scalar_subcore>, window_params = []} {
    return
  }
}

module attributes {stable_mosaic.version = 11 : i64} {
  func.func @_backbone_kernel(%arg0: i32, %arg1: memref<8x192xbf16, #tpu.memory_space<vmem>>, %arg2: memref<192x128xbf16, #tpu.memory_space<vmem>>, %arg3: memref<1x128xf32, #tpu.memory_space<vmem>>, %arg4: memref<8x128xbf16, #tpu.memory_space<vmem>>) attributes {dimension_semantics = [#tpu.dimension_semantics<parallel>], iteration_bounds = array<i64: 1>, scalar_prefetch = 0 : i64, scratch_operands = 0 : i64, tpu.core_type = #tpu.core_type<tc>, window_params = [{transform_indices = @transform_0, window_bounds = array<i64: 8, 192>}, {pipeline_mode = #tpu.pipeline_mode<synchronous>, transform_indices = @transform_1, window_bounds = array<i64: 192, 128>}, {pipeline_mode = #tpu.pipeline_mode<synchronous>, transform_indices = @transform_2, window_bounds = array<i64: 1, 128>}, {transform_indices = @transform_3, window_bounds = array<i64: 8, 128>}]} {
    %c0 = arith.constant 0 : index
    %c0_0 = arith.constant 0 : index
    %0 = vector.load %arg1[%c0, %c0_0] : memref<8x192xbf16, #tpu.memory_space<vmem>>, vector<8x192xbf16>
    %c0_1 = arith.constant 0 : index
    %c0_2 = arith.constant 0 : index
    %1 = vector.load %arg2[%c0_1, %c0_2] : memref<192x128xbf16, #tpu.memory_space<vmem>>, vector<192x128xbf16>
    %cst = arith.constant dense<0.000000e+00> : vector<8x128xf32>
    %2 = tpu.matmul %0, %1, %cst {dimension_numbers = #tpu.dot_dimension_numbers<[1], [0], [0], [1], [0, 0, 1, 1], [], []>} : vector<8x192xbf16>, vector<192x128xbf16>, vector<8x128xf32> -> vector<8x128xf32>
    %c0_3 = arith.constant 0 : index
    %c0_4 = arith.constant 0 : index
    %3 = vector.load %arg3[%c0_3, %c0_4] : memref<1x128xf32, #tpu.memory_space<vmem>>, vector<1x128xf32>
    %4 = vector.broadcast %3 : vector<1x128xf32> to vector<8x128xf32>
    %5 = arith.addf %2, %4 : vector<8x128xf32>
    %cst_5 = arith.constant 0.000000e+00 : f32
    %6 = vector.broadcast %cst_5 : f32 to vector<8x128xf32>
    %7 = arith.maximumf %5, %6 : vector<8x128xf32>
    %8 = arith.truncf %7 : vector<8x128xf32> to vector<8x128xbf16>
    %c0_6 = arith.constant 0 : index
    %c0_7 = arith.constant 0 : index
    %9 = vector.load %arg4[%c0_6, %c0_7] : memref<8x128xbf16, #tpu.memory_space<vmem>>, vector<8x128xbf16>
    tpu.vector_store %arg4[%c0_6, %c0_7], %8 {strides = array<i32>} : memref<8x128xbf16, #tpu.memory_space<vmem>>, vector<8x128xbf16>,
    return
  }
  func.func @transform_0(%arg0: i32) -> (i32, i32) {
    %c0_i32 = arith.constant 0 : i32
    %c0_i32_0 = arith.constant 0 : i32
    return %arg0, %c0_i32 : i32, i32
  }
  func.func @transform_1(%arg0: i32) -> (i32, i32) {
    %c0_i32 = arith.constant 0 : i32
    %c0_i32_0 = arith.constant 0 : i32
    %c0_i32_1 = arith.constant 0 : i32
    return %c0_i32, %c0_i32_0 : i32, i32
  }
  func.func @transform_2(%arg0: i32) -> (i32, i32) {
    %c0_i32 = arith.constant 0 : i32
    %c0_i32_0 = arith.constant 0 : i32
    %c0_i32_1 = arith.constant 0 : i32
    return %c0_i32, %c0_i32_0 : i32, i32
  }
  func.func @transform_3(%arg0: i32) -> (i32, i32) {
    %c0_i32 = arith.constant 0 : i32
    %c0_i32_0 = arith.constant 0 : i32
    return %arg0, %c0_i32 : i32, i32
  }
}

module attributes {stable_mosaic.version = 11 : i64} {
  func.func @_scene_kernel(%arg0: i32, %arg1: memref<8x128xbf16, #tpu.memory_space<vmem>>, %arg2: memref<128x128xbf16, #tpu.memory_space<vmem>>, %arg3: memref<1x128xf32, #tpu.memory_space<vmem>>, %arg4: memref<128x16xbf16, #tpu.memory_space<vmem>>, %arg5: memref<8x16xf32, #tpu.memory_space<vmem>>, %arg6: memref<8x16xf32, #tpu.memory_space<vmem>>) attributes {dimension_semantics = [#tpu.dimension_semantics<parallel>], iteration_bounds = array<i64: 1>, scalar_prefetch = 0 : i64, scratch_operands = 0 : i64, tpu.core_type = #tpu.core_type<tc>, window_params = [{transform_indices = @transform_0, window_bounds = array<i64: 8, 128>}, {pipeline_mode = #tpu.pipeline_mode<synchronous>, transform_indices = @transform_1, window_bounds = array<i64: 128, 128>}, {pipeline_mode = #tpu.pipeline_mode<synchronous>, transform_indices = @transform_2, window_bounds = array<i64: 1, 128>}, {pipeline_mode = #tpu.pipeline_mode<synchronous>, transform_indices = @transform_3, window_bounds = array<i64: 128, 16>}, {transform_indices = @transform_4, window_bounds = array<i64: 8, 16>}, {transform_indices = @transform_5, window_bounds = array<i64: 8, 16>}]} {
    %c0 = arith.constant 0 : index
    %c0_0 = arith.constant 0 : index
    %0 = vector.load %arg1[%c0, %c0_0] : memref<8x128xbf16, #tpu.memory_space<vmem>>, vector<8x128xbf16>
    %c0_1 = arith.constant 0 : index
    %c0_2 = arith.constant 0 : index
    %1 = vector.load %arg2[%c0_1, %c0_2] : memref<128x128xbf16, #tpu.memory_space<vmem>>, vector<128x128xbf16>
    %cst = arith.constant dense<0.000000e+00> : vector<8x128xf32>
    %2 = tpu.matmul %0, %1, %cst {dimension_numbers = #tpu.dot_dimension_numbers<[1], [0], [0], [1], [0, 0, 1, 1], [], []>} : vector<8x128xbf16>, vector<128x128xbf16>, vector<8x128xf32> -> vector<8x128xf32>
    %c0_3 = arith.constant 0 : index
    %c0_4 = arith.constant 0 : index
    %3 = vector.load %arg3[%c0_3, %c0_4] : memref<1x128xf32, #tpu.memory_space<vmem>>, vector<1x128xf32>
    %4 = vector.broadcast %3 : vector<1x128xf32> to vector<8x128xf32>
    %5 = arith.addf %2, %4 : vector<8x128xf32>
    %cst_5 = arith.constant 0.000000e+00 : f32
    %6 = vector.broadcast %cst_5 : f32 to vector<8x128xf32>
    %7 = arith.maximumf %5, %6 : vector<8x128xf32>
    %8 = arith.truncf %7 : vector<8x128xf32> to vector<8x128xbf16>
    %c0_6 = arith.constant 0 : index
    %c0_7 = arith.constant 0 : index
    %9 = vector.load %arg4[%c0_6, %c0_7] : memref<128x16xbf16, #tpu.memory_space<vmem>>, vector<128x16xbf16>
    %cst_8 = arith.constant dense<0.000000e+00> : vector<8x16xf32>
    %10 = tpu.matmul %8, %9, %cst_8 {dimension_numbers = #tpu.dot_dimension_numbers<[1], [0], [0], [1], [0, 0, 1, 1], [], []>} : vector<8x128xbf16>, vector<128x16xbf16>, vector<8x16xf32> -> vector<8x16xf32>
    %c0_9 = arith.constant 0 : index
    %c0_10 = arith.constant 0 : index
    %11 = vector.load %arg5[%c0_9, %c0_10] : memref<8x16xf32, #tpu.memory_space<vmem>>, vector<8x16xf32>
    %12 = arith.addf %10, %11 : vector<8x16xf32>
    %c0_11 = arith.constant 0 : index
    %c0_12 = arith.constant 0 : index
    %13 = vector.load %arg6[%c0_11, %c0_12] : memref<8x16xf32, #tpu.memory_space<vmem>>, vector<8x16xf32>
    tpu.vector_store %arg6[%c0_11, %c0_12], %12 {strides = array<i32>} : memref<8x16xf32, #tpu.memory_space<vmem>>, vector<8x16xf32>,
    return
  }
  func.func @transform_0(%arg0: i32) -> (i32, i32) {
    %c0_i32 = arith.constant 0 : i32
    %c0_i32_0 = arith.constant 0 : i32
    return %arg0, %c0_i32 : i32, i32
  }
  func.func @transform_1(%arg0: i32) -> (i32, i32) {
    %c0_i32 = arith.constant 0 : i32
    %c0_i32_0 = arith.constant 0 : i32
    %c0_i32_1 = arith.constant 0 : i32
    return %c0_i32, %c0_i32_0 : i32, i32
  }
  func.func @transform_2(%arg0: i32) -> (i32, i32) {
    %c0_i32 = arith.constant 0 : i32
    %c0_i32_0 = arith.constant 0 : i32
    %c0_i32_1 = arith.constant 0 : i32
    return %c0_i32, %c0_i32_0 : i32, i32
  }
  func.func @transform_3(%arg0: i32) -> (i32, i32) {
    %c0_i32 = arith.constant 0 : i32
    %c0_i32_0 = arith.constant 0 : i32
    %c0_i32_1 = arith.constant 0 : i32
    return %c0_i32, %c0_i32_0 : i32, i32
  }
  func.func @transform_4(%arg0: i32) -> (i32, i32) {
    %c0_i32 = arith.constant 0 : i32
    %c0_i32_0 = arith.constant 0 : i32
    return %arg0, %c0_i32 : i32, i32
  }
  func.func @transform_5(%arg0: i32) -> (i32, i32) {
    %c0_i32 = arith.constant 0 : i32
    %c0_i32_0 = arith.constant 0 : i32
    return %arg0, %c0_i32 : i32, i32
  }
}

module attributes {stable_mosaic.version = 11 : i64} {
  func.func @_upsample_ordinal_kernel(%arg0: i32, %arg1: i32, %arg2: memref<8x2xf32, #tpu.memory_space<vmem>>, %arg3: memref<2x16xf32, #tpu.memory_space<vmem>>, %arg4: memref<1x16x2x2xf32, #tpu.memory_space<vmem>>, %arg5: memref<1x8x8x16xf32, #tpu.memory_space<vmem>>, %arg6: memref<1x1x8x16xi32, #tpu.memory_space<vmem>>) attributes {dimension_semantics = [#tpu.dimension_semantics<parallel>, #tpu.dimension_semantics<parallel>], iteration_bounds = array<i64: 2, 2>, scalar_prefetch = 0 : i64, scratch_operands = 0 : i64, tpu.core_type = #tpu.core_type<tc>, window_params = [{transform_indices = @transform_0, window_bounds = array<i64: 8, 2>}, {pipeline_mode = #tpu.pipeline_mode<synchronous>, transform_indices = @transform_1, window_bounds = array<i64: 2, 16>}, {transform_indices = @transform_2, window_bounds = array<i64: 1, 16, 2, 2>}, {transform_indices = @transform_3, window_bounds = array<i64: 1, 8, 8, 16>}, {transform_indices = @transform_4, window_bounds = array<i64: 1, 1, 8, 16>}]} {
    %c0 = arith.constant 0 : index
    %c0_0 = arith.constant 0 : index
    %c0_1 = arith.constant 0 : index
    %c0_2 = arith.constant 0 : index
    %0 = vector.load %arg4[%c0, %c0_0, %c0_1, %c0_2] : memref<1x16x2x2xf32, #tpu.memory_space<vmem>>, vector<1x16x2x2xf32>
    %1 = vector.shape_cast %0 : vector<1x16x2x2xf32> to vector<16x2x2xf32>
    %c0_3 = arith.constant 0 : index
    %c0_4 = arith.constant 0 : index
    %2 = vector.load %arg2[%c0_3, %c0_4] : memref<8x2xf32, #tpu.memory_space<vmem>>, vector<8x2xf32>
    %c0_5 = arith.constant 0 : index
    %c0_6 = arith.constant 0 : index
    %3 = vector.load %arg3[%c0_5, %c0_6] : memref<2x16xf32, #tpu.memory_space<vmem>>, vector<2x16xf32>
    %4 = vector.shape_cast %2 : vector<8x2xf32> to vector<1x8x2xf32>
    %5 = vector.shape_cast %4 : vector<1x8x2xf32> to vector<1x8x2xf32>
    %6 = vector.broadcast %5 : vector<1x8x2xf32> to vector<16x8x2xf32>
    %cst = arith.constant dense<0.000000e+00> : vector<16x8x2xf32>
    %7 = tpu.matmul %6, %1, %cst {dimension_numbers = #tpu.dot_dimension_numbers<[2], [1], [1], [2], [0, 0, 0, 1, 1, 2], [0], [0]>} : vector<16x8x2xf32>, vector<16x2x2xf32>, vector<16x8x2xf32> -> vector<16x8x2xf32>
    %8 = vector.shape_cast %3 : vector<2x16xf32> to vector<1x2x16xf32>
    %9 = vector.shape_cast %8 : vector<1x2x16xf32> to vector<1x2x16xf32>
    %10 = vector.broadcast %9 : vector<1x2x16xf32> to vector<16x2x16xf32>
    %cst_7 = arith.constant dense<0.000000e+00> : vector<16x8x16xf32>
    %11 = tpu.matmul %7, %10, %cst_7 {dimension_numbers = #tpu.dot_dimension_numbers<[2], [1], [1], [2], [0, 0, 0, 1, 1, 2], [0], [0]>} : vector<16x8x2xf32>, vector<16x2x16xf32>, vector<16x8x16xf32> -> vector<16x8x16xf32>
    %12 = vector.extract_strided_slice %11 {offsets = [0, 0, 0], sizes = [8, 8, 16], strides = [1, 1, 1]} : vector<16x8x16xf32> to vector<8x8x16xf32>
    %13 = vector.extract_strided_slice %11 {offsets = [8, 0, 0], sizes = [8, 8, 16], strides = [1, 1, 1]} : vector<16x8x16xf32> to vector<8x8x16xf32>
    %14 = arith.subf %12, %13 : vector<8x8x16xf32>
    %15 = arith.negf %14 : vector<8x8x16xf32>
    %16 = math.exp %15 : vector<8x8x16xf32>
    %cst_8 = arith.constant 1.000000e+00 : f32
    %17 = vector.broadcast %cst_8 : f32 to vector<8x8x16xf32>
    %18 = arith.addf %17, %16 : vector<8x8x16xf32>
    %19 = arith.divf %17, %18 : vector<8x8x16xf32>
    %20 = vector.shape_cast %19 : vector<8x8x16xf32> to vector<1x8x8x16xf32>
    %c0_9 = arith.constant 0 : index
    %c0_10 = arith.constant 0 : index
    %c0_11 = arith.constant 0 : index
    %c0_12 = arith.constant 0 : index
    %21 = vector.load %arg5[%c0_9, %c0_10, %c0_11, %c0_12] : memref<1x8x8x16xf32, #tpu.memory_space<vmem>>, vector<1x8x8x16xf32>
    tpu.vector_store %arg5[%c0_9, %c0_10, %c0_11, %c0_12], %20 {strides = array<i32>} : memref<1x8x8x16xf32, #tpu.memory_space<vmem>>, vector<1x8x8x16xf32>,
    %cst_13 = arith.constant 5.000000e-01 : f32
    %22 = vector.broadcast %cst_13 : f32 to vector<8x8x16xf32>
    %23 = arith.cmpf oge, %19, %22 : vector<8x8x16xf32>
    %24 = arith.extui %23 : vector<8x8x16xi1> to vector<8x8x16xi32>
    %cst_14 = arith.constant dense<0> : vector<8x16xi32>
    %25 = vector.multi_reduction <add>, %24, %cst_14 [0] : vector<8x8x16xi32> to vector<8x16xi32>
    %26 = vector.shape_cast %25 : vector<8x16xi32> to vector<1x1x8x16xi32>
    %c0_15 = arith.constant 0 : index
    %c0_16 = arith.constant 0 : index
    %c0_17 = arith.constant 0 : index
    %c0_18 = arith.constant 0 : index
    %27 = vector.load %arg6[%c0_15, %c0_16, %c0_17, %c0_18] : memref<1x1x8x16xi32, #tpu.memory_space<vmem>>, vector<1x1x8x16xi32>
    tpu.vector_store %arg6[%c0_15, %c0_16, %c0_17, %c0_18], %26 {strides = array<i32>} : memref<1x1x8x16xi32, #tpu.memory_space<vmem>>, vector<1x1x8x16xi32>,
    return
  }
  func.func @transform_0(%arg0: i32, %arg1: i32) -> (i32, i32) {
    %c0_i32 = arith.constant 0 : i32
    %c0_i32_0 = arith.constant 0 : i32
    return %arg1, %c0_i32 : i32, i32
  }
  func.func @transform_1(%arg0: i32, %arg1: i32) -> (i32, i32) {
    %c0_i32 = arith.constant 0 : i32
    %c0_i32_0 = arith.constant 0 : i32
    %c0_i32_1 = arith.constant 0 : i32
    return %c0_i32, %c0_i32_0 : i32, i32
  }
  func.func @transform_2(%arg0: i32, %arg1: i32) -> (i32, i32, i32, i32) {
    %c0_i32 = arith.constant 0 : i32
    %c0_i32_0 = arith.constant 0 : i32
    %c0_i32_1 = arith.constant 0 : i32
    %c0_i32_2 = arith.constant 0 : i32
    return %arg0, %c0_i32, %c0_i32_0, %c0_i32_1 : i32, i32, i32, i32
  }
  func.func @transform_3(%arg0: i32, %arg1: i32) -> (i32, i32, i32, i32) {
    %c0_i32 = arith.constant 0 : i32
    %c0_i32_0 = arith.constant 0 : i32
    %c0_i32_1 = arith.constant 0 : i32
    return %arg0, %c0_i32, %arg1, %c0_i32_0 : i32, i32, i32, i32
  }
  func.func @transform_4(%arg0: i32, %arg1: i32) -> (i32, i32, i32, i32) {
    %c0_i32 = arith.constant 0 : i32
    %c0_i32_0 = arith.constant 0 : i32
    %c0_i32_1 = arith.constant 0 : i32
    return %arg0, %c0_i32, %arg1, %c0_i32_0 : i32, i32, i32, i32
  }
}

</mosaic_0001>

<llo_original>
// kernel: dorn_forward.3
$region0: #{dorn_forward.3}
  #allocation0 [shape = 'u32[]', space=smem, size = 0x4, offset = 0x4, fixed_abs, tag = 'smem constant byte address 0x4 - core index']
  #allocation1 [shape = 'u32[144,128]{1,0:T(1,128)}', space=vmem, size = 0x12000, scoped, tag = 'internal scratch']
  %s0 = inlined_call_operand.vmem [shape: bf16[8,192], index: 0, kind: input, shape index: {}]
  %s1 = inlined_call_operand.vmem [shape: bf16[192,128], index: 1, kind: input, shape index: {}]
  %s2 = inlined_call_operand.vmem [shape: f32[1,128], index: 2, kind: input, shape index: {}]
  %s3 = inlined_call_operand.vmem [shape: bf16[8,128], index: 3, kind: output, shape index: {}]
  %s4 = sld [smem:[#allocation0]]
  $region22: #{dorn_forward.3} parent=0
    _
  %s6 = ssub.s32 1, %s4
  %s7 = scalar_select 0, %s6, %s4
  // Predicated region
  $region2: #{dorn_forward.3} parent=0 // pred_check
    _
  $region3: #{dorn_forward.3} parent=0 // pred_check_branch
    %9 = sbr.rel (0) target = $region5
  $region4: #{dorn_forward.3} parent=0 // pred_region
    _
  $region5: #{dorn_forward.3} parent=0 // pred_fallthru
    _
  // Predicated region
  $region6: #{dorn_forward.3} parent=0 // pred_check
    _
  $region7: #{dorn_forward.3} parent=0 // pred_check_branch
    %11 = sbr.rel (0) target = $region9
  $region8: #{dorn_forward.3} parent=0 // pred_region
    _
  $region9: #{dorn_forward.3} parent=0 // pred_fallthru
    _
  // Predicated region
  $region10: #{dorn_forward.3} parent=0 // pred_check
    _
  $region11: #{dorn_forward.3} parent=0 // pred_check_branch
    %13 = sbr.rel (0) target = $region13
  $region12: #{dorn_forward.3} parent=0 // pred_region
    _
  $region13: #{dorn_forward.3} parent=0 // pred_fallthru
    _
  %v15 = vld [vmem:[%s0] sm:$0xff]
  %v16 = vld [vmem:[%s1] sm:$0xf]
  %v17 = vld [vmem:[%s1 + $0x4] sm:$0xf]
  %v18 = vld [vmem:[%s1 + $0x8] sm:$0xf]
  %v19 = vld [vmem:[%s1 + $0xc] sm:$0xf]
  %v20 = vld [vmem:[%s1 + $0x10] sm:$0xf]
  %v21 = vld [vmem:[%s1 + $0x14] sm:$0xf]
  %v22 = vld [vmem:[%s1 + $0x18] sm:$0xf]
  %v23 = vld [vmem:[%s1 + $0x1c] sm:$0xf]
  %v24 = vld [vmem:[%s1 + $0x20] sm:$0xf]
  %v25 = vld [vmem:[%s1 + $0x24] sm:$0xf]
  %v26 = vld [vmem:[%s1 + $0x28] sm:$0xf]
  %v27 = vld [vmem:[%s1 + $0x2c] sm:$0xf]
  %v28 = vld [vmem:[%s1 + $0x30] sm:$0xf]
  %v29 = vld [vmem:[%s1 + $0x34] sm:$0xf]
  %v30 = vld [vmem:[%s1 + $0x38] sm:$0xf]
  %v31 = vld [vmem:[%s1 + $0x3c] sm:$0xf]
  %v32 = vld [vmem:[%s1 + $0x40] sm:$0xf]
  %v33 = vld [vmem:[%s1 + $0x44] sm:$0xf]
  %v34 = vld [vmem:[%s1 + $0x48] sm:$0xf]
  %v35 = vld [vmem:[%s1 + $0x4c] sm:$0xf]
  %v36 = vld [vmem:[%s1 + $0x50] sm:$0xf]
  %v37 = vld [vmem:[%s1 + $0x54] sm:$0xf]
  %v38 = vld [vmem:[%s1 + $0x58] sm:$0xf]
  %v39 = vld [vmem:[%s1 + $0x5c] sm:$0xf]
  %v40 = vld [vmem:[%s2] sm:$0x1]
  %v42 = vlaneseq
  %v43 = vshrl.u32 %v42, 7
  %v44 = vsub.s32 0, %v43
  %v45 = vrot.slane %v40, %v44
  %v48 = vunpack.c.l.b16 %v15
  %v49 = vunpack.c.h.b16 %v15
  %v50 = vpack.c.b16 %v48, %v48
  %v51 = vpack.c.b16 %v49, %v49
  %v77 = vunpack.c.l.b16 %v16
  %v78 = vunpack.c.l.b16 %v17
  %v79 = vunpack.c.l.b16 %v18
  %v80 = vunpack.c.l.b16 %v19
  %v81 = vunpack.c.l.b16 %v20
  %v82 = vunpack.c.l.b16 %v21
  %v83 = vunpack.c.l.b16 %v22
  %v84 = vunpack.c.l.b16 %v23
  %v85 = vunpack.c.l.b16 %v24
  %v86 = vunpack.c.l.b16 %v25
  %v87 = vunpack.c.l.b16 %v26
  %v88 = vunpack.c.l.b16 %v27
  %v89 = vunpack.c.l.b16 %v28
  %v90 = vunpack.c.l.b16 %v29
  %v91 = vunpack.c.l.b16 %v30
  %v92 = vunpack.c.l.b16 %v31
  %v93 = vunpack.c.l.b16 %v32
  %v94 = vunpack.c.l.b16 %v33
  %v95 = vunpack.c.l.b16 %v34
  %v96 = vunpack.c.l.b16 %v35
  %v97 = vunpack.c.l.b16 %v36
  %v98 = vunpack.c.l.b16 %v37
  %v99 = vunpack.c.l.b16 %v38
  %v100 = vunpack.c.l.b16 %v39
  %v101 = vpack.c.b16 %v78, %v77
  %v102 = vpack.c.b16 %v80, %v79
  %v103 = vpack.c.b16 %v82, %v81
  %v104 = vpack.c.b16 %v84, %v83
  %v105 = vpack.c.b16 %v86, %v85
  %v106 = vpack.c.b16 %v88, %v87
  %v107 = vpack.c.b16 %v90, %v89
  %v108 = vpack.c.b16 %v92, %v91
  %v109 = vpack.c.b16 %v94, %v93
  %v110 = vpack.c.b16 %v96, %v95
  %v111 = vpack.c.b16 %v98, %v97
  %v112 = vpack.c.b16 %v100, %v99
  %vm125 = vcmask 523264
  %v127 = vsel %vm125, %v51, 0
  %129 = vmatprep.subr.bf16.mxu0 0
  %130 = vmatpush1.bf16.msra.mxu0 %v101
  %131 = vmatprep.subr.bf16.mxu0 0
  %132 = vmatpush1.bf16.msra.mxu0 %v102
  %133 = vmatprep.subr.bf16.mxu0 0
  %134 = vmatpush1.bf16.msra.mxu0 %v103
  %135 = vmatprep.subr.bf16.mxu0 0
  %136 = vmatpush1.bf16.msra.mxu0 %v104
  %137 = vmatprep.subr.bf16.mxu0 0
  %138 = vmatpush1.bf16.msra.mxu0 %v105
  %139 = vmatprep.subr.bf16.mxu0 0
  %140 = vmatpush1.bf16.msra.mxu0 %v106
  %141 = vmatprep.subr.bf16.mxu0 0
  %142 = vmatpush1.bf16.msra.mxu0 %v107
  %143 = vmatprep.subr.bf16.mxu0 0
  %144 = vmatpush1.bf16.msra.mxu0 %v108
  %145 = vmatprep.subr.bf16.mxu0 0
  %146 = vmatpush1.bf16.msra.mxu0 %v109
  %147 = vmatprep.subr.bf16.mxu0 0
  %148 = vmatpush1.bf16.msra.mxu0 %v110
  %149 = vmatprep.subr.bf16.mxu0 0
  %150 = vmatpush1.bf16.msra.mxu0 %v111
  %151 = vmatprep.subr.bf16.mxu0 0
  %152 = vmatpush1.bf16.msra.mxu0 %v112
  %153 = vmatprep.subr.bf16.mxu0 0
  %154 = vmatpush1.bf16.msra.mxu0 0
  %155 = vmatprep.subr.bf16.mxu0 0
  %156 = vmatpush1.bf16.msra.mxu0 0
  %157 = vmatprep.subr.bf16.mxu0 0
  %158 = vmatpush1.bf16.msra.mxu0 0
  %159 = vmatprep.subr.bf16.mxu0 0
  %160 = vmatpush1.bf16.msra.mxu0 0
  %161 = vmatprep.mubr.bf16.mxu0 %v127
  %162 = vmatmul.mubr.bf16.gmra.mrb[0].mxu0 %v50
  %v163 = vpop.f32.mrb[0].mxu0
  %v164 = vadd.f32 %v45, %v163
  %v165 = vpop.f32.mrb[0].mxu0
  %v166 = vpop.f32.mrb[0].mxu0
  %v167 = vpop.f32.mrb[0].mxu0
  %168 = vdwg.mxu0
  %v169 = vmax.f32 %v164, 0.0
  %v170 = vpack.c.bf16 %v169, %v169
  %171 = vst [vmem:[%s3] sm:$0xf] %v170
  // Predicated region
  $region14: #{dorn_forward.3} parent=0 // pred_check
    _
  $region15: #{dorn_forward.3} parent=0 // pred_check_branch
    %173 = sbr.rel (0) target = $region17
  $region16: #{dorn_forward.3} parent=0 // pred_region
    _
  $region17: #{dorn_forward.3} parent=0 // pred_fallthru
    _
  // Predicated region
  $region18: #{dorn_forward.3} parent=0 // pred_check
    _
  $region19: #{dorn_forward.3} parent=0 // pred_check_branch
    %175 = sbr.rel (0) target = $region21
  $region20: #{dorn_forward.3} parent=0 // pred_region
    _
  $region21: #{dorn_forward.3} parent=0 // pred_fallthru
    _

// kernel: dorn_forward.4
$region0: #{dorn_forward.4}
  #allocation0 [shape = 'u32[]', space=smem, size = 0x4, offset = 0x4, fixed_abs, tag = 'smem constant byte address 0x4 - core index']
  #allocation1 [shape = 'u32[144,128]{1,0:T(1,128)}', space=vmem, size = 0x12000, scoped, tag = 'internal scratch']
  %s0 = inlined_call_operand.vmem [shape: bf16[8,128], index: 0, kind: input, shape index: {}]
  %s1 = inlined_call_operand.vmem [shape: bf16[128,128], index: 1, kind: input, shape index: {}]
  %s2 = inlined_call_operand.vmem [shape: f32[1,128], index: 2, kind: input, shape index: {}]
  %s3 = inlined_call_operand.vmem [shape: bf16[128,16], index: 3, kind: input, shape index: {}]
  %s4 = inlined_call_operand.vmem [shape: f32[8,16], index: 4, kind: input, shape index: {}]
  %s5 = inlined_call_operand.vmem [shape: f32[8,16], index: 5, kind: output, shape index: {}]
  %s6 = sld [smem:[#allocation0]]
  $region30: #{dorn_forward.4} parent=0
    _
  %s8 = ssub.s32 1, %s6
  %s9 = scalar_select 0, %s8, %s6
  // Predicated region
  $region2: #{dorn_forward.4} parent=0 // pred_check
    _
  $region3: #{dorn_forward.4} parent=0 // pred_check_branch
    %11 = sbr.rel (0) target = $region5
  $region4: #{dorn_forward.4} parent=0 // pred_region
    _
  $region5: #{dorn_forward.4} parent=0 // pred_fallthru
    _
  // Predicated region
  $region6: #{dorn_forward.4} parent=0 // pred_check
    _
  $region7: #{dorn_forward.4} parent=0 // pred_check_branch
    %13 = sbr.rel (0) target = $region9
  $region8: #{dorn_forward.4} parent=0 // pred_region
    _
  $region9: #{dorn_forward.4} parent=0 // pred_fallthru
    _
  // Predicated region
  $region10: #{dorn_forward.4} parent=0 // pred_check
    _
  $region11: #{dorn_forward.4} parent=0 // pred_check_branch
    %15 = sbr.rel (0) target = $region13
  $region12: #{dorn_forward.4} parent=0 // pred_region
    _
  $region13: #{dorn_forward.4} parent=0 // pred_fallthru
    _
  // Predicated region
  $region14: #{dorn_forward.4} parent=0 // pred_check
    _
  $region15: #{dorn_forward.4} parent=0 // pred_check_branch
    %17 = sbr.rel (0) target = $region17
  $region16: #{dorn_forward.4} parent=0 // pred_region
    _
  $region17: #{dorn_forward.4} parent=0 // pred_fallthru
    _
  // Predicated region
  $region18: #{dorn_forward.4} parent=0 // pred_check
    _
  $region19: #{dorn_forward.4} parent=0 // pred_check_branch
    %19 = sbr.rel (0) target = $region21
  $region20: #{dorn_forward.4} parent=0 // pred_region
    _
  $region21: #{dorn_forward.4} parent=0 // pred_fallthru
    _
  %v21 = vld [vmem:[%s0] sm:$0xf]
  %v22 = vld [vmem:[%s1] sm:$0xf]
  %v23 = vld [vmem:[%s1 + $0x4] sm:$0xf]
  %v24 = vld [vmem:[%s1 + $0x8] sm:$0xf]
  %v25 = vld [vmem:[%s1 + $0xc] sm:$0xf]
  %v26 = vld [vmem:[%s1 + $0x10] sm:$0xf]
  %v27 = vld [vmem:[%s1 + $0x14] sm:$0xf]
  %v28 = vld [vmem:[%s1 + $0x18] sm:$0xf]
  %v29 = vld [vmem:[%s1 + $0x1c] sm:$0xf]
  %v30 = vld [vmem:[%s1 + $0x20] sm:$0xf]
  %v31 = vld [vmem:[%s1 + $0x24] sm:$0xf]
  %v32 = vld [vmem:[%s1 + $0x28] sm:$0xf]
  %v33 = vld [vmem:[%s1 + $0x2c] sm:$0xf]
  %v34 = vld [vmem:[%s1 + $0x30] sm:$0xf]
  %v35 = vld [vmem:[%s1 + $0x34] sm:$0xf]
  %v36 = vld [vmem:[%s1 + $0x38] sm:$0xf]
  %v37 = vld [vmem:[%s1 + $0x3c] sm:$0xf]
  %v38 = vld [vmem:[%s2] sm:$0x1]
  %v40 = vlaneseq
  %v41 = vshrl.u32 %v40, 7
  %v42 = vsub.s32 0, %v41
  %v43 = vrot.slane %v38, %v42
  %v61 = vunpack.c.l.b16 %v22
  %v62 = vunpack.c.l.b16 %v23
  %v63 = vunpack.c.l.b16 %v24
  %v64 = vunpack.c.l.b16 %v25
  %v65 = vunpack.c.l.b16 %v26
  %v66 = vunpack.c.l.b16 %v27
  %v67 = vunpack.c.l.b16 %v28
  %v68 = vunpack.c.l.b16 %v29
  %v69 = vunpack.c.l.b16 %v30
  %v70 = vunpack.c.l.b16 %v31
  %v71 = vunpack.c.l.b16 %v32
  %v72 = vunpack.c.l.b16 %v33
  %v73 = vunpack.c.l.b16 %v34
  %v74 = vunpack.c.l.b16 %v35
  %v75 = vunpack.c.l.b16 %v36
  %v76 = vunpack.c.l.b16 %v37
  %v77 = vpack.c.b16 %v62, %v61
  %v78 = vpack.c.b16 %v64, %v63
  %v79 = vpack.c.b16 %v66, %v65
  %v80 = vpack.c.b16 %v68, %v67
  %v81 = vpack.c.b16 %v70, %v69
  %v82 = vpack.c.b16 %v72, %v71
  %v83 = vpack.c.b16 %v74, %v73
  %v84 = vpack.c.b16 %v76, %v75
  %93 = vmatprep.subr.bf16.mxu0 0
  %94 = vmatpush1.bf16.msra.mxu0 %v77
  %95 = vmatprep.subr.bf16.mxu0 0
  %96 = vmatpush1.bf16.msra.mxu0 %v78
  %97 = vmatprep.subr.bf16.mxu0 0
  %98 = vmatpush1.bf16.msra.mxu0 %v79
  %99 = vmatprep.subr.bf16.mxu0 0
  %100 = vmatpush1.bf16.msra.mxu0 %v80
  %101 = vmatprep.subr.bf16.mxu0 0
  %102 = vmatpush1.bf16.msra.mxu0 %v81
  %103 = vmatprep.subr.bf16.mxu0 0
  %104 = vmatpush1.bf16.msra.mxu0 %v82
  %105 = vmatprep.subr.bf16.mxu0 0
  %106 = vmatpush1.bf16.msra.mxu0 %v83
  %107 = vmatprep.subr.bf16.mxu0 0
  %108 = vmatpush1.bf16.msra.mxu0 %v84
  %109 = vmatprep.subr.bf16.mxu0 0
  %110 = vmatpush1.bf16.msra.mxu0 0
  %111 = vmatprep.subr.bf16.mxu0 0
  %112 = vmatpush1.bf16.msra.mxu0 0
  %113 = vmatprep.subr.bf16.mxu0 0
  %114 = vmatpush1.bf16.msra.mxu0 0
  %115 = vmatprep.subr.bf16.mxu0 0
  %116 = vmatpush1.bf16.msra.mxu0 0
  %117 = vmatprep.subr.bf16.mxu0 0
  %118 = vmatpush1.bf16.msra.mxu0 0
  %119 = vmatprep.subr.bf16.mxu0 0
  %120 = vmatpush1.bf16.msra.mxu0 0
  %121 = vmatprep.subr.bf16.mxu0 0
  %122 = vmatpush1.bf16.msra.mxu0 0
  %123 = vmatprep.subr.bf16.mxu0 0
  %124 = vmatpush1.bf16.msra.mxu0 0
  %125 = vmatprep.mubr.bf16.mxu0 0
  %126 = vmatmul.mubr.bf16.gmra.mrb[0].mxu0 %v21
  %v127 = vpop.f32.mrb[0].mxu0
  %v128 = vadd.f32 %v43, %v127
  %v129 = vpop.f32.mrb[0].mxu0
  %v130 = vpop.f32.mrb[0].mxu0
  %v131 = vpop.f32.mrb[0].mxu0
  %132 = vdwg.mxu0
  %v133 = vmax.f32 %v128, 0.0
  %v134 = vpack.c.bf16 %v133, %v133
  %v135 = vld [vmem:[%s3] sm:$0xf]
  %v136 = vld [vmem:[%s3 + $0x4] sm:$0xf]
  %v137 = vld [vmem:[%s3 + $0x8] sm:$0xf]
  %v138 = vld [vmem:[%s3 + $0xc] sm:$0xf]
  %v139 = vld [vmem:[%s3 + $0x10] sm:$0xf]
  %v140 = vld [vmem:[%s3 + $0x14] sm:$0xf]
  %v141 = vld [vmem:[%s3 + $0x18] sm:$0xf]
  %v142 = vld [vmem:[%s3 + $0x1c] sm:$0xf]
  %v143 = vld [vmem:[%s3 + $0x20] sm:$0xf]
  %v144 = vld [vmem:[%s3 + $0x24] sm:$0xf]
  %v145 = vld [vmem:[%s3 + $0x28] sm:$0xf]
  %v146 = vld [vmem:[%s3 + $0x2c] sm:$0xf]
  %v147 = vld [vmem:[%s3 + $0x30] sm:$0xf]
  %v148 = vld [vmem:[%s3 + $0x34] sm:$0xf]
  %v149 = vld [vmem:[%s3 + $0x38] sm:$0xf]
  %v150 = vld [vmem:[%s3 + $0x3c] sm:$0xf]
  %v151 = vld [vmem:[%s4] sm:$0xff]
  %v168 = vunpack.c.l.b16 %v135
  %v169 = vunpack.c.l.b16 %v136
  %v170 = vunpack.c.l.b16 %v137
  %v171 = vunpack.c.l.b16 %v138
  %v172 = vunpack.c.l.b16 %v139
  %v173 = vunpack.c.l.b16 %v140
  %v174 = vunpack.c.l.b16 %v141
  %v175 = vunpack.c.l.b16 %v142
  %v176 = vunpack.c.l.b16 %v143
  %v177 = vunpack.c.l.b16 %v144
  %v178 = vunpack.c.l.b16 %v145
  %v179 = vunpack.c.l.b16 %v146
  %v180 = vunpack.c.l.b16 %v147
  %v181 = vunpack.c.l.b16 %v148
  %v182 = vunpack.c.l.b16 %v149
  %v183 = vunpack.c.l.b16 %v150
  %v184 = vpack.c.b16 %v169, %v168
  %v185 = vpack.c.b16 %v171, %v170
  %v186 = vpack.c.b16 %v173, %v172
  %v187 = vpack.c.b16 %v175, %v174
  %v188 = vpack.c.b16 %v177, %v176
  %v189 = vpack.c.b16 %v179, %v178
  %v190 = vpack.c.b16 %v181, %v180
  %v191 = vpack.c.b16 %v183, %v182
  %200 = vmatprep.subr.bf16.mxu0 0
  %201 = vmatpush1.bf16.msra.mxu0 %v184
  %202 = vmatprep.subr.bf16.mxu0 0
  %203 = vmatpush1.bf16.msra.mxu0 %v185
  %204 = vmatprep.subr.bf16.mxu0 0
  %205 = vmatpush1.bf16.msra.mxu0 %v186
  %206 = vmatprep.subr.bf16.mxu0 0
  %207 = vmatpush1.bf16.msra.mxu0 %v187
  %208 = vmatprep.subr.bf16.mxu0 0
  %209 = vmatpush1.bf16.msra.mxu0 %v188
  %210 = vmatprep.subr.bf16.mxu0 0
  %211 = vmatpush1.bf16.msra.mxu0 %v189
  %212 = vmatprep.subr.bf16.mxu0 0
  %213 = vmatpush1.bf16.msra.mxu0 %v190
  %214 = vmatprep.subr.bf16.mxu0 0
  %215 = vmatpush1.bf16.msra.mxu0 %v191
  %216 = vmatprep.subr.bf16.mxu0 0
  %217 = vmatpush1.bf16.msra.mxu0 0
  %218 = vmatprep.subr.bf16.mxu0 0
  %219 = vmatpush1.bf16.msra.mxu0 0
  %220 = vmatprep.subr.bf16.mxu0 0
  %221 = vmatpush1.bf16.msra.mxu0 0
  %222 = vmatprep.subr.bf16.mxu0 0
  %223 = vmatpush1.bf16.msra.mxu0 0
  %224 = vmatprep.subr.bf16.mxu0 0
  %225 = vmatpush1.bf16.msra.mxu0 0
  %226 = vmatprep.subr.bf16.mxu0 0
  %227 = vmatpush1.bf16.msra.mxu0 0
  %228 = vmatprep.subr.bf16.mxu0 0
  %229 = vmatpush1.bf16.msra.mxu0 0
  %230 = vmatprep.subr.bf16.mxu0 0
  %231 = vmatpush1.bf16.msra.mxu0 0
  %232 = vmatprep.mubr.bf16.mxu0 0
  %233 = vmatmul.mubr.bf16.gmra.mrb[0].mxu0 %v134
  %v234 = vpop.f32.mrb[0].mxu0
  %v235 = vadd.f32 %v151, %v234
  %v236 = vpop.f32.mrb[0].mxu0
  %v237 = vpop.f32.mrb[0].mxu0
  %v238 = vpop.f32.mrb[0].mxu0
  %239 = vdwg.mxu0
  %vm240 = vcmask 130048
  %241 = vst.msk [vmem:[%s5] sm:$0xff] %vm240, %v235
  // Predicated region
  $region22: #{dorn_forward.4} parent=0 // pred_check
    _
  $region23: #{dorn_forward.4} parent=0 // pred_check_branch
    %243 = sbr.rel (0) target = $region25
  $region24: #{dorn_forward.4} parent=0 // pred_region
    _
  $region25: #{dorn_forward.4} parent=0 // pred_fallthru
    _
  // Predicated region
  $region26: #{dorn_forward.4} parent=0 // pred_check
    _
  $region27: #{dorn_forward.4} parent=0 // pred_check_branch
    %245 = sbr.rel (0) target = $region29
  $region28: #{dorn_forward.4} parent=0 // pred_region
    _
  $region29: #{dorn_forward.4} parent=0 // pred_fallthru
    _

// kernel: dorn_forward.5
$region0: #{dorn_forward.5}
  #allocation0 [shape = 'u32[]', space=smem, size = 0x4, offset = 0x4, fixed_abs, tag = 'smem constant byte address 0x4 - core index']
  #allocation1 [shape = 'u32[144,128]{1,0:T(1,128)}', space=vmem, size = 0x12000, scoped, tag = 'internal scratch']
  %s0 = inlined_call_operand.vmem [shape: f32[16,2], index: 0, kind: input, shape index: {}]
  %s1 = inlined_call_operand.vmem [shape: f32[2,16], index: 1, kind: input, shape index: {}]
  %s2 = inlined_call_operand.vmem [shape: f32[2,16,2,2], index: 2, kind: input, shape index: {}]
  %s3 = inlined_call_operand.hbm [shape: f32[2,8,16,16], index: 3, kind: output, shape index: {0}]
  %s4 = inlined_call_operand.hbm [shape: s32[2,1,16,16], index: 4, kind: output, shape index: {1}]
  %5 = xla_tuple %s3, %s4
  %s6 = sld [smem:[#allocation0]]
  $region53: #{dorn_forward.5} parent=0
    _
  %s8 = ssub.s32 1, %s6
  %s9 = scalar_select 0, %s8, %s6
  $region1: #{dorn_forward.5} parent=0
    #allocation2 [shape = 'u8[65536]{0}', space=vmem, size = 0x10000, scoped, tag = 'output window, operand 0']
    #allocation3 [shape = 's32[2]{0}', space=sflag, size = 0x8, scoped, tag = 'scoped memory for dorn_forward.5']
    #allocation4 [shape = 'u8[8192]{0}', space=vmem, size = 0x2000, scoped, tag = 'output window, operand 1']
    #allocation5 [shape = 's32[2]{0}', space=sflag, size = 0x8, scoped, tag = 'scoped memory for dorn_forward.5']
    %10 = vsyncpa [#allocation3], 0
    %s11 = scalar_lea.sflag [#allocation3], 1
    %12 = vsyncpa %s11, 0
    %13 = vsyncpa [#allocation5], 0
    %s14 = scalar_lea.sflag [#allocation5], 1
    %15 = vsyncpa %s14, 0
    loop: start=0, step=1, limit=6
    $region2: #{dorn_forward.5} parent=1 // loop_pre_header
      _
    $region3: #{dorn_forward.5} parent=1 // loop_header
      %s17 = sphi 0, %s21
      %p18 = scmp.ge.s32.totalorder %s17, 6
      %s24 = sphi 0, %s36
      %s25 = sphi 0, %s32
      %s26 = sphi 0, %s24
      %s27 = sphi 0, %s25
      %s28 = sphi 0, %s26
      %s29 = sphi 0, %s27
      %s39 = sphi 0, %s41
      %s42 = sphi 0, %s39
      %s43 = sphi 0, %s42
      %s59 = sphi 0, %s43
      %s63 = sphi 0, %s63
      %s65 = sphi 0, %s63
      %s66 = sphi 0, %s65
      %s80 = sphi 0, %s66
      %s86 = sphi 0, %s88
      %s89 = sphi 0, %s86
      %s90 = sphi 0, %s89
      %s106 = sphi 0, %s90
      %s114 = sphi 0, %s116
      %s117 = sphi 0, %s114
      %s118 = sphi 0, %s117
      %s134 = sphi 0, %s118
      %s142 = sphi 0, %s144
      %s145 = sphi 0, %s142
      %s146 = sphi 0, %s145
      %s162 = sphi 0, %s146
    $region4: #{dorn_forward.5} parent=1 // loop_header_branch
      %20 = sbr.rel (%p18) target = $region8
    $region5: #{dorn_forward.5} parent=1 // loop_body
      %s22 = ssub.s32 %s17, 1
      %s23 = ssub.s32 %s17, 2
      %s30 = sadd.s32 1, %s25
      %p31 = scmp.ge.s32.totalorder %s30, 2
      %s32 = scalar_select %p31, 0, %s30
      %s33 = sadd.s32 1, %s24
      %s34 = scalar_select %p31, %s33, %s24
      %p35 = scmp.ge.s32.totalorder %s34, 2
      %s36 = scalar_select %p35, 0, %s34
      %s37 = ssub.s32 %s25, %s32
      %p38 = scmp.eq.s32.totalorder %s37, 0
      %s40 = sadd.s32 %s39, 1
      %s41 = scalar_select %p38, %s39, %s40
      %p44 = pneg %p38
      %p45 = scmp.eq.s32.totalorder %s17, 3
      %p46 = por %p44, %p45
      %p47 = scmp.ne.s32.totalorder %s39, %s42
      %p48 = scmp.eq.s32.totalorder %s17, 0
      %p49 = por %p47, %p48
      %p50 = scmp.ne.s32.totalorder %s39, %s42
      %p51 = scmp.eq.s32.totalorder %s22, 3
      %p52 = por %p50, %p51
      %p53 = scmp.ne.s32.totalorder %s42, %s43
      %p54 = scmp.eq.s32.totalorder %s22, 0
      %p55 = por %p53, %p54
      %p56 = scmp.ne.s32.totalorder %s42, %s43
      %p57 = scmp.eq.s32.totalorder %s23, 3
      %p58 = por %p56, %p57
      %p60 = scmp.ne.s32.totalorder %s43, %s59
      %p61 = scmp.eq.s32.totalorder %s23, 0
      %p62 = por %p60, %p61
      %s64 = sadd.s32 %s63, 1
      %p67 = scmp.eq.s32.totalorder %s17, 3
      %p68 = scmp.ne.s32.totalorder %s63, %s65
      %p69 = scmp.eq.s32.totalorder %s17, 0
      %p70 = por %p68, %p69
      %p71 = scmp.ne.s32.totalorder %s63, %s65
      %p72 = scmp.eq.s32.totalorder %s22, 3
      %p73 = por %p71, %p72
      %p74 = scmp.ne.s32.totalorder %s65, %s66
      %p75 = scmp.eq.s32.totalorder %s22, 0
      %p76 = por %p74, %p75
      %p77 = scmp.ne.s32.totalorder %s65, %s66
      %p78 = scmp.eq.s32.totalorder %s23, 3
      %p79 = por %p77, %p78
      %p81 = scmp.ne.s32.totalorder %s66, %s80
      %p82 = scmp.eq.s32.totalorder %s23, 0
      %p83 = por %p81, %p82
      %s84 = ssub.s32 %s24, %s36
      %p85 = scmp.eq.s32.totalorder %s84, 0
      %s87 = sadd.s32 %s86, 1
      %s88 = scalar_select %p85, %s86, %s87
      %p91 = pneg %p85
      %p92 = scmp.eq.s32.totalorder %s17, 3
      %p93 = por %p91, %p92
      %p94 = scmp.ne.s32.totalorder %s86, %s89
      %p95 = scmp.eq.s32.totalorder %s17, 0
      %p96 = por %p94, %p95
      %p97 = scmp.ne.s32.totalorder %s86, %s89
      %p98 = scmp.eq.s32.totalorder %s22, 3
      %p99 = por %p97, %p98
      %p100 = scmp.ne.s32.totalorder %s89, %s90
      %p101 = scmp.eq.s32.totalorder %s22, 0
      %p102 = por %p100, %p101
      %p103 = scmp.ne.s32.totalorder %s89, %s90
      %p104 = scmp.eq.s32.totalorder %s23, 3
      %p105 = por %p103, %p104
      %p107 = scmp.ne.s32.totalorder %s90, %s106
      %p108 = scmp.eq.s32.totalorder %s23, 0
      %p109 = por %p107, %p108
      %s110 = ssub.s32 %s24, %s36
      %s111 = ssub.s32 %s25, %s32
      %s112 = sor.u32 %s110, %s111
      %p113 = scmp.eq.s32.totalorder %s112, 0
      %s115 = sadd.s32 %s114, 1
      %s116 = scalar_select %p113, %s114, %s115
      %p119 = pneg %p113
      %p120 = scmp.eq.s32.totalorder %s17, 3
      %p121 = por %p119, %p120
      %p122 = scmp.ne.s32.totalorder %s114, %s117
      %p123 = scmp.eq.s32.totalorder %s17, 0
      %p124 = por %p122, %p123
      %p125 = scmp.ne.s32.totalorder %s114, %s117
      %p126 = scmp.eq.s32.totalorder %s22, 3
      %p127 = por %p125, %p126
      %p128 = scmp.ne.s32.totalorder %s117, %s118
      %p129 = scmp.eq.s32.totalorder %s22, 0
      %p130 = por %p128, %p129
      %p131 = scmp.ne.s32.totalorder %s117, %s118
      %p132 = scmp.eq.s32.totalorder %s23, 3
      %p133 = por %p131, %p132
      %p135 = scmp.ne.s32.totalorder %s118, %s134
      %p136 = scmp.eq.s32.totalorder %s23, 0
      %p137 = por %p135, %p136
      %s138 = ssub.s32 %s24, %s36
      %s139 = ssub.s32 %s25, %s32
      %s140 = sor.u32 %s138, %s139
      %p141 = scmp.eq.s32.totalorder %s140, 0
      %s143 = sadd.s32 %s142, 1
      %s144 = scalar_select %p141, %s142, %s143
      %p147 = pneg %p141
      %p148 = scmp.eq.s32.totalorder %s17, 3
      %p149 = por %p147, %p148
      %p150 = scmp.ne.s32.totalorder %s142, %s145
      %p151 = scmp.eq.s32.totalorder %s17, 0
      %p152 = por %p150, %p151
      %p153 = scmp.ne.s32.totalorder %s142, %s145
      %p154 = scmp.eq.s32.totalorder %s22, 3
      %p155 = por %p153, %p154
      %p156 = scmp.ne.s32.totalorder %s145, %s146
      %p157 = scmp.eq.s32.totalorder %s22, 0
      %p158 = por %p156, %p157
      %p159 = scmp.ne.s32.totalorder %s145, %s146
      %p160 = scmp.eq.s32.totalorder %s23, 3
      %p161 = por %p159, %p160
      %p163 = scmp.ne.s32.totalorder %s146, %s162
      %p164 = scmp.eq.s32.totalorder %s23, 0
      %p165 = por %p163, %p164
      %p166 = scmp.le.s32.totalorder 1, %s17
      %p167 = scmp.lt.s32.totalorder %s17, 5
      %p168 = pnand %p166, %p167
      %p169 = pneg %p168
      // Predicated region
      $region9: #{dorn_forward.5} parent=5 // pred_check
        _
      $region10: #{dorn_forward.5} parent=5 // pred_check_branch
        %171 = sbr.rel (%p168) target = $region12
      $region11: #{dorn_forward.5} parent=5 // pred_region
        %s172 = ssub.s32 %s17, 1
        // Predicated region
        $region13: #{dorn_forward.5} parent=11 // pred_check
          %p173 = pneg %p76
        $region14: #{dorn_forward.5} parent=11 // pred_check_branch
          %175 = sbr.rel (%p173) target = $region16
        $region15: #{dorn_forward.5} parent=11 // pred_region
          _
        $region16: #{dorn_forward.5} parent=11 // pred_fallthru
          _
      $region12: #{dorn_forward.5} parent=5 // pred_fallthru
        _
      %p176 = scmp.lt.s32.totalorder %s17, 4
      // Predicated region
      $region17: #{dorn_forward.5} parent=5 // pred_check
        %p177 = pneg %p176
      $region18: #{dorn_forward.5} parent=5 // pred_check_branch
        %179 = sbr.rel (%p177) target = $region20
      $region19: #{dorn_forward.5} parent=5 // pred_region
        // Predicated region
        $region21: #{dorn_forward.5} parent=19 // pred_check
          %p180 = pneg %p49
        $region22: #{dorn_forward.5} parent=19 // pred_check_branch
          %182 = sbr.rel (%p180) target = $region24
        $region23: #{dorn_forward.5} parent=19 // pred_region
          %p183 = scmp.lt.s32.totalorder %s25, 1
          %s184 = scalar_select %p183, %s25, 1
          %s185 = smul.addr %s184, 8
          %s186 = scalar_lea.vmem %s0, %s185
        $region24: #{dorn_forward.5} parent=19 // pred_fallthru
          _
        // Predicated region
        $region25: #{dorn_forward.5} parent=19 // pred_check
          %p187 = pneg %p96
        $region26: #{dorn_forward.5} parent=19 // pred_check_branch
          %189 = sbr.rel (%p187) target = $region28
        $region27: #{dorn_forward.5} parent=19 // pred_region
          %p190 = scmp.lt.s32.totalorder %s24, 1
          %s191 = scalar_select %p190, %s24, 1
          %s192 = smul.addr %s191, 16
          %s193 = smul.addr %s192, 2
          %s194 = scalar_lea.vmem %s2, %s193
        $region28: #{dorn_forward.5} parent=19 // pred_fallthru
          _
      $region20: #{dorn_forward.5} parent=5 // pred_fallthru
        _
      %p195 = scmp.le.s32.totalorder 1, %s17
      %p196 = scmp.lt.s32.totalorder %s17, 5
      %p197 = pnand %p195, %p196
      %p198 = pneg %p197
      // Predicated region
      $region29: #{dorn_forward.5} parent=5 // pred_check
        _
      $region30: #{dorn_forward.5} parent=5 // pred_check_branch
        %200 = sbr.rel (%p197) target = $region32
      $region31: #{dorn_forward.5} parent=5 // pred_region
        %s201 = ssub.s32 %s17, 1
        %p202 = scmp.lt.s32.totalorder %s27, 1
        %s203 = scalar_select %p202, %s27, 1
        %s204 = smul.addr %s203, 8
        %s205 = scalar_lea.vmem %s0, %s204
        %p206 = pneg %p55
        %p207 = pneg %p52
        %p208 = pneg %p76
        %p209 = pneg %p73
        %p210 = scmp.lt.s32.totalorder %s26, 1
        %s211 = scalar_select %p210, %s26, 1
        %s212 = smul.addr %s211, 16
        %s213 = smul.addr %s212, 2
        %s214 = scalar_lea.vmem %s2, %s213
        %p215 = pneg %p102
        %p216 = pneg %p99
        %p217 = pneg %p130
        %p218 = pneg %p127
        %s219 = sand.u32 %s117, 1
        %s220 = scalar_lea.sflag [#allocation3], %s219
        %s221 = sand.u32 %s117, 1
        %s222 = smul.addr %s221, 64
        %s223 = scalar_lea.vmem [#allocation2], %s222
        %p224 = pneg %p158
        %p225 = pneg %p155
        %s226 = sand.u32 %s145, 1
        %s227 = scalar_lea.sflag [#allocation5], %s226
        %s228 = sand.u32 %s145, 1
        %s229 = smul.addr %s228, 8
        %s230 = scalar_lea.vmem [#allocation4], %s229
        %p231 = scmp.lt.s32.totalorder %s27, 1
        %s232 = scalar_select %p231, %s27, 1
        %s233 = smul.addr %s232, 8
        %s234 = scalar_lea.vmem %s0, %s233
        %p235 = scmp.lt.s32.totalorder %s26, 1
        %s236 = scalar_select %p235, %s26, 1
        %s237 = smul.addr %s236, 16
        %s238 = smul.addr %s237, 2
        %s239 = scalar_lea.vmem %s2, %s238
        %v240 = vld [vmem:[%s239] sm:$0x3]
        %v241 = vld [vmem:[%s239 + $0x2] sm:$0x3]
        %v242 = vld [vmem:[%s239 + $0x4] sm:$0x3]
        %v243 = vld [vmem:[%s239 + $0x6] sm:$0x3]
        %v244 = vld [vmem:[%s239 + $0x8] sm:$0x3]
        %v245 = vld [vmem:[%s239 + $0xa] sm:$0x3]
        %v246 = vld [vmem:[%s239 + $0xc] sm:$0x3]
        %v247 = vld [vmem:[%s239 + $0xe] sm:$0x3]
        %v248 = vld [vmem:[%s239 + $0x10] sm:$0x3]
        %v249 = vld [vmem:[%s239 + $0x12] sm:$0x3]
        %v250 = vld [vmem:[%s239 + $0x14] sm:$0x3]
        %v251 = vld [vmem:[%s239 + $0x16] sm:$0x3]
        %v252 = vld [vmem:[%s239 + $0x18] sm:$0x3]
        %v253 = vld [vmem:[%s239 + $0x1a] sm:$0x3]
        %v254 = vld [vmem:[%s239 + $0x1c] sm:$0x3]
        %v255 = vld [vmem:[%s239 + $0x1e] sm:$0x3]
        %v256 = vld [vmem:[%s234] sm:$0xff]
        %v257 = vld [vmem:[%s1] sm:$0x3]
        %vm258 = vcmask 15360
        %v260 = vsel %vm258, %v256, 0
        %vm262 = vcmask 1041408
        %v264 = vsel %vm262, %v240, 0
        %266 = vmatprep.subr.mxu0 0.0
        %267 = vmatpush1.msra.mxu0 %v264
        %268 = vmatprep.subr.mxu0 0.0
        %269 = vmatpush1.msra.mxu0 0.0
        %270 = vmatprep.subr.mxu0 0.0
        %271 = vmatpush1.msra.mxu0 0.0
        %272 = vmatprep.subr.mxu0 0.0
        %273 = vmatpush1.msra.mxu0 0.0
        %274 = vmatprep.subr.mxu0 0.0
        %275 = vmatpush1.msra.mxu0 0.0
        %276 = vmatprep.subr.mxu0 0.0
        %277 = vmatpush1.msra.mxu0 0.0
        %278 = vmatprep.subr.mxu0 0.0
        %279 = vmatpush1.msra.mxu0 0.0
        %280 = vmatprep.subr.mxu0 0.0
        %281 = vmatpush1.msra.mxu0 0.0
        %282 = vmatprep.subr.mxu0 0.0
        %283 = vmatpush1.msra.mxu0 0.0
        %284 = vmatprep.subr.mxu0 0.0
        %285 = vmatpush1.msra.mxu0 0.0
        %286 = vmatprep.subr.mxu0 0.0
        %287 = vmatpush1.msra.mxu0 0.0
        %288 = vmatprep.subr.mxu0 0.0
        %289 = vmatpush1.msra.mxu0 0.0
        %290 = vmatprep.subr.mxu0 0.0
        %291 = vmatpush1.msra.mxu0 0.0
        %292 = vmatprep.subr.mxu0 0.0
        %293 = vmatpush1.msra.mxu0 0.0
        %294 = vmatprep.subr.mxu0 0.0
        %295 = vmatpush1.msra.mxu0 0.0
        %296 = vmatprep.subr.mxu0 0.0
        %297 = vmatpush1.msra.mxu0 0.0
        %298 = vmatprep.subr.mxu0 0.0
        %299 = vmatpush1.msra.mxu0 0.0
        %300 = vmatprep.subr.mxu0 0.0
        %301 = vmatpush1.msra.mxu0 0.0
        %302 = vmatprep.subr.mxu0 0.0
        %303 = vmatpush1.msra.mxu0 0.0
        %304 = vmatprep.subr.mxu0 0.0
        %305 = vmatpush1.msra.mxu0 0.0
        %306 = vmatprep.subr.mxu0 0.0
        %307 = vmatpush1.msra.mxu0 0.0
        %308 = vmatprep.subr.mxu0 0.0
        %309 = vmatpush1.msra.mxu0 0.0
        %310 = vmatprep.subr.mxu0 0.0
        %311 = vmatpush1.msra.mxu0 0.0
        %312 = vmatprep.subr.mxu0 0.0
        %313 = vmatpush1.msra.mxu0 0.0
        %314 = vmatprep.subr.mxu0 0.0
        %315 = vmatpush1.msra.mxu0 0.0
        %316 = vmatprep.subr.mxu0 0.0
        %317 = vmatpush1.msra.mxu0 0.0
        %318 = vmatprep.subr.mxu0 0.0
        %319 = vmatpush1.msra.mxu0 0.0
        %320 = vmatprep.subr.mxu0 0.0
        %321 = vmatpush1.msra.mxu0 0.0
        %322 = vmatprep.subr.mxu0 0.0
        %323 = vmatpush1.msra.mxu0 0.0
        %324 = vmatprep.subr.mxu0 0.0
        %325 = vmatpush1.msra.mxu0 0.0
        %326 = vmatprep.subr.mxu0 0.0
        %327 = vmatpush1.msra.mxu0 0.0
        %328 = vmatprep.subr.mxu0 0.0
        %329 = vmatpush1.msra.mxu0 0.0
        %330 = vmatprep.mubr.f32.mxu0 0.0
        %331 = vmatmul.mubr.f32.gmra.mrb[0].mxu0 %v260
        %v332 = vpop.f32.mrb[0].mxu0
        %v333 = vadd.f32 0.0, %v332
        %v334 = vpop.f32.mrb[0].mxu0
        %335 = vdwg.mxu0
        %v337 = vsel %vm262, %v241, 0
        %339 = vmatprep.subr.mxu0 0.0
        %340 = vmatpush1.msra.mxu0 %v337
        %341 = vmatprep.subr.mxu0 0.0
        %342 = vmatpush1.msra.mxu0 0.0
        %343 = vmatprep.subr.mxu0 0.0
        %344 = vmatpush1.msra.mxu0 0.0
        %345 = vmatprep.subr.mxu0 0.0
        %346 = vmatpush1.msra.mxu0 0.0
        %347 = vmatprep.subr.mxu0 0.0
        %348 = vmatpush1.msra.mxu0 0.0
        %349 = vmatprep.subr.mxu0 0.0
        %350 = vmatpush1.msra.mxu0 0.0
        %351 = vmatprep.subr.mxu0 0.0
        %352 = vmatpush1.msra.mxu0 0.0
        %353 = vmatprep.subr.mxu0 0.0
        %354 = vmatpush1.msra.mxu0 0.0
        %355 = vmatprep.subr.mxu0 0.0
        %356 = vmatpush1.msra.mxu0 0.0
        %357 = vmatprep.subr.mxu0 0.0
        %358 = vmatpush1.msra.mxu0 0.0
        %359 = vmatprep.subr.mxu0 0.0
        %360 = vmatpush1.msra.mxu0 0.0
        %361 = vmatprep.subr.mxu0 0.0
        %362 = vmatpush1.msra.mxu0 0.0
        %363 = vmatprep.subr.mxu0 0.0
        %364 = vmatpush1.msra.mxu0 0.0
        %365 = vmatprep.subr.mxu0 0.0
        %366 = vmatpush1.msra.mxu0 0.0
        %367 = vmatprep.subr.mxu0 0.0
        %368 = vmatpush1.msra.mxu0 0.0
        %369 = vmatprep.subr.mxu0 0.0
        %370 = vmatpush1.msra.mxu0 0.0
        %371 = vmatprep.subr.mxu0 0.0
        %372 = vmatpush1.msra.mxu0 0.0
        %373 = vmatprep.subr.mxu0 0.0
        %374 = vmatpush1.msra.mxu0 0.0
        %375 = vmatprep.subr.mxu0 0.0
        %376 = vmatpush1.msra.mxu0 0.0
        %377 = vmatprep.subr.mxu0 0.0
        %378 = vmatpush1.msra.mxu0 0.0
        %379 = vmatprep.subr.mxu0 0.0
        %380 = vmatpush1.msra.mxu0 0.0
        %381 = vmatprep.subr.mxu0 0.0
        %382 = vmatpush1.msra.mxu0 0.0
        %383 = vmatprep.subr.mxu0 0.0
        %384 = vmatpush1.msra.mxu0 0.0
        %385 = vmatprep.subr.mxu0 0.0
        %386 = vmatpush1.msra.mxu0 0.0
        %387 = vmatprep.subr.mxu0 0.0
        %388 = vmatpush1.msra.mxu0 0.0
        %389 = vmatprep.subr.mxu0 0.0
        %390 = vmatpush1.msra.mxu0 0.0
        %391 = vmatprep.subr.mxu0 0.0
        %392 = vmatpush1.msra.mxu0 0.0
        %393 = vmatprep.subr.mxu0 0.0
        %394 = vmatpush1.msra.mxu0 0.0
        %395 = vmatprep.subr.mxu0 0.0
        %396 = vmatpush1.msra.mxu0 0.0
        %397 = vmatprep.subr.mxu0 0.0
        %398 = vmatpush1.msra.mxu0 0.0
        %399 = vmatprep.subr.mxu0 0.0
        %400 = vmatpush1.msra.mxu0 0.0
        %401 = vmatprep.subr.mxu0 0.0
        %402 = vmatpush1.msra.mxu0 0.0
        %403 = vmatprep.mubr.f32.mxu0 0.0
        %404 = vmatmul.mubr.f32.gmra.mrb[0].mxu0 %v260
        %v405 = vpop.f32.mrb[0].mxu0
        %v406 = vadd.f32 0.0, %v405
        %v407 = vpop.f32.mrb[0].mxu0
        %408 = vdwg.mxu0
        %v410 = vsel %vm262, %v242, 0
        %412 = vmatprep.subr.mxu0 0.0
        %413 = vmatpush1.msra.mxu0 %v410
        %414 = vmatprep.subr.mxu0 0.0
        %415 = vmatpush1.msra.mxu0 0.0
        %416 = vmatprep.subr.mxu0 0.0
        %417 = vmatpush1.msra.mxu0 0.0
        %418 = vmatprep.subr.mxu0 0.0
        %419 = vmatpush1.msra.mxu0 0.0
        %420 = vmatprep.subr.mxu0 0.0
        %421 = vmatpush1.msra.mxu0 0.0
        %422 = vmatprep.subr.mxu0 0.0
        %423 = vmatpush1.msra.mxu0 0.0
        %424 = vmatprep.subr.mxu0 0.0
        %425 = vmatpush1.msra.mxu0 0.0
        %426 = vmatprep.subr.mxu0 0.0
        %427 = vmatpush1.msra.mxu0 0.0
        %428 = vmatprep.subr.mxu0 0.0
        %429 = vmatpush1.msra.mxu0 0.0
        %430 = vmatprep.subr.mxu0 0.0
        %431 = vmatpush1.msra.mxu0 0.0
        %432 = vmatprep.subr.mxu0 0.0
        %433 = vmatpush1.msra.mxu0 0.0
        %434 = vmatprep.subr.mxu0 0.0
        %435 = vmatpush1.msra.mxu0 0.0
        %436 = vmatprep.subr.mxu0 0.0
        %437 = vmatpush1.msra.mxu0 0.0
        %438 = vmatprep.subr.mxu0 0.0
        %439 = vmatpush1.msra.mxu0 0.0
        %440 = vmatprep.subr.mxu0 0.0
        %441 = vmatpush1.msra.mxu0 0.0
        %442 = vmatprep.subr.mxu0 0.0
        %443 = vmatpush1.msra.mxu0 0.0
        %444 = vmatprep.subr.mxu0 0.0
        %445 = vmatpush1.msra.mxu0 0.0
        %446 = vmatprep.subr.mxu0 0.0
        %447 = vmatpush1.msra.mxu0 0.0
        %448 = vmatprep.subr.mxu0 0.0
        %449 = vmatpush1.msra.mxu0 0.0
        %450 = vmatprep.subr.mxu0 0.0
        %451 = vmatpush1.msra.mxu0 0.0
        %452 = vmatprep.subr.mxu0 0.0
        %453 = vmatpush1.msra.mxu0 0.0
        %454 = vmatprep.subr.mxu0 0.0
        %455 = vmatpush1.msra.mxu0 0.0
        %456 = vmatprep.subr.mxu0 0.0
        %457 = vmatpush1.msra.mxu0 0.0
        %458 = vmatprep.subr.mxu0 0.0
        %459 = vmatpush1.msra.mxu0 0.0
        %460 = vmatprep.subr.mxu0 0.0
        %461 = vmatpush1.msra.mxu0 0.0
        %462 = vmatprep.subr.mxu0 0.0
        %463 = vmatpush1.msra.mxu0 0.0
        %464 = vmatprep.subr.mxu0 0.0
        %465 = vmatpush1.msra.mxu0 0.0
        %466 = vmatprep.subr.mxu0 0.0
        %467 = vmatpush1.msra.mxu0 0.0
        %468 = vmatprep.subr.mxu0 0.0
        %469 = vmatpush1.msra.mxu0 0.0
        %470 = vmatprep.subr.mxu0 0.0
        %471 = vmatpush1.msra.mxu0 0.0
        %472 = vmatprep.subr.mxu0 0.0
        %473 = vmatpush1.msra.mxu0 0.0
        %474 = vmatprep.subr.mxu0 0.0
        %475 = vmatpush1.msra.mxu0 0.0
        %476 = vmatprep.mubr.f32.mxu0 0.0
        %477 = vmatmul.mubr.f32.gmra.mrb[0].mxu0 %v260
        %v478 = vpop.f32.mrb[0].mxu0
        %v479 = vadd.f32 0.0, %v478
        %v480 = vpop.f32.mrb[0].mxu0
        %481 = vdwg.mxu0
        %v483 = vsel %vm262, %v243, 0
        %485 = vmatprep.subr.mxu0 0.0
        %486 = vmatpush1.msra.mxu0 %v483
        %487 = vmatprep.subr.mxu0 0.0
        %488 = vmatpush1.msra.mxu0 0.0
        %489 = vmatprep.subr.mxu0 0.0
        %490 = vmatpush1.msra.mxu0 0.0
        %491 = vmatprep.subr.mxu0 0.0
        %492 = vmatpush1.msra.mxu0 0.0
        %493 = vmatprep.subr.mxu0 0.0
        %494 = vmatpush1.msra.mxu0 0.0
        %495 = vmatprep.subr.mxu0 0.0
        %496 = vmatpush1.msra.mxu0 0.0
        %497 = vmatprep.subr.mxu0 0.0
        %498 = vmatpush1.msra.mxu0 0.0
        %499 = vmatprep.subr.mxu0 0.0
        %500 = vmatpush1.msra.mxu0 0.0
        %501 = vmatprep.subr.mxu0 0.0
        %502 = vmatpush1.msra.mxu0 0.0
        %503 = vmatprep.subr.mxu0 0.0
        %504 = vmatpush1.msra.mxu0 0.0
        %505 = vmatprep.subr.mxu0 0.0
        %506 = vmatpush1.msra.mxu0 0.0
        %507 = vmatprep.subr.mxu0 0.0
        %508 = vmatpush1.msra.mxu0 0.0
        %509 = vmatprep.subr.mxu0 0.0
        %510 = vmatpush1.msra.mxu0 0.0
        %511 = vmatprep.subr.mxu0 0.0
        %512 = vmatpush1.msra.mxu0 0.0
        %513 = vmatprep.subr.mxu0 0.0
        %514 = vmatpush1.msra.mxu0 0.0
        %515 = vmatprep.subr.mxu0 0.0
        %516 = vmatpush1.msra.mxu0 0.0
        %517 = vmatprep.subr.mxu0 0.0
        %518 = vmatpush1.msra.mxu0 0.0
        %519 = vmatprep.subr.mxu0 0.0
        %520 = vmatpush1.msra.mxu0 0.0
        %521 = vmatprep.subr.mxu0 0.0
        %522 = vmatpush1.msra.mxu0 0.0
        %523 = vmatprep.subr.mxu0 0.0
        %524 = vmatpush1.msra.mxu0 0.0
        %525 = vmatprep.subr.mxu0 0.0
        %526 = vmatpush1.msra.mxu0 0.0
        %527 = vmatprep.subr.mxu0 0.0
        %528 = vmatpush1.msra.mxu0 0.0
        %529 = vmatprep.subr.mxu0 0.0
        %530 = vmatpush1.msra.mxu0 0.0
        %531 = vmatprep.subr.mxu0 0.0
        %532 = vmatpush1.msra.mxu0 0.0
        %533 = vmatprep.subr.mxu0 0.0
        %534 = vmatpush1.msra.mxu0 0.0
        %535 = vmatprep.subr.mxu0 0.0
        %536 = vmatpush1.msra.mxu0 0.0
        %537 = vmatprep.subr.mxu0 0.0
        %538 = vmatpush1.msra.mxu0 0.0
        %539 = vmatprep.subr.mxu0 0.0
        %540 = vmatpush1.msra.mxu0 0.0
        %541 = vmatprep.subr.mxu0 0.0
        %542 = vmatpush1.msra.mxu0 0.0
        %543 = vmatprep.subr.mxu0 0.0
        %544 = vmatpush1.msra.mxu0 0.0
        %545 = vmatprep.subr.mxu0 0.0
        %546 = vmatpush1.msra.mxu0 0.0
        %547 = vmatprep.subr.mxu0 0.0
        %548 = vmatpush1.msra.mxu0 0.0
        %549 = vmatprep.mubr.f32.mxu0 0.0
        %550 = vmatmul.mubr.f32.gmra.mrb[0].mxu0 %v260
        %v551 = vpop.f32.mrb[0].mxu0
        %v552 = vadd.f32 0.0, %v551
        %v553 = vpop.f32.mrb[0].mxu0
        %554 = vdwg.mxu0
        %v556 = vsel %vm262, %v244, 0
        %558 = vmatprep.subr.mxu0 0.0
        %559 = vmatpush1.msra.mxu0 %v556
        %560 = vmatprep.subr.mxu0 0.0
        %561 = vmatpush1.msra.mxu0 0.0
        %562 = vmatprep.subr.mxu0 0.0
        %563 = vmatpush1.msra.mxu0 0.0
        %564 = vmatprep.subr.mxu0 0.0
        %565 = vmatpush1.msra.mxu0 0.0
        %566 = vmatprep.subr.mxu0 0.0
        %567 = vmatpush1.msra.mxu0 0.0
        %568 = vmatprep.subr.mxu0 0.0
        %569 = vmatpush1.msra.mxu0 0.0
        %570 = vmatprep.subr.mxu0 0.0
        %571 = vmatpush1.msra.mxu0 0.0
        %572 = vmatprep.subr.mxu0 0.0
        %573 = vmatpush1.msra.mxu0 0.0
        %574 = vmatprep.subr.mxu0 0.0
        %575 = vmatpush1.msra.mxu0 0.0
        %576 = vmatprep.subr.mxu0 0.0
        %577 = vmatpush1.msra.mxu0 0.0
        %578 = vmatprep.subr.mxu0 0.0
        %579 = vmatpush1.msra.mxu0 0.0
        %580 = vmatprep.subr.mxu0 0.0
        %581 = vmatpush1.msra.mxu0 0.0
        %582 = vmatprep.subr.mxu0 0.0
        %583 = vmatpush1.msra.mxu0 0.0
        %584 = vmatprep.subr.mxu0 0.0
        %585 = vmatpush1.msra.mxu0 0.0
        %586 = vmatprep.subr.mxu0 0.0
        %587 = vmatpush1.msra.mxu0 0.0
        %588 = vmatprep.subr.mxu0 0.0
        %589 = vmatpush1.msra.mxu0 0.0
        %590 = vmatprep.subr.mxu0 0.0
        %591 = vmatpush1.msra.mxu0 0.0
        %592 = vmatprep.subr.mxu0 0.0
        %593 = vmatpush1.msra.mxu0 0.0
        %594 = vmatprep.subr.mxu0 0.0
        %595 = vmatpush1.msra.mxu0 0.0
        %596 = vmatprep.subr.mxu0 0.0
        %597 = vmatpush1.msra.mxu0 0.0
        %598 = vmatprep.subr.mxu0 0.0
        %599 = vmatpush1.msra.mxu0 0.0
        %600 = vmatprep.subr.mxu0 0.0
        %601 = vmatpush1.msra.mxu0 0.0
        %602 = vmatprep.subr.mxu0 0.0
        %603 = vmatpush1.msra.mxu0 0.0
        %604 = vmatprep.subr.mxu0 0.0
        %605 = vmatpush1.msra.mxu0 0.0
        %606 = vmatprep.subr.mxu0 0.0
        %607 = vmatpush1.msra.mxu0 0.0
        %608 = vmatprep.subr.mxu0 0.0
        %609 = vmatpush1.msra.mxu0 0.0
        %610 = vmatprep.subr.mxu0 0.0
        %611 = vmatpush1.msra.mxu0 0.0
        %612 = vmatprep.subr.mxu0 0.0
        %613 = vmatpush1.msra.mxu0 0.0
        %614 = vmatprep.subr.mxu0 0.0
        %615 = vmatpush1.msra.mxu0 0.0
        %616 = vmatprep.subr.mxu0 0.0
        %617 = vmatpush1.msra.mxu0 0.0
        %618 = vmatprep.subr.mxu0 0.0
        %619 = vmatpush1.msra.mxu0 0.0
        %620 = vmatprep.subr.mxu0 0.0
        %621 = vmatpush1.msra.mxu0 0.0
        %622 = vmatprep.mubr.f32.mxu0 0.0
        %623 = vmatmul.mubr.f32.gmra.mrb[0].mxu0 %v260
        %v624 = vpop.f32.mrb[0].mxu0
        %v625 = vadd.f32 0.0, %v624
        %v626 = vpop.f32.mrb[0].mxu0
        %627 = vdwg.mxu0
        %v629 = vsel %vm262, %v245, 0
        %631 = vmatprep.subr.mxu0 0.0
        %632 = vmatpush1.msra.mxu0 %v629
        %633 = vmatprep.subr.mxu0 0.0
        %634 = vmatpush1.msra.mxu0 0.0
        %635 = vmatprep.subr.mxu0 0.0
        %636 = vmatpush1.msra.mxu0 0.0
        %637 = vmatprep.subr.mxu0 0.0
        %638 = vmatpush1.msra.mxu0 0.0
        %639 = vmatprep.subr.mxu0 0.0
        %640 = vmatpush1.msra.mxu0 0.0
        %641 = vmatprep.subr.mxu0 0.0
        %642 = vmatpush1.msra.mxu0 0.0
        %643 = vmatprep.subr.mxu0 0.0
        %644 = vmatpush1.msra.mxu0 0.0
        %645 = vmatprep.subr.mxu0 0.0
        %646 = vmatpush1.msra.mxu0 0.0
        %647 = vmatprep.subr.mxu0 0.0
        %648 = vmatpush1.msra.mxu0 0.0
        %649 = vmatprep.subr.mxu0 0.0
        %650 = vmatpush1.msra.mxu0 0.0
        %651 = vmatprep.subr.mxu0 0.0
        %652 = vmatpush1.msra.mxu0 0.0
        %653 = vmatprep.subr.mxu0 0.0
        %654 = vmatpush1.msra.mxu0 0.0
        %655 = vmatprep.subr.mxu0 0.0
        %656 = vmatpush1.msra.mxu0 0.0
        %657 = vmatprep.subr.mxu0 0.0
        %658 = vmatpush1.msra.mxu0 0.0
        %659 = vmatprep.subr.mxu0 0.0
        %660 = vmatpush1.msra.mxu0 0.0
        %661 = vmatprep.subr.mxu0 0.0
        %662 = vmatpush1.msra.mxu0 0.0
        %663 = vmatprep.subr.mxu0 0.0
        %664 = vmatpush1.msra.mxu0 0.0
        %665 = vmatprep.subr.mxu0 0.0
        %666 = vmatpush1.msra.mxu0 0.0
        %667 = vmatprep.subr.mxu0 0.0
        %668 = vmatpush1.msra.mxu0 0.0
        %669 = vmatprep.subr.mxu0 0.0
        %670 = vmatpush1.msra.mxu0 0.0
        %671 = vmatprep.subr.mxu0 0.0
        %672 = vmatpush1.msra.mxu0 0.0
        %673 = vmatprep.subr.mxu0 0.0
        %674 = vmatpush1.msra.mxu0 0.0
        %675 = vmatprep.subr.mxu0 0.0
        %676 = vmatpush1.msra.mxu0 0.0
        %677 = vmatprep.subr.mxu0 0.0
        %678 = vmatpush1.msra.mxu0 0.0
        %679 = vmatprep.subr.mxu0 0.0
        %680 = vmatpush1.msra.mxu0 0.0
        %681 = vmatprep.subr.mxu0 0.0
        %682 = vmatpush1.msra.mxu0 0.0
        %683 = vmatprep.subr.mxu0 0.0
        %684 = vmatpush1.msra.mxu0 0.0
        %685 = vmatprep.subr.mxu0 0.0
        %686 = vmatpush1.msra.mxu0 0.0
        %687 = vmatprep.subr.mxu0 0.0
        %688 = vmatpush1.msra.mxu0 0.0
        %689 = vmatprep.subr.mxu0 0.0
        %690 = vmatpush1.msra.mxu0 0.0
        %691 = vmatprep.subr.mxu0 0.0
        %692 = vmatpush1.msra.mxu0 0.0
        %693 = vmatprep.subr.mxu0 0.0
        %694 = vmatpush1.msra.mxu0 0.0
        %695 = vmatprep.mubr.f32.mxu0 0.0
        %696 = vmatmul.mubr.f32.gmra.mrb[0].mxu0 %v260
        %v697 = vpop.f32.mrb[0].mxu0
        %v698 = vadd.f32 0.0, %v697
        %v699 = vpop.f32.mrb[0].mxu0
        %700 = vdwg.mxu0
        %v702 = vsel %vm262, %v246, 0
        %704 = vmatprep.subr.mxu0 0.0
        %705 = vmatpush1.msra.mxu0 %v702
        %706 = vmatprep.subr.mxu0 0.0
        %707 = vmatpush1.msra.mxu0 0.0
        %708 = vmatprep.subr.mxu0 0.0
        %709 = vmatpush1.msra.mxu0 0.0
        %710 = vmatprep.subr.mxu0 0.0
        %711 = vmatpush1.msra.mxu0 0.0
        %712 = vmatprep.subr.mxu0 0.0
        %713 = vmatpush1.msra.mxu0 0.0
        %714 = vmatprep.subr.mxu0 0.0
        %715 = vmatpush1.msra.mxu0 0.0
        %716 = vmatprep.subr.mxu0 0.0
        %717 = vmatpush1.msra.mxu0 0.0
        %718 = vmatprep.subr.mxu0 0.0
        %719 = vmatpush1.msra.mxu0 0.0
        %720 = vmatprep.subr.mxu0 0.0
        %721 = vmatpush1.msra.mxu0 0.0
        %722 = vmatprep.subr.mxu0 0.0
        %723 = vmatpush1.msra.mxu0 0.0
        %724 = vmatprep.subr.mxu0 0.0
        %725 = vmatpush1.msra.mxu0 0.0
        %726 = vmatprep.subr.mxu0 0.0
        %727 = vmatpush1.msra.mxu0 0.0
        %728 = vmatprep.subr.mxu0 0.0
        %729 = vmatpush1.msra.mxu0 0.0
        %730 = vmatprep.subr.mxu0 0.0
        %731 = vmatpush1.msra.mxu0 0.0
        %732 = vmatprep.subr.mxu0 0.0
        %733 = vmatpush1.msra.mxu0 0.0
        %734 = vmatprep.subr.mxu0 0.0
        %735 = vmatpush1.msra.mxu0 0.0
        %736 = vmatprep.subr.mxu0 0.0
        %737 = vmatpush1.msra.mxu0 0.0
        %738 = vmatprep.subr.mxu0 0.0
        %739 = vmatpush1.msra.mxu0 0.0
        %740 = vmatprep.subr.mxu0 0.0
        %741 = vmatpush1.msra.mxu0 0.0
        %742 = vmatprep.subr.mxu0 0.0
        %743 = vmatpush1.msra.mxu0 0.0
        %744 = vmatprep.subr.mxu0 0.0
        %745 = vmatpush1.msra.mxu0 0.0
        %746 = vmatprep.subr.mxu0 0.0
        %747 = vmatpush1.msra.mxu0 0.0
        %748 = vmatprep.subr.mxu0 0.0
        %749 = vmatpush1.msra.mxu0 0.0
        %750 = vmatprep.subr.mxu0 0.0
        %751 = vmatpush1.msra.mxu0 0.0
        %752 = vmatprep.subr.mxu0 0.0
        %753 = vmatpush1.msra.mxu0 0.0
        %754 = vmatprep.subr.mxu0 0.0
        %755 = vmatpush1.msra.mxu0 0.0
        %756 = vmatprep.subr.mxu0 0.0
        %757 = vmatpush1.msra.mxu0 0.0
        %758 = vmatprep.subr.mxu0 0.0
        %759 = vmatpush1.msra.mxu0 0.0
        %760 = vmatprep.subr.mxu0 0.0
        %761 = vmatpush1.msra.mxu0 0.0
        %762 = vmatprep.subr.mxu0 0.0
        %763 = vmatpush1.msra.mxu0 0.0
        %764 = vmatprep.subr.mxu0 0.0
        %765 = vmatpush1.msra.mxu0 0.0
        %766 = vmatprep.subr.mxu0 0.0
        %767 = vmatpush1.msra.mxu0 0.0
        %768 = vmatprep.mubr.f32.mxu0 0.0
        %769 = vmatmul.mubr.f32.gmra.mrb[0].mxu0 %v260
        %v770 = vpop.f32.mrb[0].mxu0
        %v771 = vadd.f32 0.0, %v770
        %v772 = vpop.f32.mrb[0].mxu0
        %773 = vdwg.mxu0
        %v775 = vsel %vm262, %v247, 0
        %777 = vmatprep.subr.mxu0 0.0
        %778 = vmatpush1.msra.mxu0 %v775
        %779 = vmatprep.subr.mxu0 0.0
        %780 = vmatpush1.msra.mxu0 0.0
        %781 = vmatprep.subr.mxu0 0.0
        %782 = vmatpush1.msra.mxu0 0.0
        %783 = vmatprep.subr.mxu0 0.0
        %784 = vmatpush1.msra.mxu0 0.0
        %785 = vmatprep.subr.mxu0 0.0
        %786 = vmatpush1.msra.mxu0 0.0
        %787 = vmatprep.subr.mxu0 0.0
        %788 = vmatpush1.msra.mxu0 0.0
        %789 = vmatprep.subr.mxu0 0.0
        %790 = vmatpush1.msra.mxu0 0.0
        %791 = vmatprep.subr.mxu0 0.0
        %792 = vmatpush1.msra.mxu0 0.0
        %793 = vmatprep.subr.mxu0 0.0
        %794 = vmatpush1.msra.mxu0 0.0
        %795 = vmatprep.subr.mxu0 0.0
        %796 = vmatpush1.msra.mxu0 0.0
        %797 = vmatprep.subr.mxu0 0.0
        %798 = vmatpush1.msra.mxu0 0.0
        %799 = vmatprep.subr.mxu0 0.0
        %800 = vmatpush1.msra.mxu0 0.0
        %801 = vmatprep.subr.mxu0 0.0
        %802 = vmatpush1.msra.mxu0 0.0
        %803 = vmatprep.subr.mxu0 0.0
        %804 = vmatpush1.msra.mxu0 0.0
        %805 = vmatprep.subr.mxu0 0.0
        %806 = vmatpush1.msra.mxu0 0.0
        %807 = vmatprep.subr.mxu0 0.0
        %808 = vmatpush1.msra.mxu0 0.0
        %809 = vmatprep.subr.mxu0 0.0
        %810 = vmatpush1.msra.mxu0 0.0
        %811 = vmatprep.subr.mxu0 0.0
        %812 = vmatpush1.msra.mxu0 0.0
        %813 = vmatprep.subr.mxu0 0.0
        %814 = vmatpush1.msra.mxu0 0.0
        %815 = vmatprep.subr.mxu0 0.0
        %816 = vmatpush1.msra.mxu0 0.0
        %817 = vmatprep.subr.mxu0 0.0
        %818 = vmatpush1.msra.mxu0 0.0
        %819 = vmatprep.subr.mxu0 0.0
        %820 = vmatpush1.msra.mxu0 0.0
        %821 = vmatprep.subr.mxu0 0.0
        %822 = vmatpush1.msra.mxu0 0.0
        %823 = vmatprep.subr.mxu0 0.0
        %824 = vmatpush1.msra.mxu0 0.0
        %825 = vmatprep.subr.mxu0 0.0
        %826 = vmatpush1.msra.mxu0 0.0
        %827 = vmatprep.subr.mxu0 0.0
        %828 = vmatpush1.msra.mxu0 0.0
        %829 = vmatprep.subr.mxu0 0.0
        %830 = vmatpush1.msra.mxu0 0.0
        %831 = vmatprep.subr.mxu0 0.0
        %832 = vmatpush1.msra.mxu0 0.0
        %833 = vmatprep.subr.mxu0 0.0
        %834 = vmatpush1.msra.mxu0 0.0
        %835 = vmatprep.subr.mxu0 0.0
        %836 = vmatpush1.msra.mxu0 0.0
        %837 = vmatprep.subr.mxu0 0.0
        %838 = vmatpush1.msra.mxu0 0.0
        %839 = vmatprep.subr.mxu0 0.0
        %840 = vmatpush1.msra.mxu0 0.0
        %841 = vmatprep.mubr.f32.mxu0 0.0
        %842 = vmatmul.mubr.f32.gmra.mrb[0].mxu0 %v260
        %v843 = vpop.f32.mrb[0].mxu0
        %v844 = vadd.f32 0.0, %v843
        %v845 = vpop.f32.mrb[0].mxu0
        %846 = vdwg.mxu0
        %v848 = vsel %vm262, %v248, 0
        %850 = vmatprep.subr.mxu0 0.0
        %851 = vmatpush1.msra.mxu0 %v848
        %852 = vmatprep.subr.mxu0 0.0
        %853 = vmatpush1.msra.mxu0 0.0
        %854 = vmatprep.subr.mxu0 0.0
        %855 = vmatpush1.msra.mxu0 0.0
        %856 = vmatprep.subr.mxu0 0.0
        %857 = vmatpush1.msra.mxu0 0.0
        %858 = vmatprep.subr.mxu0 0.0
        %859 = vmatpush1.msra.mxu0 0.0
        %860 = vmatprep.subr.mxu0 0.0
        %861 = vmatpush1.msra.mxu0 0.0
        %862 = vmatprep.subr.mxu0 0.0
        %863 = vmatpush1.msra.mxu0 0.0
        %864 = vmatprep.subr.mxu0 0.0
        %865 = vmatpush1.msra.mxu0 0.0
        %866 = vmatprep.subr.mxu0 0.0
        %867 = vmatpush1.msra.mxu0 0.0
        %868 = vmatprep.subr.mxu0 0.0
        %869 = vmatpush1.msra.mxu0 0.0
        %870 = vmatprep.subr.mxu0 0.0
        %871 = vmatpush1.msra.mxu0 0.0
        %872 = vmatprep.subr.mxu0 0.0
        %873 = vmatpush1.msra.mxu0 0.0
        %874 = vmatprep.subr.mxu0 0.0
        %875 = vmatpush1.msra.mxu0 0.0
        %876 = vmatprep.subr.mxu0 0.0
        %877 = vmatpush1.msra.mxu0 0.0
        %878 = vmatprep.subr.mxu0 0.0
        %879 = vmatpush1.msra.mxu0 0.0
        %880 = vmatprep.subr.mxu0 0.0
        %881 = vmatpush1.msra.mxu0 0.0
        %882 = vmatprep.subr.mxu0 0.0
        %883 = vmatpush1.msra.mxu0 0.0
        %884 = vmatprep.subr.mxu0 0.0
        %885 = vmatpush1.msra.mxu0 0.0
        %886 = vmatprep.subr.mxu0 0.0
        %887 = vmatpush1.msra.mxu0 0.0
        %888 = vmatprep.subr.mxu0 0.0
        %889 = vmatpush1.msra.mxu0 0.0
        %890 = vmatprep.subr.mxu0 0.0
        %891 = vmatpush1.msra.mxu0 0.0
        %892 = vmatprep.subr.mxu0 0.0
        %893 = vmatpush1.msra.mxu0 0.0
        %894 = vmatprep.subr.mxu0 0.0
        %895 = vmatpush1.msra.mxu0 0.0
        %896 = vmatprep.subr.mxu0 0.0
        %897 = vmatpush1.msra.mxu0 0.0
        %898 = vmatprep.subr.mxu0 0.0
        %899 = vmatpush1.msra.mxu0 0.0
        %900 = vmatprep.subr.mxu0 0.0
        %901 = vmatpush1.msra.mxu0 0.0
        %902 = vmatprep.subr.mxu0 0.0
        %903 = vmatpush1.msra.mxu0 0.0
        %904 = vmatprep.subr.mxu0 0.0
        %905 = vmatpush1.msra.mxu0 0.0
        %906 = vmatprep.subr.mxu0 0.0
        %907 = vmatpush1.msra.mxu0 0.0
        %908 = vmatprep.subr.mxu0 0.0
        %909 = vmatpush1.msra.mxu0 0.0
        %910 = vmatprep.subr.mxu0 0.0
        %911 = vmatpush1.msra.mxu0 0.0
        %912 = vmatprep.subr.mxu0 0.0
        %913 = vmatpush1.msra.mxu0 0.0
        %914 = vmatprep.mubr.f32.mxu0 0.0
        %915 = vmatmul.mubr.f32.gmra.mrb[0].mxu0 %v260
        %v916 = vpop.f32.mrb[0].mxu0
        %v917 = vadd.f32 0.0, %v916
        %v918 = vpop.f32.mrb[0].mxu0
        %919 = vdwg.mxu0
        %v921 = vsel %vm262, %v249, 0
        %923 = vmatprep.subr.mxu0 0.0
        %924 = vmatpush1.msra.mxu0 %v921
        %925 = vmatprep.subr.mxu0 0.0
        %926 = vmatpush1.msra.mxu0 0.0
        %927 = vmatprep.subr.mxu0 0.0
        %928 = vmatpush1.msra.mxu0 0.0
        %929 = vmatprep.subr.mxu0 0.0
        %930 = vmatpush1.msra.mxu0 0.0
        %931 = vmatprep.subr.mxu0 0.0
        %932 = vmatpush1.msra.mxu0 0.0
        %933 = vmatprep.subr.mxu0 0.0
        %934 = vmatpush1.msra.mxu0 0.0
        %935 = vmatprep.subr.mxu0 0.0
        %936 = vmatpush1.msra.mxu0 0.0
        %937 = vmatprep.subr.mxu0 0.0
        %938 = vmatpush1.msra.mxu0 0.0
        %939 = vmatprep.subr.mxu0 0.0
        %940 = vmatpush1.msra.mxu0 0.0
        %941 = vmatprep.subr.mxu0 0.0
        %942 = vmatpush1.msra.mxu0 0.0
        %943 = vmatprep.subr.mxu0 0.0
        %944 = vmatpush1.msra.mxu0 0.0
        %945 = vmatprep.subr.mxu0 0.0
        %946 = vmatpush1.msra.mxu0 0.0
        %947 = vmatprep.subr.mxu0 0.0
        %948 = vmatpush1.msra.mxu0 0.0
        %949 = vmatprep.subr.mxu0 0.0
        %950 = vmatpush1.msra.mxu0 0.0
        %951 = vmatprep.subr.mxu0 0.0
        %952 = vmatpush1.msra.mxu0 0.0
        %953 = vmatprep.subr.mxu0 0.0
        %954 = vmatpush1.msra.mxu0 0.0
        %955 = vmatprep.subr.mxu0 0.0
        %956 = vmatpush1.msra.mxu0 0.0
        %957 = vmatprep.subr.mxu0 0.0
        %958 = vmatpush1.msra.mxu0 0.0
        %959 = vmatprep.subr.mxu0 0.0
        %960 = vmatpush1.msra.mxu0 0.0
        %961 = vmatprep.subr.mxu0 0.0
        %962 = vmatpush1.msra.mxu0 0.0
        %963 = vmatprep.subr.mxu0 0.0
        %964 = vmatpush1.msra.mxu0 0.0
        %965 = vmatprep.subr.mxu0 0.0
        %966 = vmatpush1.msra.mxu0 0.0
        %967 = vmatprep.subr.mxu0 0.0
        %968 = vmatpush1.msra.mxu0 0.0
        %969 = vmatprep.subr.mxu0 0.0
        %970 = vmatpush1.msra.mxu0 0.0
        %971 = vmatprep.subr.mxu0 0.0
        %972 = vmatpush1.msra.mxu0 0.0
        %973 = vmatprep.subr.mxu0 0.0
        %974 = vmatpush1.msra.mxu0 0.0
        %975 = vmatprep.subr.mxu0 0.0
        %976 = vmatpush1.msra.mxu0 0.0
        %977 = vmatprep.subr.mxu0 0.0
        %978 = vmatpush1.msra.mxu0 0.0
        %979 = vmatprep.subr.mxu0 0.0
        %980 = vmatpush1.msra.mxu0 0.0
        %981 = vmatprep.subr.mxu0 0.0
        %982 = vmatpush1.msra.mxu0 0.0
        %983 = vmatprep.subr.mxu0 0.0
        %984 = vmatpush1.msra.mxu0 0.0
        %985 = vmatprep.subr.mxu0 0.0
        %986 = vmatpush1.msra.mxu0 0.0
        %987 = vmatprep.mubr.f32.mxu0 0.0
        %988 = vmatmul.mubr.f32.gmra.mrb[0].mxu0 %v260
        %v989 = vpop.f32.mrb[0].mxu0
        %v990 = vadd.f32 0.0, %v989
        %v991 = vpop.f32.mrb[0].mxu0
        %992 = vdwg.mxu0
        %v994 = vsel %vm262, %v250, 0
        %996 = vmatprep.subr.mxu0 0.0
        %997 = vmatpush1.msra.mxu0 %v994
        %998 = vmatprep.subr.mxu0 0.0
        %999 = vmatpush1.msra.mxu0 0.0
        %1000 = vmatprep.subr.mxu0 0.0
        %1001 = vmatpush1.msra.mxu0 0.0
        %1002 = vmatprep.subr.mxu0 0.0
        %1003 = vmatpush1.msra.mxu0 0.0
        %1004 = vmatprep.subr.mxu0 0.0
        %1005 = vmatpush1.msra.mxu0 0.0
        %1006 = vmatprep.subr.mxu0 0.0
        %1007 = vmatpush1.msra.mxu0 0.0
        %1008 = vmatprep.subr.mxu0 0.0
        %1009 = vmatpush1.msra.mxu0 0.0
        %1010 = vmatprep.subr.mxu0 0.0
        %1011 = vmatpush1.msra.mxu0 0.0
        %1012 = vmatprep.subr.mxu0 0.0
        %1013 = vmatpush1.msra.mxu0 0.0
        %1014 = vmatprep.subr.mxu0 0.0
        %1015 = vmatpush1.msra.mxu0 0.0
        %1016 = vmatprep.subr.mxu0 0.0
        %1017 = vmatpush1.msra.mxu0 0.0
        %1018 = vmatprep.subr.mxu0 0.0
        %1019 = vmatpush1.msra.mxu0 0.0
        %1020 = vmatprep.subr.mxu0 0.0
        %1021 = vmatpush1.msra.mxu0 0.0
        %1022 = vmatprep.subr.mxu0 0.0
        %1023 = vmatpush1.msra.mxu0 0.0
        %1024 = vmatprep.subr.mxu0 0.0
        %1025 = vmatpush1.msra.mxu0 0.0
        %1026 = vmatprep.subr.mxu0 0.0
        %1027 = vmatpush1.msra.mxu0 0.0
        %1028 = vmatprep.subr.mxu0 0.0
        %1029 = vmatpush1.msra.mxu0 0.0
        %1030 = vmatprep.subr.mxu0 0.0
        %1031 = vmatpush1.msra.mxu0 0.0
        %1032 = vmatprep.subr.mxu0 0.0
        %1033 = vmatpush1.msra.mxu0 0.0
        %1034 = vmatprep.subr.mxu0 0.0
        %1035 = vmatpush1.msra.mxu0 0.0
        %1036 = vmatprep.subr.mxu0 0.0
        %1037 = vmatpush1.msra.mxu0 0.0
        %1038 = vmatprep.subr.mxu0 0.0
        %1039 = vmatpush1.msra.mxu0 0.0
        %1040 = vmatprep.subr.mxu0 0.0
        %1041 = vmatpush1.msra.mxu0 0.0
        %1042 = vmatprep.subr.mxu0 0.0
        %1043 = vmatpush1.msra.mxu0 0.0
        %1044 = vmatprep.subr.mxu0 0.0
        %1045 = vmatpush1.msra.mxu0 0.0
        %1046 = vmatprep.subr.mxu0 0.0
        %1047 = vmatpush1.msra.mxu0 0.0
        %1048 = vmatprep.subr.mxu0 0.0
        %1049 = vmatpush1.msra.mxu0 0.0
        %1050 = vmatprep.subr.mxu0 0.0
        %1051 = vmatpush1.msra.mxu0 0.0
        %1052 = vmatprep.subr.mxu0 0.0
        %1053 = vmatpush1.msra.mxu0 0.0
        %1054 = vmatprep.subr.mxu0 0.0
        %1055 = vmatpush1.msra.mxu0 0.0
        %1056 = vmatprep.subr.mxu0 0.0
        %1057 = vmatpush1.msra.mxu0 0.0
        %1058 = vmatprep.subr.mxu0 0.0
        %1059 = vmatpush1.msra.mxu0 0.0
        %1060 = vmatprep.mubr.f32.mxu0 0.0
        %1061 = vmatmul.mubr.f32.gmra.mrb[0].mxu0 %v260
        %v1062 = vpop.f32.mrb[0].mxu0
        %v1063 = vadd.f32 0.0, %v1062
        %v1064 = vpop.f32.mrb[0].mxu0
        %1065 = vdwg.mxu0
        %v1067 = vsel %vm262, %v251, 0
        %1069 = vmatprep.subr.mxu0 0.0
        %1070 = vmatpush1.msra.mxu0 %v1067
        %1071 = vmatprep.subr.mxu0 0.0
        %1072 = vmatpush1.msra.mxu0 0.0
        %1073 = vmatprep.subr.mxu0 0.0
        %1074 = vmatpush1.msra.mxu0 0.0
        %1075 = vmatprep.subr.mxu0 0.0
        %1076 = vmatpush1.msra.mxu0 0.0
        %1077 = vmatprep.subr.mxu0 0.0
        %1078 = vmatpush1.msra.mxu0 0.0
        %1079 = vmatprep.subr.mxu0 0.0
        %1080 = vmatpush1.msra.mxu0 0.0
        %1081 = vmatprep.subr.mxu0 0.0
        %1082 = vmatpush1.msra.mxu0 0.0
        %1083 = vmatprep.subr.mxu0 0.0
        %1084 = vmatpush1.msra.mxu0 0.0
        %1085 = vmatprep.subr.mxu0 0.0
        %1086 = vmatpush1.msra.mxu0 0.0
        %1087 = vmatprep.subr.mxu0 0.0
        %1088 = vmatpush1.msra.mxu0 0.0
        %1089 = vmatprep.subr.mxu0 0.0
        %1090 = vmatpush1.msra.mxu0 0.0
        %1091 = vmatprep.subr.mxu0 0.0
        %1092 = vmatpush1.msra.mxu0 0.0
        %1093 = vmatprep.subr.mxu0 0.0
        %1094 = vmatpush1.msra.mxu0 0.0
        %1095 = vmatprep.subr.mxu0 0.0
        %1096 = vmatpush1.msra.mxu0 0.0
        %1097 = vmatprep.subr.mxu0 0.0
        %1098 = vmatpush1.msra.mxu0 0.0
        %1099 = vmatprep.subr.mxu0 0.0
        %1100 = vmatpush1.msra.mxu0 0.0
        %1101 = vmatprep.subr.mxu0 0.0
        %1102 = vmatpush1.msra.mxu0 0.0
        %1103 = vmatprep.subr.mxu0 0.0
        %1104 = vmatpush1.msra.mxu0 0.0
        %1105 = vmatprep.subr.mxu0 0.0
        %1106 = vmatpush1.msra.mxu0 0.0
        %1107 = vmatprep.subr.mxu0 0.0
        %1108 = vmatpush1.msra.mxu0 0.0
        %1109 = vmatprep.subr.mxu0 0.0
        %1110 = vmatpush1.msra.mxu0 0.0
        %1111 = vmatprep.subr.mxu0 0.0
        %1112 = vmatpush1.msra.mxu0 0.0
        %1113 = vmatprep.subr.mxu0 0.0
        %1114 = vmatpush1.msra.mxu0 0.0
        %1115 = vmatprep.subr.mxu0 0.0
        %1116 = vmatpush1.msra.mxu0 0.0
        %1117 = vmatprep.subr.mxu0 0.0
        %1118 = vmatpush1.msra.mxu0 0.0
        %1119 = vmatprep.subr.mxu0 0.0
        %1120 = vmatpush1.msra.mxu0 0.0
        %1121 = vmatprep.subr.mxu0 0.0
        %1122 = vmatpush1.msra.mxu0 0.0
        %1123 = vmatprep.subr.mxu0 0.0
        %1124 = vmatpush1.msra.mxu0 0.0
        %1125 = vmatprep.subr.mxu0 0.0
        %1126 = vmatpush1.msra.mxu0 0.0
        %1127 = vmatprep.subr.mxu0 0.0
        %1128 = vmatpush1.msra.mxu0 0.0
        %1129 = vmatprep.subr.mxu0 0.0
        %1130 = vmatpush1.msra.mxu0 0.0
        %1131 = vmatprep.subr.mxu0 0.0
        %1132 = vmatpush1.msra.mxu0 0.0
        %1133 = vmatprep.mubr.f32.mxu0 0.0
        %1134 = vmatmul.mubr.f32.gmra.mrb[0].mxu0 %v260
        %v1135 = vpop.f32.mrb[0].mxu0
        %v1136 = vadd.f32 0.0, %v1135
        %v1137 = vpop.f32.mrb[0].mxu0
        %1138 = vdwg.mxu0
        %v1140 = vsel %vm262, %v252, 0
        %1142 = vmatprep.subr.mxu0 0.0
        %1143 = vmatpush1.msra.mxu0 %v1140
        %1144 = vmatprep.subr.mxu0 0.0
        %1145 = vmatpush1.msra.mxu0 0.0
        %1146 = vmatprep.subr.mxu0 0.0
        %1147 = vmatpush1.msra.mxu0 0.0
        %1148 = vmatprep.subr.mxu0 0.0
        %1149 = vmatpush1.msra.mxu0 0.0
        %1150 = vmatprep.subr.mxu0 0.0
        %1151 = vmatpush1.msra.mxu0 0.0
        %1152 = vmatprep.subr.mxu0 0.0
        %1153 = vmatpush1.msra.mxu0 0.0
        %1154 = vmatprep.subr.mxu0 0.0
        %1155 = vmatpush1.msra.mxu0 0.0
        %1156 = vmatprep.subr.mxu0 0.0
        %1157 = vmatpush1.msra.mxu0 0.0
        %1158 = vmatprep.subr.mxu0 0.0
        %1159 = vmatpush1.msra.mxu0 0.0
        %1160 = vmatprep.subr.mxu0 0.0
        %1161 = vmatpush1.msra.mxu0 0.0
        %1162 = vmatprep.subr.mxu0 0.0
        %1163 = vmatpush1.msra.mxu0 0.0
        %1164 = vmatprep.subr.mxu0 0.0
        %1165 = vmatpush1.msra.mxu0 0.0
        %1166 = vmatprep.subr.mxu0 0.0
        %1167 = vmatpush1.msra.mxu0 0.0
        %1168 = vmatprep.subr.mxu0 0.0
        %1169 = vmatpush1.msra.mxu0 0.0
        %1170 = vmatprep.subr.mxu0 0.0
        %1171 = vmatpush1.msra.mxu0 0.0
        %1172 = vmatprep.subr.mxu0 0.0
        %1173 = vmatpush1.msra.mxu0 0.0
        %1174 = vmatprep.subr.mxu0 0.0
        %1175 = vmatpush1.msra.mxu0 0.0
        %1176 = vmatprep.subr.mxu0 0.0
        %1177 = vmatpush1.msra.mxu0 0.0
        %1178 = vmatprep.subr.mxu0 0.0
        %1179 = vmatpush1.msra.mxu0 0.0
        %1180 = vmatprep.subr.mxu0 0.0
        %1181 = vmatpush1.msra.mxu0 0.0
        %1182 = vmatprep.subr.mxu0 0.0
        %1183 = vmatpush1.msra.mxu0 0.0
        %1184 = vmatprep.subr.mxu0 0.0
        %1185 = vmatpush1.msra.mxu0 0.0
        %1186 = vmatprep.subr.mxu0 0.0
        %1187 = vmatpush1.msra.mxu0 0.0
        %1188 = vmatprep.subr.mxu0 0.0
        %1189 = vmatpush1.msra.mxu0 0.0
        %1190 = vmatprep.subr.mxu0 0.0
        %1191 = vmatpush1.msra.mxu0 0.0
        %1192 = vmatprep.subr.mxu0 0.0
        %1193 = vmatpush1.msra.mxu0 0.0
        %1194 = vmatprep.subr.mxu0 0.0
        %1195 = vmatpush1.msra.mxu0 0.0
        %1196 = vmatprep.subr.mxu0 0.0
        %1197 = vmatpush1.msra.mxu0 0.0
        %1198 = vmatprep.subr.mxu0 0.0
        %1199 = vmatpush1.msra.mxu0 0.0
        %1200 = vmatprep.subr.mxu0 0.0
        %1201 = vmatpush1.msra.mxu0 0.0
        %1202 = vmatprep.subr.mxu0 0.0
        %1203 = vmatpush1.msra.mxu0 0.0
        %1204 = vmatprep.subr.mxu0 0.0
        %1205 = vmatpush1.msra.mxu0 0.0
        %1206 = vmatprep.mubr.f32.mxu0 0.0
        %1207 = vmatmul.mubr.f32.gmra.mrb[0].mxu0 %v260
        %v1208 = vpop.f32.mrb[0].mxu0
        %v1209 = vadd.f32 0.0, %v1208
        %v1210 = vpop.f32.mrb[0].mxu0
        %1211 = vdwg.mxu0
        %v1213 = vsel %vm262, %v253, 0
        %1215 = vmatprep.subr.mxu0 0.0
        %1216 = vmatpush1.msra.mxu0 %v1213
        %1217 = vmatprep.subr.mxu0 0.0
        %1218 = vmatpush1.msra.mxu0 0.0
        %1219 = vmatprep.subr.mxu0 0.0
        %1220 = vmatpush1.msra.mxu0 0.0
        %1221 = vmatprep.subr.mxu0 0.0
        %1222 = vmatpush1.msra.mxu0 0.0
        %1223 = vmatprep.subr.mxu0 0.0
        %1224 = vmatpush1.msra.mxu0 0.0
        %1225 = vmatprep.subr.mxu0 0.0
        %1226 = vmatpush1.msra.mxu0 0.0
        %1227 = vmatprep.subr.mxu0 0.0
        %1228 = vmatpush1.msra.mxu0 0.0
        %1229 = vmatprep.subr.mxu0 0.0
        %1230 = vmatpush1.msra.mxu0 0.0
        %1231 = vmatprep.subr.mxu0 0.0
        %1232 = vmatpush1.msra.mxu0 0.0
        %1233 = vmatprep.subr.mxu0 0.0
        %1234 = vmatpush1.msra.mxu0 0.0
        %1235 = vmatprep.subr.mxu0 0.0
        %1236 = vmatpush1.msra.mxu0 0.0
        %1237 = vmatprep.subr.mxu0 0.0
        %1238 = vmatpush1.msra.mxu0 0.0
        %1239 = vmatprep.subr.mxu0 0.0
        %1240 = vmatpush1.msra.mxu0 0.0
        %1241 = vmatprep.subr.mxu0 0.0
        %1242 = vmatpush1.msra.mxu0 0.0
        %1243 = vmatprep.subr.mxu0 0.0
        %1244 = vmatpush1.msra.mxu0 0.0
        %1245 = vmatprep.subr.mxu0 0.0
        %1246 = vmatpush1.msra.mxu0 0.0
        %1247 = vmatprep.subr.mxu0 0.0
        %1248 = vmatpush1.msra.mxu0 0.0
        %1249 = vmatprep.subr.mxu0 0.0
        %1250 = vmatpush1.msra.mxu0 0.0
        %1251 = vmatprep.subr.mxu0 0.0
        %1252 = vmatpush1.msra.mxu0 0.0
        %1253 = vmatprep.subr.mxu0 0.0
        %1254 = vmatpush1.msra.mxu0 0.0
        %1255 = vmatprep.subr.mxu0 0.0
        %1256 = vmatpush1.msra.mxu0 0.0
        %1257 = vmatprep.subr.mxu0 0.0
        %1258 = vmatpush1.msra.mxu0 0.0
        %1259 = vmatprep.subr.mxu0 0.0
        %1260 = vmatpush1.msra.mxu0 0.0
        %1261 = vmatprep.subr.mxu0 0.0
        %1262 = vmatpush1.msra.mxu0 0.0
        %1263 = vmatprep.subr.mxu0 0.0
        %1264 = vmatpush1.msra.mxu0 0.0
        %1265 = vmatprep.subr.mxu0 0.0
        %1266 = vmatpush1.msra.mxu0 0.0
        %1267 = vmatprep.subr.mxu0 0.0
        %1268 = vmatpush1.msra.mxu0 0.0
        %1269 = vmatprep.subr.mxu0 0.0
        %1270 = vmatpush1.msra.mxu0 0.0
        %1271 = vmatprep.subr.mxu0 0.0
        %1272 = vmatpush1.msra.mxu0 0.0
        %1273 = vmatprep.subr.mxu0 0.0
        %1274 = vmatpush1.msra.mxu0 0.0
        %1275 = vmatprep.subr.mxu0 0.0
        %1276 = vmatpush1.msra.mxu0 0.0
        %1277 = vmatprep.subr.mxu0 0.0
        %1278 = vmatpush1.msra.mxu0 0.0
        %1279 = vmatprep.mubr.f32.mxu0 0.0
        %1280 = vmatmul.mubr.f32.gmra.mrb[0].mxu0 %v260
        %v1281 = vpop.f32.mrb[0].mxu0
        %v1282 = vadd.f32 0.0, %v1281
        %v1283 = vpop.f32.mrb[0].mxu0
        %1284 = vdwg.mxu0
        %v1286 = vsel %vm262, %v254, 0
        %1288 = vmatprep.subr.mxu0 0.0
        %1289 = vmatpush1.msra.mxu0 %v1286
        %1290 = vmatprep.subr.mxu0 0.0
        %1291 = vmatpush1.msra.mxu0 0.0
        %1292 = vmatprep.subr.mxu0 0.0
        %1293 = vmatpush1.msra.mxu0 0.0
        %1294 = vmatprep.subr.mxu0 0.0
        %1295 = vmatpush1.msra.mxu0 0.0
        %1296 = vmatprep.subr.mxu0 0.0
        %1297 = vmatpush1.msra.mxu0 0.0
        %1298 = vmatprep.subr.mxu0 0.0
        %1299 = vmatpush1.msra.mxu0 0.0
        %1300 = vmatprep.subr.mxu0 0.0
        %1301 = vmatpush1.msra.mxu0 0.0
        %1302 = vmatprep.subr.mxu0 0.0
        %1303 = vmatpush1.msra.mxu0 0.0
        %1304 = vmatprep.subr.mxu0 0.0
        %1305 = vmatpush1.msra.mxu0 0.0
        %1306 = vmatprep.subr.mxu0 0.0
        %1307 = vmatpush1.msra.mxu0 0.0
        %1308 = vmatprep.subr.mxu0 0.0
        %1309 = vmatpush1.msra.mxu0 0.0
        %1310 = vmatprep.subr.mxu0 0.0
        %1311 = vmatpush1.msra.mxu0 0.0
        %1312 = vmatprep.subr.mxu0 0.0
        %1313 = vmatpush1.msra.mxu0 0.0
        %1314 = vmatprep.subr.mxu0 0.0
        %1315 = vmatpush1.msra.mxu0 0.0
        %1316 = vmatprep.subr.mxu0 0.0
        %1317 = vmatpush1.msra.mxu0 0.0
        %1318 = vmatprep.subr.mxu0 0.0
        %1319 = vmatpush1.msra.mxu0 0.0
        %1320 = vmatprep.subr.mxu0 0.0
        %1321 = vmatpush1.msra.mxu0 0.0
        %1322 = vmatprep.subr.mxu0 0.0
        %1323 = vmatpush1.msra.mxu0 0.0
        %1324 = vmatprep.subr.mxu0 0.0
        %1325 = vmatpush1.msra.mxu0 0.0
        %1326 = vmatprep.subr.mxu0 0.0
        %1327 = vmatpush1.msra.mxu0 0.0
        %1328 = vmatprep.subr.mxu0 0.0
        %1329 = vmatpush1.msra.mxu0 0.0
        %1330 = vmatprep.subr.mxu0 0.0
        %1331 = vmatpush1.msra.mxu0 0.0
        %1332 = vmatprep.subr.mxu0 0.0
        %1333 = vmatpush1.msra.mxu0 0.0
        %1334 = vmatprep.subr.mxu0 0.0
        %1335 = vmatpush1.msra.mxu0 0.0
        %1336 = vmatprep.subr.mxu0 0.0
        %1337 = vmatpush1.msra.mxu0 0.0
        %1338 = vmatprep.subr.mxu0 0.0
        %1339 = vmatpush1.msra.mxu0 0.0
        %1340 = vmatprep.subr.mxu0 0.0
        %1341 = vmatpush1.msra.mxu0 0.0
        %1342 = vmatprep.subr.mxu0 0.0
        %1343 = vmatpush1.msra.mxu0 0.0
        %1344 = vmatprep.subr.mxu0 0.0
        %1345 = vmatpush1.msra.mxu0 0.0
        %1346 = vmatprep.subr.mxu0 0.0
        %1347 = vmatpush1.msra.mxu0 0.0
        %1348 = vmatprep.subr.mxu0 0.0
        %1349 = vmatpush1.msra.mxu0 0.0
        %1350 = vmatprep.subr.mxu0 0.0
        %1351 = vmatpush1.msra.mxu0 0.0
        %1352 = vmatprep.mubr.f32.mxu0 0.0
        %1353 = vmatmul.mubr.f32.gmra.mrb[0].mxu0 %v260
        %v1354 = vpop.f32.mrb[0].mxu0
        %v1355 = vadd.f32 0.0, %v1354
        %v1356 = vpop.f32.mrb[0].mxu0
        %1357 = vdwg.mxu0
        %v1359 = vsel %vm262, %v255, 0
        %1361 = vmatprep.subr.mxu0 0.0
        %1362 = vmatpush1.msra.mxu0 %v1359
        %1363 = vmatprep.subr.mxu0 0.0
        %1364 = vmatpush1.msra.mxu0 0.0
        %1365 = vmatprep.subr.mxu0 0.0
        %1366 = vmatpush1.msra.mxu0 0.0
        %1367 = vmatprep.subr.mxu0 0.0
        %1368 = vmatpush1.msra.mxu0 0.0
        %1369 = vmatprep.subr.mxu0 0.0
        %1370 = vmatpush1.msra.mxu0 0.0
        %1371 = vmatprep.subr.mxu0 0.0
        %1372 = vmatpush1.msra.mxu0 0.0
        %1373 = vmatprep.subr.mxu0 0.0
        %1374 = vmatpush1.msra.mxu0 0.0
        %1375 = vmatprep.subr.mxu0 0.0
        %1376 = vmatpush1.msra.mxu0 0.0
        %1377 = vmatprep.subr.mxu0 0.0
        %1378 = vmatpush1.msra.mxu0 0.0
        %1379 = vmatprep.subr.mxu0 0.0
        %1380 = vmatpush1.msra.mxu0 0.0
        %1381 = vmatprep.subr.mxu0 0.0
        %1382 = vmatpush1.msra.mxu0 0.0
        %1383 = vmatprep.subr.mxu0 0.0
        %1384 = vmatpush1.msra.mxu0 0.0
        %1385 = vmatprep.subr.mxu0 0.0
        %1386 = vmatpush1.msra.mxu0 0.0
        %1387 = vmatprep.subr.mxu0 0.0
        %1388 = vmatpush1.msra.mxu0 0.0
        %1389 = vmatprep.subr.mxu0 0.0
        %1390 = vmatpush1.msra.mxu0 0.0
        %1391 = vmatprep.subr.mxu0 0.0
        %1392 = vmatpush1.msra.mxu0 0.0
        %1393 = vmatprep.subr.mxu0 0.0
        %1394 = vmatpush1.msra.mxu0 0.0
        %1395 = vmatprep.subr.mxu0 0.0
        %1396 = vmatpush1.msra.mxu0 0.0
        %1397 = vmatprep.subr.mxu0 0.0
        %1398 = vmatpush1.msra.mxu0 0.0
        %1399 = vmatprep.subr.mxu0 0.0
        %1400 = vmatpush1.msra.mxu0 0.0
        %1401 = vmatprep.subr.mxu0 0.0
        %1402 = vmatpush1.msra.mxu0 0.0
        %1403 = vmatprep.subr.mxu0 0.0
        %1404 = vmatpush1.msra.mxu0 0.0
        %1405 = vmatprep.subr.mxu0 0.0
        %1406 = vmatpush1.msra.mxu0 0.0
        %1407 = vmatprep.subr.mxu0 0.0
        %1408 = vmatpush1.msra.mxu0 0.0
        %1409 = vmatprep.subr.mxu0 0.0
        %1410 = vmatpush1.msra.mxu0 0.0
        %1411 = vmatprep.subr.mxu0 0.0
        %1412 = vmatpush1.msra.mxu0 0.0
        %1413 = vmatprep.subr.mxu0 0.0
        %1414 = vmatpush1.msra.mxu0 0.0
        %1415 = vmatprep.subr.mxu0 0.0
        %1416 = vmatpush1.msra.mxu0 0.0
        %1417 = vmatprep.subr.mxu0 0.0
        %1418 = vmatpush1.msra.mxu0 0.0
        %1419 = vmatprep.subr.mxu0 0.0
        %1420 = vmatpush1.msra.mxu0 0.0
        %1421 = vmatprep.subr.mxu0 0.0
        %1422 = vmatpush1.msra.mxu0 0.0
        %1423 = vmatprep.subr.mxu0 0.0
        %1424 = vmatpush1.msra.mxu0 0.0
        %1425 = vmatprep.mubr.f32.mxu0 0.0
        %1426 = vmatmul.mubr.f32.gmra.mrb[0].mxu0 %v260
        %v1427 = vpop.f32.mrb[0].mxu0
        %v1428 = vadd.f32 0.0, %v1427
        %v1429 = vpop.f32.mrb[0].mxu0
        %1430 = vdwg.mxu0
        %v1432 = vsel %vm258, %v333, 0
        %v1435 = vsel %vm262, %v257, 0
        %1437 = vmatprep.subr.mxu0 0.0
        %1438 = vmatpush1.msra.mxu0 %v1435
        %1439 = vmatprep.subr.mxu0 0.0
        %1440 = vmatpush1.msra.mxu0 0.0
        %1441 = vmatprep.subr.mxu0 0.0
        %1442 = vmatpush1.msra.mxu0 0.0
        %1443 = vmatprep.subr.mxu0 0.0
        %1444 = vmatpush1.msra.mxu0 0.0
        %1445 = vmatprep.subr.mxu0 0.0
        %1446 = vmatpush1.msra.mxu0 0.0
        %1447 = vmatprep.subr.mxu0 0.0
        %1448 = vmatpush1.msra.mxu0 0.0
        %1449 = vmatprep.subr.mxu0 0.0
        %1450 = vmatpush1.msra.mxu0 0.0
        %1451 = vmatprep.subr.mxu0 0.0
        %1452 = vmatpush1.msra.mxu0 0.0
        %1453 = vmatprep.subr.mxu0 0.0
        %1454 = vmatpush1.msra.mxu0 0.0
        %1455 = vmatprep.subr.mxu0 0.0
        %1456 = vmatpush1.msra.mxu0 0.0
        %1457 = vmatprep.subr.mxu0 0.0
        %1458 = vmatpush1.msra.mxu0 0.0
        %1459 = vmatprep.subr.mxu0 0.0
        %1460 = vmatpush1.msra.mxu0 0.0
        %1461 = vmatprep.subr.mxu0 0.0
        %1462 = vmatpush1.msra.mxu0 0.0
        %1463 = vmatprep.subr.mxu0 0.0
        %1464 = vmatpush1.msra.mxu0 0.0
        %1465 = vmatprep.subr.mxu0 0.0
        %1466 = vmatpush1.msra.mxu0 0.0
        %1467 = vmatprep.subr.mxu0 0.0
        %1468 = vmatpush1.msra.mxu0 0.0
        %1469 = vmatprep.subr.mxu0 0.0
        %1470 = vmatpush1.msra.mxu0 0.0
        %1471 = vmatprep.subr.mxu0 0.0
        %1472 = vmatpush1.msra.mxu0 0.0
        %1473 = vmatprep.subr.mxu0 0.0
        %1474 = vmatpush1.msra.mxu0 0.0
        %1475 = vmatprep.subr.mxu0 0.0
        %1476 = vmatpush1.msra.mxu0 0.0
        %1477 = vmatprep.subr.mxu0 0.0
        %1478 = vmatpush1.msra.mxu0 0.0
        %1479 = vmatprep.subr.mxu0 0.0
        %1480 = vmatpush1.msra.mxu0 0.0
        %1481 = vmatprep.subr.mxu0 0.0
        %1482 = vmatpush1.msra.mxu0 0.0
        %1483 = vmatprep.subr.mxu0 0.0
        %1484 = vmatpush1.msra.mxu0 0.0
        %1485 = vmatprep.subr.mxu0 0.0
        %1486 = vmatpush1.msra.mxu0 0.0
        %1487 = vmatprep.subr.mxu0 0.0
        %1488 = vmatpush1.msra.mxu0 0.0
        %1489 = vmatprep.subr.mxu0 0.0
        %1490 = vmatpush1.msra.mxu0 0.0
        %1491 = vmatprep.subr.mxu0 0.0
        %1492 = vmatpush1.msra.mxu0 0.0
        %1493 = vmatprep.subr.mxu0 0.0
        %1494 = vmatpush1.msra.mxu0 0.0
        %1495 = vmatprep.subr.mxu0 0.0
        %1496 = vmatpush1.msra.mxu0 0.0
        %1497 = vmatprep.subr.mxu0 0.0
        %1498 = vmatpush1.msra.mxu0 0.0
        %1499 = vmatprep.subr.mxu0 0.0
        %1500 = vmatpush1.msra.mxu0 0.0
        %1501 = vmatprep.mubr.f32.mxu0 0.0
        %1502 = vmatmul.mubr.f32.gmra.mrb[0].mxu0 %v1432
        %v1503 = vpop.f32.mrb[0].mxu0
        %v1504 = vadd.f32 0.0, %v1503
        %v1505 = vpop.f32.mrb[0].mxu0
        %1506 = vdwg.mxu0
        %v1508 = vsel %vm258, %v406, 0
        %1510 = vmatprep.subr.mxu0 0.0
        %1511 = vmatpush1.msra.mxu0 %v1435
        %1512 = vmatprep.subr.mxu0 0.0
        %1513 = vmatpush1.msra.mxu0 0.0
        %1514 = vmatprep.subr.mxu0 0.0
        %1515 = vmatpush1.msra.mxu0 0.0
        %1516 = vmatprep.subr.mxu0 0.0
        %1517 = vmatpush1.msra.mxu0 0.0
        %1518 = vmatprep.subr.mxu0 0.0
        %1519 = vmatpush1.msra.mxu0 0.0
        %1520 = vmatprep.subr.mxu0 0.0
        %1521 = vmatpush1.msra.mxu0 0.0
        %1522 = vmatprep.subr.mxu0 0.0
        %1523 = vmatpush1.msra.mxu0 0.0
        %1524 = vmatprep.subr.mxu0 0.0
        %1525 = vmatpush1.msra.mxu0 0.0
        %1526 = vmatprep.subr.mxu0 0.0
        %1527 = vmatpush1.msra.mxu0 0.0
        %1528 = vmatprep.subr.mxu0 0.0
        %1529 = vmatpush1.msra.mxu0 0.0
        %1530 = vmatprep.subr.mxu0 0.0
        %1531 = vmatpush1.msra.mxu0 0.0
        %1532 = vmatprep.subr.mxu0 0.0
        %1533 = vmatpush1.msra.mxu0 0.0
        %1534 = vmatprep.subr.mxu0 0.0
        %1535 = vmatpush1.msra.mxu0 0.0
        %1536 = vmatprep.subr.mxu0 0.0
        %1537 = vmatpush1.msra.mxu0 0.0
        %1538 = vmatprep.subr.mxu0 0.0
        %1539 = vmatpush1.msra.mxu0 0.0
        %1540 = vmatprep.subr.mxu0 0.0
        %1541 = vmatpush1.msra.mxu0 0.0
        %1542 = vmatprep.subr.mxu0 0.0
        %1543 = vmatpush1.msra.mxu0 0.0
        %1544 = vmatprep.subr.mxu0 0.0
        %1545 = vmatpush1.msra.mxu0 0.0
        %1546 = vmatprep.subr.mxu0 0.0
        %1547 = vmatpush1.msra.mxu0 0.0
        %1548 = vmatprep.subr.mxu0 0.0
        %1549 = vmatpush1.msra.mxu0 0.0
        %1550 = vmatprep.subr.mxu0 0.0
        %1551 = vmatpush1.msra.mxu0 0.0
        %1552 = vmatprep.subr.mxu0 0.0
        %1553 = vmatpush1.msra.mxu0 0.0
        %1554 = vmatprep.subr.mxu0 0.0
        %1555 = vmatpush1.msra.mxu0 0.0
        %1556 = vmatprep.subr.mxu0 0.0
        %1557 = vmatpush1.msra.mxu0 0.0
        %1558 = vmatprep.subr.mxu0 0.0
        %1559 = vmatpush1.msra.mxu0 0.0
        %1560 = vmatprep.subr.mxu0 0.0
        %1561 = vmatpush1.msra.mxu0 0.0
        %1562 = vmatprep.subr.mxu0 0.0
        %1563 = vmatpush1.msra.mxu0 0.0
        %1564 = vmatprep.subr.mxu0 0.0
        %1565 = vmatpush1.msra.mxu0 0.0
        %1566 = vmatprep.subr.mxu0 0.0
        %1567 = vmatpush1.msra.mxu0 0.0
        %1568 = vmatprep.subr.mxu0 0.0
        %1569 = vmatpush1.msra.mxu0 0.0
        %1570 = vmatprep.subr.mxu0 0.0
        %1571 = vmatpush1.msra.mxu0 0.0
        %1572 = vmatprep.subr.mxu0 0.0
        %1573 = vmatpush1.msra.mxu0 0.0
        %1574 = vmatprep.mubr.f32.mxu0 0.0
        %1575 = vmatmul.mubr.f32.gmra.mrb[0].mxu0 %v1508
        %v1576 = vpop.f32.mrb[0].mxu0
        %v1577 = vadd.f32 0.0, %v1576
        %v1578 = vpop.f32.mrb[0].mxu0
        %1579 = vdwg.mxu0
        %v1581 = vsel %vm258, %v479, 0
        %1583 = vmatprep.subr.mxu0 0.0
        %1584 = vmatpush1.msra.mxu0 %v1435
        %1585 = vmatprep.subr.mxu0 0.0
        %1586 = vmatpush1.msra.mxu0 0.0
        %1587 = vmatprep.subr.mxu0 0.0
        %1588 = vmatpush1.msra.mxu0 0.0
        %1589 = vmatprep.subr.mxu0 0.0
        %1590 = vmatpush1.msra.mxu0 0.0
        %1591 = vmatprep.subr.mxu0 0.0
        %1592 = vmatpush1.msra.mxu0 0.0
        %1593 = vmatprep.subr.mxu0 0.0
        %1594 = vmatpush1.msra.mxu0 0.0
        %1595 = vmatprep.subr.mxu0 0.0
        %1596 = vmatpush1.msra.mxu0 0.0
        %1597 = vmatprep.subr.mxu0 0.0
        %1598 = vmatpush1.msra.mxu0 0.0
        %1599 = vmatprep.subr.mxu0 0.0
        %1600 = vmatpush1.msra.mxu0 0.0
        %1601 = vmatprep.subr.mxu0 0.0
        %1602 = vmatpush1.msra.mxu0 0.0
        %1603 = vmatprep.subr.mxu0 0.0
        %1604 = vmatpush1.msra.mxu0 0.0
        %1605 = vmatprep.subr.mxu0 0.0
        %1606 = vmatpush1.msra.mxu0 0.0
        %1607 = vmatprep.subr.mxu0 0.0
        %1608 = vmatpush1.msra.mxu0 0.0
        %1609 = vmatprep.subr.mxu0 0.0
        %1610 = vmatpush1.msra.mxu0 0.0
        %1611 = vmatprep.subr.mxu0 0.0
        %1612 = vmatpush1.msra.mxu0 0.0
        %1613 = vmatprep.subr.mxu0 0.0
        %1614 = vmatpush1.msra.mxu0 0.0
        %1615 = vmatprep.subr.mxu0 0.0
        %1616 = vmatpush1.msra.mxu0 0.0
        %1617 = vmatprep.subr.mxu0 0.0
        %1618 = vmatpush1.msra.mxu0 0.0
        %1619 = vmatprep.subr.mxu0 0.0
        %1620 = vmatpush1.msra.mxu0 0.0
        %1621 = vmatprep.subr.mxu0 0.0
        %1622 = vmatpush1.msra.mxu0 0.0
        %1623 = vmatprep.subr.mxu0 0.0
        %1624 = vmatpush1.msra.mxu0 0.0
        %1625 = vmatprep.subr.mxu0 0.0
        %1626 = vmatpush1.msra.mxu0 0.0
        %1627 = vmatprep.subr.mxu0 0.0
        %1628 = vmatpush1.msra.mxu0 0.0
        %1629 = vmatprep.subr.mxu0 0.0
        %1630 = vmatpush1.msra.mxu0 0.0
        %1631 = vmatprep.subr.mxu0 0.0
        %1632 = vmatpush1.msra.mxu0 0.0
        %1633 = vmatprep.subr.mxu0 0.0
        %1634 = vmatpush1.msra.mxu0 0.0
        %1635 = vmatprep.subr.mxu0 0.0
        %1636 = vmatpush1.msra.mxu0 0.0
        %1637 = vmatprep.subr.mxu0 0.0
        %1638 = vmatpush1.msra.mxu0 0.0
        %1639 = vmatprep.subr.mxu0 0.0
        %1640 = vmatpush1.msra.mxu0 0.0
        %1641 = vmatprep.subr.mxu0 0.0
        %1642 = vmatpush1.msra.mxu0 0.0
        %1643 = vmatprep.subr.mxu0 0.0
        %1644 = vmatpush1.msra.mxu0 0.0
        %1645 = vmatprep.subr.mxu0 0.0
        %1646 = vmatpush1.msra.mxu0 0.0
        %1647 = vmatprep.mubr.f32.mxu0 0.0
        %1648 = vmatmul.mubr.f32.gmra.mrb[0].mxu0 %v1581
        %v1649 = vpop.f32.mrb[0].mxu0
        %v1650 = vadd.f32 0.0, %v1649
        %v1651 = vpop.f32.mrb[0].mxu0
        %1652 = vdwg.mxu0
        %v1654 = vsel %vm258, %v552, 0
        %1656 = vmatprep.subr.mxu0 0.0
        %1657 = vmatpush1.msra.mxu0 %v1435
        %1658 = vmatprep.subr.mxu0 0.0
        %1659 = vmatpush1.msra.mxu0 0.0
        %1660 = vmatprep.subr.mxu0 0.0
        %1661 = vmatpush1.msra.mxu0 0.0
        %1662 = vmatprep.subr.mxu0 0.0
        %1663 = vmatpush1.msra.mxu0 0.0
        %1664 = vmatprep.subr.mxu0 0.0
        %1665 = vmatpush1.msra.mxu0 0.0
        %1666 = vmatprep.subr.mxu0 0.0
        %1667 = vmatpush1.msra.mxu0 0.0
        %1668 = vmatprep.subr.mxu0 0.0
        %1669 = vmatpush1.msra.mxu0 0.0
        %1670 = vmatprep.subr.mxu0 0.0
        %1671 = vmatpush1.msra.mxu0 0.0
        %1672 = vmatprep.subr.mxu0 0.0
        %1673 = vmatpush1.msra.mxu0 0.0
        %1674 = vmatprep.subr.mxu0 0.0
        %1675 = vmatpush1.msra.mxu0 0.0
        %1676 = vmatprep.subr.mxu0 0.0
        %1677 = vmatpush1.msra.mxu0 0.0
        %1678 = vmatprep.subr.mxu0 0.0
        %1679 = vmatpush1.msra.mxu0 0.0
        %1680 = vmatprep.subr.mxu0 0.0
        %1681 = vmatpush1.msra.mxu0 0.0
        %1682 = vmatprep.subr.mxu0 0.0
        %1683 = vmatpush1.msra.mxu0 0.0
        %1684 = vmatprep.subr.mxu0 0.0
        %1685 = vmatpush1.msra.mxu0 0.0
        %1686 = vmatprep.subr.mxu0 0.0
        %1687 = vmatpush1.msra.mxu0 0.0
        %1688 = vmatprep.subr.mxu0 0.0
        %1689 = vmatpush1.msra.mxu0 0.0
        %1690 = vmatprep.subr.mxu0 0.0
        %1691 = vmatpush1.msra.mxu0 0.0
        %1692 = vmatprep.subr.mxu0 0.0
        %1693 = vmatpush1.msra.mxu0 0.0
        %1694 = vmatprep.subr.mxu0 0.0
        %1695 = vmatpush1.msra.mxu0 0.0
        %1696 = vmatprep.subr.mxu0 0.0
        %1697 = vmatpush1.msra.mxu0 0.0
        %1698 = vmatprep.subr.mxu0 0.0
        %1699 = vmatpush1.msra.mxu0 0.0
        %1700 = vmatprep.subr.mxu0 0.0
        %1701 = vmatpush1.msra.mxu0 0.0
        %1702 = vmatprep.subr.mxu0 0.0
        %1703 = vmatpush1.msra.mxu0 0.0
        %1704 = vmatprep.subr.mxu0 0.0
        %1705 = vmatpush1.msra.mxu0 0.0
        %1706 = vmatprep.subr.mxu0 0.0
        %1707 = vmatpush1.msra.mxu0 0.0
        %1708 = vmatprep.subr.mxu0 0.0
        %1709 = vmatpush1.msra.mxu0 0.0
        %1710 = vmatprep.subr.mxu0 0.0
        %1711 = vmatpush1.msra.mxu0 0.0
        %1712 = vmatprep.subr.mxu0 0.0
        %1713 = vmatpush1.msra.mxu0 0.0
        %1714 = vmatprep.subr.mxu0 0.0
        %1715 = vmatpush1.msra.mxu0 0.0
        %1716 = vmatprep.subr.mxu0 0.0
        %1717 = vmatpush1.msra.mxu0 0.0
        %1718 = vmatprep.subr.mxu0 0.0
        %1719 = vmatpush1.msra.mxu0 0.0
        %1720 = vmatprep.mubr.f32.mxu0 0.0
        %1721 = vmatmul.mubr.f32.gmra.mrb[0].mxu0 %v1654
        %v1722 = vpop.f32.mrb[0].mxu0
        %v1723 = vadd.f32 0.0, %v1722
        %v1724 = vpop.f32.mrb[0].mxu0
        %1725 = vdwg.mxu0
        %v1727 = vsel %vm258, %v625, 0
        %1729 = vmatprep.subr.mxu0 0.0
        %1730 = vmatpush1.msra.mxu0 %v1435
        %1731 = vmatprep.subr.mxu0 0.0
        %1732 = vmatpush1.msra.mxu0 0.0
        %1733 = vmatprep.subr.mxu0 0.0
        %1734 = vmatpush1.msra.mxu0 0.0
        %1735 = vmatprep.subr.mxu0 0.0
        %1736 = vmatpush1.msra.mxu0 0.0
        %1737 = vmatprep.subr.mxu0 0.0
        %1738 = vmatpush1.msra.mxu0 0.0
        %1739 = vmatprep.subr.mxu0 0.0
        %1740 = vmatpush1.msra.mxu0 0.0
        %1741 = vmatprep.subr.mxu0 0.0
        %1742 = vmatpush1.msra.mxu0 0.0
        %1743 = vmatprep.subr.mxu0 0.0
        %1744 = vmatpush1.msra.mxu0 0.0
        %1745 = vmatprep.subr.mxu0 0.0
        %1746 = vmatpush1.msra.mxu0 0.0
        %1747 = vmatprep.subr.mxu0 0.0
        %1748 = vmatpush1.msra.mxu0 0.0
        %1749 = vmatprep.subr.mxu0 0.0
        %1750 = vmatpush1.msra.mxu0 0.0
        %1751 = vmatprep.subr.mxu0 0.0
        %1752 = vmatpush1.msra.mxu0 0.0
        %1753 = vmatprep.subr.mxu0 0.0
        %1754 = vmatpush1.msra.mxu0 0.0
        %1755 = vmatprep.subr.mxu0 0.0
        %1756 = vmatpush1.msra.mxu0 0.0
        %1757 = vmatprep.subr.mxu0 0.0
        %1758 = vmatpush1.msra.mxu0 0.0
        %1759 = vmatprep.subr.mxu0 0.0
        %1760 = vmatpush1.msra.mxu0 0.0
        %1761 = vmatprep.subr.mxu0 0.0
        %1762 = vmatpush1.msra.mxu0 0.0
        %1763 = vmatprep.subr.mxu0 0.0
        %1764 = vmatpush1.msra.mxu0 0.0
        %1765 = vmatprep.subr.mxu0 0.0
        %1766 = vmatpush1.msra.mxu0 0.0
        %1767 = vmatprep.subr.mxu0 0.0
        %1768 = vmatpush1.msra.mxu0 0.0
        %1769 = vmatprep.subr.mxu0 0.0
        %1770 = vmatpush1.msra.mxu0 0.0
        %1771 = vmatprep.subr.mxu0 0.0
        %1772 = vmatpush1.msra.mxu0 0.0
        %1773 = vmatprep.subr.mxu0 0.0
        %1774 = vmatpush1.msra.mxu0 0.0
        %1775 = vmatprep.subr.mxu0 0.0
        %1776 = vmatpush1.msra.mxu0 0.0
        %1777 = vmatprep.subr.mxu0 0.0
        %1778 = vmatpush1.msra.mxu0 0.0
        %1779 = vmatprep.subr.mxu0 0.0
        %1780 = vmatpush1.msra.mxu0 0.0
        %1781 = vmatprep.subr.mxu0 0.0
        %1782 = vmatpush1.msra.mxu0 0.0
        %1783 = vmatprep.subr.mxu0 0.0
        %1784 = vmatpush1.msra.mxu0 0.0
        %1785 = vmatprep.subr.mxu0 0.0
        %1786 = vmatpush1.msra.mxu0 0.0
        %1787 = vmatprep.subr.mxu0 0.0
        %1788 = vmatpush1.msra.mxu0 0.0
        %1789 = vmatprep.subr.mxu0 0.0
        %1790 = vmatpush1.msra.mxu0 0.0
        %1791 = vmatprep.subr.mxu0 0.0
        %1792 = vmatpush1.msra.mxu0 0.0
        %1793 = vmatprep.mubr.f32.mxu0 0.0
        %1794 = vmatmul.mubr.f32.gmra.mrb[0].mxu0 %v1727
        %v1795 = vpop.f32.mrb[0].mxu0
        %v1796 = vadd.f32 0.0, %v1795
        %v1797 = vpop.f32.mrb[0].mxu0
        %1798 = vdwg.mxu0
        %v1800 = vsel %vm258, %v698, 0
        %1802 = vmatprep.subr.mxu0 0.0
        %1803 = vmatpush1.msra.mxu0 %v1435
        %1804 = vmatprep.subr.mxu0 0.0
        %1805 = vmatpush1.msra.mxu0 0.0
        %1806 = vmatprep.subr.mxu0 0.0
        %1807 = vmatpush1.msra.mxu0 0.0
        %1808 = vmatprep.subr.mxu0 0.0
        %1809 = vmatpush1.msra.mxu0 0.0
        %1810 = vmatprep.subr.mxu0 0.0
        %1811 = vmatpush1.msra.mxu0 0.0
        %1812 = vmatprep.subr.mxu0 0.0
        %1813 = vmatpush1.msra.mxu0 0.0
        %1814 = vmatprep.subr.mxu0 0.0
        %1815 = vmatpush1.msra.mxu0 0.0
        %1816 = vmatprep.subr.mxu0 0.0
        %1817 = vmatpush1.msra.mxu0 0.0
        %1818 = vmatprep.subr.mxu0 0.0
        %1819 = vmatpush1.msra.mxu0 0.0
        %1820 = vmatprep.subr.mxu0 0.0
        %1821 = vmatpush1.msra.mxu0 0.0
        %1822 = vmatprep.subr.mxu0 0.0
        %1823 = vmatpush1.msra.mxu0 0.0
        %1824 = vmatprep.subr.mxu0 0.0
        %1825 = vmatpush1.msra.mxu0 0.0
        %1826 = vmatprep.subr.mxu0 0.0
        %1827 = vmatpush1.msra.mxu0 0.0
        %1828 = vmatprep.subr.mxu0 0.0
        %1829 = vmatpush1.msra.mxu0 0.0
        %1830 = vmatprep.subr.mxu0 0.0
        %1831 = vmatpush1.msra.mxu0 0.0
        %1832 = vmatprep.subr.mxu0 0.0
        %1833 = vmatpush1.msra.mxu0 0.0
        %1834 = vmatprep.subr.mxu0 0.0
        %1835 = vmatpush1.msra.mxu0 0.0
        %1836 = vmatprep.subr.mxu0 0.0
        %1837 = vmatpush1.msra.mxu0 0.0
        %1838 = vmatprep.subr.mxu0 0.0
        %1839 = vmatpush1.msra.mxu0 0.0
        %1840 = vmatprep.subr.mxu0 0.0
        %1841 = vmatpush1.msra.mxu0 0.0
        %1842 = vmatprep.subr.mxu0 0.0
        %1843 = vmatpush1.msra.mxu0 0.0
        %1844 = vmatprep.subr.mxu0 0.0
        %1845 = vmatpush1.msra.mxu0 0.0
        %1846 = vmatprep.subr.mxu0 0.0
        %1847 = vmatpush1.msra.mxu0 0.0
        %1848 = vmatprep.subr.mxu0 0.0
        %1849 = vmatpush1.msra.mxu0 0.0
        %1850 = vmatprep.subr.mxu0 0.0
        %1851 = vmatpush1.msra.mxu0 0.0
        %1852 = vmatprep.subr.mxu0 0.0
        %1853 = vmatpush1.msra.mxu0 0.0
        %1854 = vmatprep.subr.mxu0 0.0
        %1855 = vmatpush1.msra.mxu0 0.0
        %1856 = vmatprep.subr.mxu0 0.0
        %1857 = vmatpush1.msra.mxu0 0.0
        %1858 = vmatprep.subr.mxu0 0.0
        %1859 = vmatpush1.msra.mxu0 0.0
        %1860 = vmatprep.subr.mxu0 0.0
        %1861 = vmatpush1.msra.mxu0 0.0
        %1862 = vmatprep.subr.mxu0 0.0
        %1863 = vmatpush1.msra.mxu0 0.0
        %1864 = vmatprep.subr.mxu0 0.0
        %1865 = vmatpush1.msra.mxu0 0.0
        %1866 = vmatprep.mubr.f32.mxu0 0.0
        %1867 = vmatmul.mubr.f32.gmra.mrb[0].mxu0 %v1800
        %v1868 = vpop.f32.mrb[0].mxu0
        %v1869 = vadd.f32 0.0, %v1868
        %v1870 = vpop.f32.mrb[0].mxu0
        %1871 = vdwg.mxu0
        %v1873 = vsel %vm258, %v771, 0
        %1875 = vmatprep.subr.mxu0 0.0
        %1876 = vmatpush1.msra.mxu0 %v1435
        %1877 = vmatprep.subr.mxu0 0.0
        %1878 = vmatpush1.msra.mxu0 0.0
        %1879 = vmatprep.subr.mxu0 0.0
        %1880 = vmatpush1.msra.mxu0 0.0
        %1881 = vmatprep.subr.mxu0 0.0
        %1882 = vmatpush1.msra.mxu0 0.0
        %1883 = vmatprep.subr.mxu0 0.0
        %1884 = vmatpush1.msra.mxu0 0.0
        %1885 = vmatprep.subr.mxu0 0.0
        %1886 = vmatpush1.msra.mxu0 0.0
        %1887 = vmatprep.subr.mxu0 0.0
        %1888 = vmatpush1.msra.mxu0 0.0
        %1889 = vmatprep.subr.mxu0 0.0
        %1890 = vmatpush1.msra.mxu0 0.0
        %1891 = vmatprep.subr.mxu0 0.0
        %1892 = vmatpush1.msra.mxu0 0.0
        %1893 = vmatprep.subr.mxu0 0.0
        %1894 = vmatpush1.msra.mxu0 0.0
        %1895 = vmatprep.subr.mxu0 0.0
        %1896 = vmatpush1.msra.mxu0 0.0
        %1897 = vmatprep.subr.mxu0 0.0
        %1898 = vmatpush1.msra.mxu0 0.0
        %1899 = vmatprep.subr.mxu0 0.0
        %1900 = vmatpush1.msra.mxu0 0.0
        %1901 = vmatprep.subr.mxu0 0.0
        %1902 = vmatpush1.msra.mxu0 0.0
        %1903 = vmatprep.subr.mxu0 0.0
        %1904 = vmatpush1.msra.mxu0 0.0
        %1905 = vmatprep.subr.mxu0 0.0
        %1906 = vmatpush1.msra.mxu0 0.0
        %1907 = vmatprep.subr.mxu0 0.0
        %1908 = vmatpush1.msra.mxu0 0.0
        %1909 = vmatprep.subr.mxu0 0.0
        %1910 = vmatpush1.msra.mxu0 0.0
        %1911 = vmatprep.subr.mxu0 0.0
        %1912 = vmatpush1.msra.mxu0 0.0
        %1913 = vmatprep.subr.mxu0 0.0
        %1914 = vmatpush1.msra.mxu0 0.0
        %1915 = vmatprep.subr.mxu0 0.0
        %1916 = vmatpush1.msra.mxu0 0.0
        %1917 = vmatprep.subr.mxu0 0.0
        %1918 = vmatpush1.msra.mxu0 0.0
        %1919 = vmatprep.subr.mxu0 0.0
        %1920 = vmatpush1.msra.mxu0 0.0
        %1921 = vmatprep.subr.mxu0 0.0
        %1922 = vmatpush1.msra.mxu0 0.0
        %1923 = vmatprep.subr.mxu0 0.0
        %1924 = vmatpush1.msra.mxu0 0.0
        %1925 = vmatprep.subr.mxu0 0.0
        %1926 = vmatpush1.msra.mxu0 0.0
        %1927 = vmatprep.subr.mxu0 0.0
        %1928 = vmatpush1.msra.mxu0 0.0
        %1929 = vmatprep.subr.mxu0 0.0
        %1930 = vmatpush1.msra.mxu0 0.0
        %1931 = vmatprep.subr.mxu0 0.0
        %1932 = vmatpush1.msra.mxu0 0.0
        %1933 = vmatprep.subr.mxu0 0.0
        %1934 = vmatpush1.msra.mxu0 0.0
        %1935 = vmatprep.subr.mxu0 0.0
        %1936 = vmatpush1.msra.mxu0 0.0
        %1937 = vmatprep.subr.mxu0 0.0
        %1938 = vmatpush1.msra.mxu0 0.0
        %1939 = vmatprep.mubr.f32.mxu0 0.0
        %1940 = vmatmul.mubr.f32.gmra.mrb[0].mxu0 %v1873
        %v1941 = vpop.f32.mrb[0].mxu0
        %v1942 = vadd.f32 0.0, %v1941
        %v1943 = vpop.f32.mrb[0].mxu0
        %1944 = vdwg.mxu0
        %v1946 = vsel %vm258, %v844, 0
        %1948 = vmatprep.subr.mxu0 0.0
        %1949 = vmatpush1.msra.mxu0 %v1435
        %1950 = vmatprep.subr.mxu0 0.0
        %1951 = vmatpush1.msra.mxu0 0.0
        %1952 = vmatprep.subr.mxu0 0.0
        %1953 = vmatpush1.msra.mxu0 0.0
        %1954 = vmatprep.subr.mxu0 0.0
        %1955 = vmatpush1.msra.mxu0 0.0
        %1956 = vmatprep.subr.mxu0 0.0
        %1957 = vmatpush1.msra.mxu0 0.0
        %1958 = vmatprep.subr.mxu0 0.0
        %1959 = vmatpush1.msra.mxu0 0.0
        %1960 = vmatprep.subr.mxu0 0.0
        %1961 = vmatpush1.msra.mxu0 0.0
        %1962 = vmatprep.subr.mxu0 0.0
        %1963 = vmatpush1.msra.mxu0 0.0
        %1964 = vmatprep.subr.mxu0 0.0
        %1965 = vmatpush1.msra.mxu0 0.0
        %1966 = vmatprep.subr.mxu0 0.0
        %1967 = vmatpush1.msra.mxu0 0.0
        %1968 = vmatprep.subr.mxu0 0.0
        %1969 = vmatpush1.msra.mxu0 0.0
        %1970 = vmatprep.subr.mxu0 0.0
        %1971 = vmatpush1.msra.mxu0 0.0
        %1972 = vmatprep.subr.mxu0 0.0
        %1973 = vmatpush1.msra.mxu0 0.0
        %1974 = vmatprep.subr.mxu0 0.0
        %1975 = vmatpush1.msra.mxu0 0.0
        %1976 = vmatprep.subr.mxu0 0.0
        %1977 = vmatpush1.msra.mxu0 0.0
        %1978 = vmatprep.subr.mxu0 0.0
        %1979 = vmatpush1.msra.mxu0 0.0
        %1980 = vmatprep.subr.mxu0 0.0
        %1981 = vmatpush1.msra.mxu0 0.0
        %1982 = vmatprep.subr.mxu0 0.0
        %1983 = vmatpush1.msra.mxu0 0.0
        %1984 = vmatprep.subr.mxu0 0.0
        %1985 = vmatpush1.msra.mxu0 0.0
        %1986 = vmatprep.subr.mxu0 0.0
        %1987 = vmatpush1.msra.mxu0 0.0
        %1988 = vmatprep.subr.mxu0 0.0
        %1989 = vmatpush1.msra.mxu0 0.0
        %1990 = vmatprep.subr.mxu0 0.0
        %1991 = vmatpush1.msra.mxu0 0.0
        %1992 = vmatprep.subr.mxu0 0.0
        %1993 = vmatpush1.msra.mxu0 0.0
        %1994 = vmatprep.subr.mxu0 0.0
        %1995 = vmatpush1.msra.mxu0 0.0
        %1996 = vmatprep.subr.mxu0 0.0
        %1997 = vmatpush1.msra.mxu0 0.0
        %1998 = vmatprep.subr.mxu0 0.0
        %1999 = vmatpush1.msra.mxu0 0.0
        %2000 = vmatprep.subr.mxu0 0.0
        %2001 = vmatpush1.msra.mxu0 0.0
        %2002 = vmatprep.subr.mxu0 0.0
        %2003 = vmatpush1.msra.mxu0 0.0
        %2004 = vmatprep.subr.mxu0 0.0
        %2005 = vmatpush1.msra.mxu0 0.0
        %2006 = vmatprep.subr.mxu0 0.0
        %2007 = vmatpush1.msra.mxu0 0.0
        %2008 = vmatprep.subr.mxu0 0.0
        %2009 = vmatpush1.msra.mxu0 0.0
        %2010 = vmatprep.subr.mxu0 0.0
        %2011 = vmatpush1.msra.mxu0 0.0
        %2012 = vmatprep.mubr.f32.mxu0 0.0
        %2013 = vmatmul.mubr.f32.gmra.mrb[0].mxu0 %v1946
        %v2014 = vpop.f32.mrb[0].mxu0
        %v2015 = vadd.f32 0.0, %v2014
        %v2016 = vpop.f32.mrb[0].mxu0
        %2017 = vdwg.mxu0
        %v2019 = vsel %vm258, %v917, 0
        %2021 = vmatprep.subr.mxu0 0.0
        %2022 = vmatpush1.msra.mxu0 %v1435
        %2023 = vmatprep.subr.mxu0 0.0
        %2024 = vmatpush1.msra.mxu0 0.0
        %2025 = vmatprep.subr.mxu0 0.0
        %2026 = vmatpush1.msra.mxu0 0.0
        %2027 = vmatprep.subr.mxu0 0.0
        %2028 = vmatpush1.msra.mxu0 0.0
        %2029 = vmatprep.subr.mxu0 0.0
        %2030 = vmatpush1.msra.mxu0 0.0
        %2031 = vmatprep.subr.mxu0 0.0
        %2032 = vmatpush1.msra.mxu0 0.0
        %2033 = vmatprep.subr.mxu0 0.0
        %2034 = vmatpush1.msra.mxu0 0.0
        %2035 = vmatprep.subr.mxu0 0.0
        %2036 = vmatpush1.msra.mxu0 0.0
        %2037 = vmatprep.subr.mxu0 0.0
        %2038 = vmatpush1.msra.mxu0 0.0
        %2039 = vmatprep.subr.mxu0 0.0
        %2040 = vmatpush1.msra.mxu0 0.0
        %2041 = vmatprep.subr.mxu0 0.0
        %2042 = vmatpush1.msra.mxu0 0.0
        %2043 = vmatprep.subr.mxu0 0.0
        %2044 = vmatpush1.msra.mxu0 0.0
        %2045 = vmatprep.subr.mxu0 0.0
        %2046 = vmatpush1.msra.mxu0 0.0
        %2047 = vmatprep.subr.mxu0 0.0
        %2048 = vmatpush1.msra.mxu0 0.0
        %2049 = vmatprep.subr.mxu0 0.0
        %2050 = vmatpush1.msra.mxu0 0.0
        %2051 = vmatprep.subr.mxu0 0.0
        %2052 = vmatpush1.msra.mxu0 0.0
        %2053 = vmatprep.subr.mxu0 0.0
        %2054 = vmatpush1.msra.mxu0 0.0
        %2055 = vmatprep.subr.mxu0 0.0
        %2056 = vmatpush1.msra.mxu0 0.0
        %2057 = vmatprep.subr.mxu0 0.0
        %2058 = vmatpush1.msra.mxu0 0.0
        %2059 = vmatprep.subr.mxu0 0.0
        %2060 = vmatpush1.msra.mxu0 0.0
        %2061 = vmatprep.subr.mxu0 0.0
        %2062 = vmatpush1.msra.mxu0 0.0
        %2063 = vmatprep.subr.mxu0 0.0
        %2064 = vmatpush1.msra.mxu0 0.0
        %2065 = vmatprep.subr.mxu0 0.0
        %2066 = vmatpush1.msra.mxu0 0.0
        %2067 = vmatprep.subr.mxu0 0.0
        %2068 = vmatpush1.msra.mxu0 0.0
        %2069 = vmatprep.subr.mxu0 0.0
        %2070 = vmatpush1.msra.mxu0 0.0
        %2071 = vmatprep.subr.mxu0 0.0
        %2072 = vmatpush1.msra.mxu0 0.0
        %2073 = vmatprep.subr.mxu0 0.0
        %2074 = vmatpush1.msra.mxu0 0.0
        %2075 = vmatprep.subr.mxu0 0.0
        %2076 = vmatpush1.msra.mxu0 0.0
        %2077 = vmatprep.subr.mxu0 0.0
        %2078 = vmatpush1.msra.mxu0 0.0
        %2079 = vmatprep.subr.mxu0 0.0
        %2080 = vmatpush1.msra.mxu0 0.0
        %2081 = vmatprep.subr.mxu0 0.0
        %2082 = vmatpush1.msra.mxu0 0.0
        %2083 = vmatprep.subr.mxu0 0.0
        %2084 = vmatpush1.msra.mxu0 0.0
        %2085 = vmatprep.mubr.f32.mxu0 0.0
        %2086 = vmatmul.mubr.f32.gmra.mrb[0].mxu0 %v2019
        %v2087 = vpop.f32.mrb[0].mxu0
        %v2088 = vadd.f32 0.0, %v2087
        %v2089 = vpop.f32.mrb[0].mxu0
        %2090 = vdwg.mxu0
        %v2092 = vsel %vm258, %v990, 0
        %2094 = vmatprep.subr.mxu0 0.0
        %2095 = vmatpush1.msra.mxu0 %v1435
        %2096 = vmatprep.subr.mxu0 0.0
        %2097 = vmatpush1.msra.mxu0 0.0
        %2098 = vmatprep.subr.mxu0 0.0
        %2099 = vmatpush1.msra.mxu0 0.0
        %2100 = vmatprep.subr.mxu0 0.0
        %2101 = vmatpush1.msra.mxu0 0.0
        %2102 = vmatprep.subr.mxu0 0.0
        %2103 = vmatpush1.msra.mxu0 0.0
        %2104 = vmatprep.subr.mxu0 0.0
        %2105 = vmatpush1.msra.mxu0 0.0
        %2106 = vmatprep.subr.mxu0 0.0
        %2107 = vmatpush1.msra.mxu0 0.0
        %2108 = vmatprep.subr.mxu0 0.0
        %2109 = vmatpush1.msra.mxu0 0.0
        %2110 = vmatprep.subr.mxu0 0.0
        %2111 = vmatpush1.msra.mxu0 0.0
        %2112 = vmatprep.subr.mxu0 0.0
        %2113 = vmatpush1.msra.mxu0 0.0
        %2114 = vmatprep.subr.mxu0 0.0
        %2115 = vmatpush1.msra.mxu0 0.0
        %2116 = vmatprep.subr.mxu0 0.0
        %2117 = vmatpush1.msra.mxu0 0.0
        %2118 = vmatprep.subr.mxu0 0.0
        %2119 = vmatpush1.msra.mxu0 0.0
        %2120 = vmatprep.subr.mxu0 0.0
        %2121 = vmatpush1.msra.mxu0 0.0
        %2122 = vmatprep.subr.mxu0 0.0
        %2123 = vmatpush1.msra.mxu0 0.0
        %2124 = vmatprep.subr.mxu0 0.0
        %2125 = vmatpush1.msra.mxu0 0.0
        %2126 = vmatprep.subr.mxu0 0.0
        %2127 = vmatpush1.msra.mxu0 0.0
        %2128 = vmatprep.subr.mxu0 0.0
        %2129 = vmatpush1.msra.mxu0 0.0
        %2130 = vmatprep.subr.mxu0 0.0
        %2131 = vmatpush1.msra.mxu0 0.0
        %2132 = vmatprep.subr.mxu0 0.0
        %2133 = vmatpush1.msra.mxu0 0.0
        %2134 = vmatprep.subr.mxu0 0.0
        %2135 = vmatpush1.msra.mxu0 0.0
        %2136 = vmatprep.subr.mxu0 0.0
        %2137 = vmatpush1.msra.mxu0 0.0
        %2138 = vmatprep.subr.mxu0 0.0
        %2139 = vmatpush1.msra.mxu0 0.0
        %2140 = vmatprep.subr.mxu0 0.0
        %2141 = vmatpush1.msra.mxu0 0.0
        %2142 = vmatprep.subr.mxu0 0.0
        %2143 = vmatpush1.msra.mxu0 0.0
        %2144 = vmatprep.subr.mxu0 0.0
        %2145 = vmatpush1.msra.mxu0 0.0
        %2146 = vmatprep.subr.mxu0 0.0
        %2147 = vmatpush1.msra.mxu0 0.0
        %2148 = vmatprep.subr.mxu0 0.0
        %2149 = vmatpush1.msra.mxu0 0.0
        %2150 = vmatprep.subr.mxu0 0.0
        %2151 = vmatpush1.msra.mxu0 0.0
        %2152 = vmatprep.subr.mxu0 0.0
        %2153 = vmatpush1.msra.mxu0 0.0
        %2154 = vmatprep.subr.mxu0 0.0
        %2155 = vmatpush1.msra.mxu0 0.0
        %2156 = vmatprep.subr.mxu0 0.0
        %2157 = vmatpush1.msra.mxu0 0.0
        %2158 = vmatprep.mubr.f32.mxu0 0.0
        %2159 = vmatmul.mubr.f32.gmra.mrb[0].mxu0 %v2092
        %v2160 = vpop.f32.mrb[0].mxu0
        %v2161 = vadd.f32 0.0, %v2160
        %v2162 = vpop.f32.mrb[0].mxu0
        %2163 = vdwg.mxu0
        %v2165 = vsel %vm258, %v1063, 0
        %2167 = vmatprep.subr.mxu0 0.0
        %2168 = vmatpush1.msra.mxu0 %v1435
        %2169 = vmatprep.subr.mxu0 0.0
        %2170 = vmatpush1.msra.mxu0 0.0
        %2171 = vmatprep.subr.mxu0 0.0
        %2172 = vmatpush1.msra.mxu0 0.0
        %2173 = vmatprep.subr.mxu0 0.0
        %2174 = vmatpush1.msra.mxu0 0.0
        %2175 = vmatprep.subr.mxu0 0.0
        %2176 = vmatpush1.msra.mxu0 0.0
        %2177 = vmatprep.subr.mxu0 0.0
        %2178 = vmatpush1.msra.mxu0 0.0
        %2179 = vmatprep.subr.mxu0 0.0
        %2180 = vmatpush1.msra.mxu0 0.0
        %2181 = vmatprep.subr.mxu0 0.0
        %2182 = vmatpush1.msra.mxu0 0.0
        %2183 = vmatprep.subr.mxu0 0.0
        %2184 = vmatpush1.msra.mxu0 0.0
        %2185 = vmatprep.subr.mxu0 0.0
        %2186 = vmatpush1.msra.mxu0 0.0
        %2187 = vmatprep.subr.mxu0 0.0
        %2188 = vmatpush1.msra.mxu0 0.0
        %2189 = vmatprep.subr.mxu0 0.0
        %2190 = vmatpush1.msra.mxu0 0.0
        %2191 = vmatprep.subr.mxu0 0.0
        %2192 = vmatpush1.msra.mxu0 0.0
        %2193 = vmatprep.subr.mxu0 0.0
        %2194 = vmatpush1.msra.mxu0 0.0
        %2195 = vmatprep.subr.mxu0 0.0
        %2196 = vmatpush1.msra.mxu0 0.0
        %2197 = vmatprep.subr.mxu0 0.0
        %2198 = vmatpush1.msra.mxu0 0.0
        %2199 = vmatprep.subr.mxu0 0.0
        %2200 = vmatpush1.msra.mxu0 0.0
        %2201 = vmatprep.subr.mxu0 0.0
        %2202 = vmatpush1.msra.mxu0 0.0
        %2203 = vmatprep.subr.mxu0 0.0
        %2204 = vmatpush1.msra.mxu0 0.0
        %2205 = vmatprep.subr.mxu0 0.0
        %2206 = vmatpush1.msra.mxu0 0.0
        %2207 = vmatprep.subr.mxu0 0.0
        %2208 = vmatpush1.msra.mxu0 0.0
        %2209 = vmatprep.subr.mxu0 0.0
        %2210 = vmatpush1.msra.mxu0 0.0
        %2211 = vmatprep.subr.mxu0 0.0
        %2212 = vmatpush1.msra.mxu0 0.0
        %2213 = vmatprep.subr.mxu0 0.0
        %2214 = vmatpush1.msra.mxu0 0.0
        %2215 = vmatprep.subr.mxu0 0.0
        %2216 = vmatpush1.msra.mxu0 0.0
        %2217 = vmatprep.subr.mxu0 0.0
        %2218 = vmatpush1.msra.mxu0 0.0
        %2219 = vmatprep.subr.mxu0 0.0
        %2220 = vmatpush1.msra.mxu0 0.0
        %2221 = vmatprep.subr.mxu0 0.0
        %2222 = vmatpush1.msra.mxu0 0.0
        %2223 = vmatprep.subr.mxu0 0.0
        %2224 = vmatpush1.msra.mxu0 0.0
        %2225 = vmatprep.subr.mxu0 0.0
        %2226 = vmatpush1.msra.mxu0 0.0
        %2227 = vmatprep.subr.mxu0 0.0
        %2228 = vmatpush1.msra.mxu0 0.0
        %2229 = vmatprep.subr.mxu0 0.0
        %2230 = vmatpush1.msra.mxu0 0.0
        %2231 = vmatprep.mubr.f32.mxu0 0.0
        %2232 = vmatmul.mubr.f32.gmra.mrb[0].mxu0 %v2165
        %v2233 = vpop.f32.mrb[0].mxu0
        %v2234 = vadd.f32 0.0, %v2233
        %v2235 = vpop.f32.mrb[0].mxu0
        %2236 = vdwg.mxu0
        %v2238 = vsel %vm258, %v1136, 0
        %2240 = vmatprep.subr.mxu0 0.0
        %2241 = vmatpush1.msra.mxu0 %v1435
        %2242 = vmatprep.subr.mxu0 0.0
        %2243 = vmatpush1.msra.mxu0 0.0
        %2244 = vmatprep.subr.mxu0 0.0
        %2245 = vmatpush1.msra.mxu0 0.0
        %2246 = vmatprep.subr.mxu0 0.0
        %2247 = vmatpush1.msra.mxu0 0.0
        %2248 = vmatprep.subr.mxu0 0.0
        %2249 = vmatpush1.msra.mxu0 0.0
        %2250 = vmatprep.subr.mxu0 0.0
        %2251 = vmatpush1.msra.mxu0 0.0
        %2252 = vmatprep.subr.mxu0 0.0
        %2253 = vmatpush1.msra.mxu0 0.0
        %2254 = vmatprep.subr.mxu0 0.0
        %2255 = vmatpush1.msra.mxu0 0.0
        %2256 = vmatprep.subr.mxu0 0.0
        %2257 = vmatpush1.msra.mxu0 0.0
        %2258 = vmatprep.subr.mxu0 0.0
        %2259 = vmatpush1.msra.mxu0 0.0
        %2260 = vmatprep.subr.mxu0 0.0
        %2261 = vmatpush1.msra.mxu0 0.0
        %2262 = vmatprep.subr.mxu0 0.0
        %2263 = vmatpush1.msra.mxu0 0.0
        %2264 = vmatprep.subr.mxu0 0.0
        %2265 = vmatpush1.msra.mxu0 0.0
        %2266 = vmatprep.subr.mxu0 0.0
        %2267 = vmatpush1.msra.mxu0 0.0
        %2268 = vmatprep.subr.mxu0 0.0
        %2269 = vmatpush1.msra.mxu0 0.0
        %2270 = vmatprep.subr.mxu0 0.0
        %2271 = vmatpush1.msra.mxu0 0.0
        %2272 = vmatprep.subr.mxu0 0.0
        %2273 = vmatpush1.msra.mxu0 0.0
        %2274 = vmatprep.subr.mxu0 0.0
        %2275 = vmatpush1.msra.mxu0 0.0
        %2276 = vmatprep.subr.mxu0 0.0
        %2277 = vmatpush1.msra.mxu0 0.0
        %2278 = vmatprep.subr.mxu0 0.0
        %2279 = vmatpush1.msra.mxu0 0.0
        %2280 = vmatprep.subr.mxu0 0.0
        %2281 = vmatpush1.msra.mxu0 0.0
        %2282 = vmatprep.subr.mxu0 0.0
        %2283 = vmatpush1.msra.mxu0 0.0
        %2284 = vmatprep.subr.mxu0 0.0
        %2285 = vmatpush1.msra.mxu0 0.0
        %2286 = vmatprep.subr.mxu0 0.0
        %2287 = vmatpush1.msra.mxu0 0.0
        %2288 = vmatprep.subr.mxu0 0.0
        %2289 = vmatpush1.msra.mxu0 0.0
        %2290 = vmatprep.subr.mxu0 0.0
        %2291 = vmatpush1.msra.mxu0 0.0
        %2292 = vmatprep.subr.mxu0 0.0
        %2293 = vmatpush1.msra.mxu0 0.0
        %2294 = vmatprep.subr.mxu0 0.0
        %2295 = vmatpush1.msra.mxu0 0.0
        %2296 = vmatprep.subr.mxu0 0.0
        %2297 = vmatpush1.msra.mxu0 0.0
        %2298 = vmatprep.subr.mxu0 0.0
        %2299 = vmatpush1.msra.mxu0 0.0
        %2300 = vmatprep.subr.mxu0 0.0
        %2301 = vmatpush1.msra.mxu0 0.0
        %2302 = vmatprep.subr.mxu0 0.0
        %2303 = vmatpush1.msra.mxu0 0.0
        %2304 = vmatprep.mubr.f32.mxu0 0.0
        %2305 = vmatmul.mubr.f32.gmra.mrb[0].mxu0 %v2238
        %v2306 = vpop.f32.mrb[0].mxu0
        %v2307 = vadd.f32 0.0, %v2306
        %v2308 = vpop.f32.mrb[0].mxu0
        %2309 = vdwg.mxu0
        %v2311 = vsel %vm258, %v1209, 0
        %2313 = vmatprep.subr.mxu0 0.0
        %2314 = vmatpush1.msra.mxu0 %v1435
        %2315 = vmatprep.subr.mxu0 0.0
        %2316 = vmatpush1.msra.mxu0 0.0
        %2317 = vmatprep.subr.mxu0 0.0
        %2318 = vmatpush1.msra.mxu0 0.0
        %2319 = vmatprep.subr.mxu0 0.0
        %2320 = vmatpush1.msra.mxu0 0.0
        %2321 = vmatprep.subr.mxu0 0.0
        %2322 = vmatpush1.msra.mxu0 0.0
        %2323 = vmatprep.subr.mxu0 0.0
        %2324 = vmatpush1.msra.mxu0 0.0
        %2325 = vmatprep.subr.mxu0 0.0
        %2326 = vmatpush1.msra.mxu0 0.0
        %2327 = vmatprep.subr.mxu0 0.0
        %2328 = vmatpush1.msra.mxu0 0.0
        %2329 = vmatprep.subr.mxu0 0.0
        %2330 = vmatpush1.msra.mxu0 0.0
        %2331 = vmatprep.subr.mxu0 0.0
        %2332 = vmatpush1.msra.mxu0 0.0
        %2333 = vmatprep.subr.mxu0 0.0
        %2334 = vmatpush1.msra.mxu0 0.0
        %2335 = vmatprep.subr.mxu0 0.0
        %2336 = vmatpush1.msra.mxu0 0.0
        %2337 = vmatprep.subr.mxu0 0.0
        %2338 = vmatpush1.msra.mxu0 0.0
        %2339 = vmatprep.subr.mxu0 0.0
        %2340 = vmatpush1.msra.mxu0 0.0
        %2341 = vmatprep.subr.mxu0 0.0
        %2342 = vmatpush1.msra.mxu0 0.0
        %2343 = vmatprep.subr.mxu0 0.0
        %2344 = vmatpush1.msra.mxu0 0.0
        %2345 = vmatprep.subr.mxu0 0.0
        %2346 = vmatpush1.msra.mxu0 0.0
        %2347 = vmatprep.subr.mxu0 0.0
        %2348 = vmatpush1.msra.mxu0 0.0
        %2349 = vmatprep.subr.mxu0 0.0
        %2350 = vmatpush1.msra.mxu0 0.0
        %2351 = vmatprep.subr.mxu0 0.0
        %2352 = vmatpush1.msra.mxu0 0.0
        %2353 = vmatprep.subr.mxu0 0.0
        %2354 = vmatpush1.msra.mxu0 0.0
        %2355 = vmatprep.subr.mxu0 0.0
        %2356 = vmatpush1.msra.mxu0 0.0
        %2357 = vmatprep.subr.mxu0 0.0
        %2358 = vmatpush1.msra.mxu0 0.0
        %2359 = vmatprep.subr.mxu0 0.0
        %2360 = vmatpush1.msra.mxu0 0.0
        %2361 = vmatprep.subr.mxu0 0.0
        %2362 = vmatpush1.msra.mxu0 0.0
        %2363 = vmatprep.subr.mxu0 0.0
        %2364 = vmatpush1.msra.mxu0 0.0
        %2365 = vmatprep.subr.mxu0 0.0
        %2366 = vmatpush1.msra.mxu0 0.0
        %2367 = vmatprep.subr.mxu0 0.0
        %2368 = vmatpush1.msra.mxu0 0.0
        %2369 = vmatprep.subr.mxu0 0.0
        %2370 = vmatpush1.msra.mxu0 0.0
        %2371 = vmatprep.subr.mxu0 0.0
        %2372 = vmatpush1.msra.mxu0 0.0
        %2373 = vmatprep.subr.mxu0 0.0
        %2374 = vmatpush1.msra.mxu0 0.0
        %2375 = vmatprep.subr.mxu0 0.0
        %2376 = vmatpush1.msra.mxu0 0.0
        %2377 = vmatprep.mubr.f32.mxu0 0.0
        %2378 = vmatmul.mubr.f32.gmra.mrb[0].mxu0 %v2311
        %v2379 = vpop.f32.mrb[0].mxu0
        %v2380 = vadd.f32 0.0, %v2379
        %v2381 = vpop.f32.mrb[0].mxu0
        %2382 = vdwg.mxu0
        %v2384 = vsel %vm258, %v1282, 0
        %2386 = vmatprep.subr.mxu0 0.0
        %2387 = vmatpush1.msra.mxu0 %v1435
        %2388 = vmatprep.subr.mxu0 0.0
        %2389 = vmatpush1.msra.mxu0 0.0
        %2390 = vmatprep.subr.mxu0 0.0
        %2391 = vmatpush1.msra.mxu0 0.0
        %2392 = vmatprep.subr.mxu0 0.0
        %2393 = vmatpush1.msra.mxu0 0.0
        %2394 = vmatprep.subr.mxu0 0.0
        %2395 = vmatpush1.msra.mxu0 0.0
        %2396 = vmatprep.subr.mxu0 0.0
        %2397 = vmatpush1.msra.mxu0 0.0
        %2398 = vmatprep.subr.mxu0 0.0
        %2399 = vmatpush1.msra.mxu0 0.0
        %2400 = vmatprep.subr.mxu0 0.0
        %2401 = vmatpush1.msra.mxu0 0.0
        %2402 = vmatprep.subr.mxu0 0.0
        %2403 = vmatpush1.msra.mxu0 0.0
        %2404 = vmatprep.subr.mxu0 0.0
        %2405 = vmatpush1.msra.mxu0 0.0
        %2406 = vmatprep.subr.mxu0 0.0
        %2407 = vmatpush1.msra.mxu0 0.0
        %2408 = vmatprep.subr.mxu0 0.0
        %2409 = vmatpush1.msra.mxu0 0.0
        %2410 = vmatprep.subr.mxu0 0.0
        %2411 = vmatpush1.msra.mxu0 0.0
        %2412 = vmatprep.subr.mxu0 0.0
        %2413 = vmatpush1.msra.mxu0 0.0
        %2414 = vmatprep.subr.mxu0 0.0
        %2415 = vmatpush1.msra.mxu0 0.0
        %2416 = vmatprep.subr.mxu0 0.0
        %2417 = vmatpush1.msra.mxu0 0.0
        %2418 = vmatprep.subr.mxu0 0.0
        %2419 = vmatpush1.msra.mxu0 0.0
        %2420 = vmatprep.subr.mxu0 0.0
        %2421 = vmatpush1.msra.mxu0 0.0
        %2422 = vmatprep.subr.mxu0 0.0
        %2423 = vmatpush1.msra.mxu0 0.0
        %2424 = vmatprep.subr.mxu0 0.0
        %2425 = vmatpush1.msra.mxu0 0.0
        %2426 = vmatprep.subr.mxu0 0.0
        %2427 = vmatpush1.msra.mxu0 0.0
        %2428 = vmatprep.subr.mxu0 0.0
        %2429 = vmatpush1.msra.mxu0 0.0
        %2430 = vmatprep.subr.mxu0 0.0
        %2431 = vmatpush1.msra.mxu0 0.0
        %2432 = vmatprep.subr.mxu0 0.0
        %2433 = vmatpush1.msra.mxu0 0.0
        %2434 = vmatprep.subr.mxu0 0.0
        %2435 = vmatpush1.msra.mxu0 0.0
        %2436 = vmatprep.subr.mxu0 0.0
        %2437 = vmatpush1.msra.mxu0 0.0
        %2438 = vmatprep.subr.mxu0 0.0
        %2439 = vmatpush1.msra.mxu0 0.0
        %2440 = vmatprep.subr.mxu0 0.0
        %2441 = vmatpush1.msra.mxu0 0.0
        %2442 = vmatprep.subr.mxu0 0.0
        %2443 = vmatpush1.msra.mxu0 0.0
        %2444 = vmatprep.subr.mxu0 0.0
        %2445 = vmatpush1.msra.mxu0 0.0
        %2446 = vmatprep.subr.mxu0 0.0
        %2447 = vmatpush1.msra.mxu0 0.0
        %2448 = vmatprep.subr.mxu0 0.0
        %2449 = vmatpush1.msra.mxu0 0.0
        %2450 = vmatprep.mubr.f32.mxu0 0.0
        %2451 = vmatmul.mubr.f32.gmra.mrb[0].mxu0 %v2384
        %v2452 = vpop.f32.mrb[0].mxu0
        %v2453 = vadd.f32 0.0, %v2452
        %v2454 = vpop.f32.mrb[0].mxu0
        %2455 = vdwg.mxu0
        %v2457 = vsel %vm258, %v1355, 0
        %2459 = vmatprep.subr.mxu0 0.0
        %2460 = vmatpush1.msra.mxu0 %v1435
        %2461 = vmatprep.subr.mxu0 0.0
        %2462 = vmatpush1.msra.mxu0 0.0
        %2463 = vmatprep.subr.mxu0 0.0
        %2464 = vmatpush1.msra.mxu0 0.0
        %2465 = vmatprep.subr.mxu0 0.0
        %2466 = vmatpush1.msra.mxu0 0.0
        %2467 = vmatprep.subr.mxu0 0.0
        %2468 = vmatpush1.msra.mxu0 0.0
        %2469 = vmatprep.subr.mxu0 0.0
        %2470 = vmatpush1.msra.mxu0 0.0
        %2471 = vmatprep.subr.mxu0 0.0
        %2472 = vmatpush1.msra.mxu0 0.0
        %2473 = vmatprep.subr.mxu0 0.0
        %2474 = vmatpush1.msra.mxu0 0.0
        %2475 = vmatprep.subr.mxu0 0.0
        %2476 = vmatpush1.msra.mxu0 0.0
        %2477 = vmatprep.subr.mxu0 0.0
        %2478 = vmatpush1.msra.mxu0 0.0
        %2479 = vmatprep.subr.mxu0 0.0
        %2480 = vmatpush1.msra.mxu0 0.0
        %2481 = vmatprep.subr.mxu0 0.0
        %2482 = vmatpush1.msra.mxu0 0.0
        %2483 = vmatprep.subr.mxu0 0.0
        %2484 = vmatpush1.msra.mxu0 0.0
        %2485 = vmatprep.subr.mxu0 0.0
        %2486 = vmatpush1.msra.mxu0 0.0
        %2487 = vmatprep.subr.mxu0 0.0
        %2488 = vmatpush1.msra.mxu0 0.0
        %2489 = vmatprep.subr.mxu0 0.0
        %2490 = vmatpush1.msra.mxu0 0.0
        %2491 = vmatprep.subr.mxu0 0.0
        %2492 = vmatpush1.msra.mxu0 0.0
        %2493 = vmatprep.subr.mxu0 0.0
        %2494 = vmatpush1.msra.mxu0 0.0
        %2495 = vmatprep.subr.mxu0 0.0
        %2496 = vmatpush1.msra.mxu0 0.0
        %2497 = vmatprep.subr.mxu0 0.0
        %2498 = vmatpush1.msra.mxu0 0.0
        %2499 = vmatprep.subr.mxu0 0.0
        %2500 = vmatpush1.msra.mxu0 0.0
        %2501 = vmatprep.subr.mxu0 0.0
        %2502 = vmatpush1.msra.mxu0 0.0
        %2503 = vmatprep.subr.mxu0 0.0
        %2504 = vmatpush1.msra.mxu0 0.0
        %2505 = vmatprep.subr.mxu0 0.0
        %2506 = vmatpush1.msra.mxu0 0.0
        %2507 = vmatprep.subr.mxu0 0.0
        %2508 = vmatpush1.msra.mxu0 0.0
        %2509 = vmatprep.subr.mxu0 0.0
        %2510 = vmatpush1.msra.mxu0 0.0
        %2511 = vmatprep.subr.mxu0 0.0
        %2512 = vmatpush1.msra.mxu0 0.0
        %2513 = vmatprep.subr.mxu0 0.0
        %2514 = vmatpush1.msra.mxu0 0.0
        %2515 = vmatprep.subr.mxu0 0.0
        %2516 = vmatpush1.msra.mxu0 0.0
        %2517 = vmatprep.subr.mxu0 0.0
        %2518 = vmatpush1.msra.mxu0 0.0
        %2519 = vmatprep.subr.mxu0 0.0
        %2520 = vmatpush1.msra.mxu0 0.0
        %2521 = vmatprep.subr.mxu0 0.0
        %2522 = vmatpush1.msra.mxu0 0.0
        %2523 = vmatprep.mubr.f32.mxu0 0.0
        %2524 = vmatmul.mubr.f32.gmra.mrb[0].mxu0 %v2457
        %v2525 = vpop.f32.mrb[0].mxu0
        %v2526 = vadd.f32 0.0, %v2525
        %v2527 = vpop.f32.mrb[0].mxu0
        %2528 = vdwg.mxu0
        %v2530 = vsel %vm258, %v1428, 0
        %2532 = vmatprep.subr.mxu0 0.0
        %2533 = vmatpush1.msra.mxu0 %v1435
        %2534 = vmatprep.subr.mxu0 0.0
        %2535 = vmatpush1.msra.mxu0 0.0
        %2536 = vmatprep.subr.mxu0 0.0
        %2537 = vmatpush1.msra.mxu0 0.0
        %2538 = vmatprep.subr.mxu0 0.0
        %2539 = vmatpush1.msra.mxu0 0.0
        %2540 = vmatprep.subr.mxu0 0.0
        %2541 = vmatpush1.msra.mxu0 0.0
        %2542 = vmatprep.subr.mxu0 0.0
        %2543 = vmatpush1.msra.mxu0 0.0
        %2544 = vmatprep.subr.mxu0 0.0
        %2545 = vmatpush1.msra.mxu0 0.0
        %2546 = vmatprep.subr.mxu0 0.0
        %2547 = vmatpush1.msra.mxu0 0.0
        %2548 = vmatprep.subr.mxu0 0.0
        %2549 = vmatpush1.msra.mxu0 0.0
        %2550 = vmatprep.subr.mxu0 0.0
        %2551 = vmatpush1.msra.mxu0 0.0
        %2552 = vmatprep.subr.mxu0 0.0
        %2553 = vmatpush1.msra.mxu0 0.0
        %2554 = vmatprep.subr.mxu0 0.0
        %2555 = vmatpush1.msra.mxu0 0.0
        %2556 = vmatprep.subr.mxu0 0.0
        %2557 = vmatpush1.msra.mxu0 0.0
        %2558 = vmatprep.subr.mxu0 0.0
        %2559 = vmatpush1.msra.mxu0 0.0
        %2560 = vmatprep.subr.mxu0 0.0
        %2561 = vmatpush1.msra.mxu0 0.0
        %2562 = vmatprep.subr.mxu0 0.0
        %2563 = vmatpush1.msra.mxu0 0.0
        %2564 = vmatprep.subr.mxu0 0.0
        %2565 = vmatpush1.msra.mxu0 0.0
        %2566 = vmatprep.subr.mxu0 0.0
        %2567 = vmatpush1.msra.mxu0 0.0
        %2568 = vmatprep.subr.mxu0 0.0
        %2569 = vmatpush1.msra.mxu0 0.0
        %2570 = vmatprep.subr.mxu0 0.0
        %2571 = vmatpush1.msra.mxu0 0.0
        %2572 = vmatprep.subr.mxu0 0.0
        %2573 = vmatpush1.msra.mxu0 0.0
        %2574 = vmatprep.subr.mxu0 0.0
        %2575 = vmatpush1.msra.mxu0 0.0
        %2576 = vmatprep.subr.mxu0 0.0
        %2577 = vmatpush1.msra.mxu0 0.0
        %2578 = vmatprep.subr.mxu0 0.0
        %2579 = vmatpush1.msra.mxu0 0.0
        %2580 = vmatprep.subr.mxu0 0.0
        %2581 = vmatpush1.msra.mxu0 0.0
        %2582 = vmatprep.subr.mxu0 0.0
        %2583 = vmatpush1.msra.mxu0 0.0
        %2584 = vmatprep.subr.mxu0 0.0
        %2585 = vmatpush1.msra.mxu0 0.0
        %2586 = vmatprep.subr.mxu0 0.0
        %2587 = vmatpush1.msra.mxu0 0.0
        %2588 = vmatprep.subr.mxu0 0.0
        %2589 = vmatpush1.msra.mxu0 0.0
        %2590 = vmatprep.subr.mxu0 0.0
        %2591 = vmatpush1.msra.mxu0 0.0
        %2592 = vmatprep.subr.mxu0 0.0
        %2593 = vmatpush1.msra.mxu0 0.0
        %2594 = vmatprep.subr.mxu0 0.0
        %2595 = vmatpush1.msra.mxu0 0.0
        %2596 = vmatprep.mubr.f32.mxu0 0.0
        %2597 = vmatmul.mubr.f32.gmra.mrb[0].mxu0 %v2530
        %v2598 = vpop.f32.mrb[0].mxu0
        %v2599 = vadd.f32 0.0, %v2598
        %v2600 = vpop.f32.mrb[0].mxu0
        %2601 = vdwg.mxu0
        %v2602 = vsub.f32 %v1504, %v2088
        %v2603 = vsub.f32 %v1577, %v2161
        %v2604 = vsub.f32 %v1650, %v2234
        %v2605 = vsub.f32 %v1723, %v2307
        %v2606 = vsub.f32 %v1796, %v2380
        %v2607 = vsub.f32 %v1869, %v2453
        %v2608 = vsub.f32 %v1942, %v2526
        %v2609 = vsub.f32 %v2015, %v2599
        %v2610 = vxor.u32 %v2602, 2147483648
        %v2611 = vxor.u32 %v2603, 2147483648
        %v2612 = vxor.u32 %v2604, 2147483648
        %v2613 = vxor.u32 %v2605, 2147483648
        %v2614 = vxor.u32 %v2606, 2147483648
        %v2615 = vxor.u32 %v2607, 2147483648
        %v2616 = vxor.u32 %v2608, 2147483648
        %v2617 = vxor.u32 %v2609, 2147483648
        %v2618 = vmul.f32 %v2610, 1.442695
        %v2619 = vpow.pop %v2618
        %v2620 = vmul.f32 %v2611, 1.442695
        %v2621 = vpow.pop %v2620
        %v2622 = vmul.f32 %v2612, 1.442695
        %v2623 = vpow.pop %v2622
        %v2624 = vmul.f32 %v2613, 1.442695
        %v2625 = vpow.pop %v2624
        %v2626 = vmul.f32 %v2614, 1.442695
        %v2627 = vpow.pop %v2626
        %v2628 = vmul.f32 %v2615, 1.442695
        %v2629 = vpow.pop %v2628
        %v2630 = vmul.f32 %v2616, 1.442695
        %v2631 = vpow.pop %v2630
        %v2632 = vmul.f32 %v2617, 1.442695
        %v2633 = vpow.pop %v2632
        %v2634 = vadd.f32 %v2619, 1.0
        %v2635 = vadd.f32 %v2621, 1.0
        %v2636 = vadd.f32 %v2623, 1.0
        %v2637 = vadd.f32 %v2625, 1.0
        %v2638 = vadd.f32 %v2627, 1.0
        %v2639 = vadd.f32 %v2629, 1.0
        %v2640 = vadd.f32 %v2631, 1.0
        %v2641 = vadd.f32 %v2633, 1.0
        %v2642 = vrcp.pop %v2634
        %v2643 = vmul.f32 1.0, %v2642
        %v2644 = vrcp.pop %v2635
        %v2645 = vmul.f32 1.0, %v2644
        %v2646 = vrcp.pop %v2636
        %v2647 = vmul.f32 1.0, %v2646
        %v2648 = vrcp.pop %v2637
        %v2649 = vmul.f32 1.0, %v2648
        %v2650 = vrcp.pop %v2638
        %v2651 = vmul.f32 1.0, %v2650
        %v2652 = vrcp.pop %v2639
        %v2653 = vmul.f32 1.0, %v2652
        %v2654 = vrcp.pop %v2640
        %v2655 = vmul.f32 1.0, %v2654
        %v2656 = vrcp.pop %v2641
        %v2657 = vmul.f32 1.0, %v2656
        %vm2658 = vcmask 130048
        %2659 = vst.msk [vmem:[%s223] sm:$0xff] %vm2658, %v2643
        %2660 = vst.msk [vmem:[%s223 + $0x8] sm:$0xff] %vm2658, %v2645
        %2661 = vst.msk [vmem:[%s223 + $0x10] sm:$0xff] %vm2658, %v2647
        %2662 = vst.msk [vmem:[%s223 + $0x18] sm:$0xff] %vm2658, %v2649
        %2663 = vst.msk [vmem:[%s223 + $0x20] sm:$0xff] %vm2658, %v2651
        %2664 = vst.msk [vmem:[%s223 + $0x28] sm:$0xff] %vm2658, %v2653
        %2665 = vst.msk [vmem:[%s223 + $0x30] sm:$0xff] %vm2658, %v2655
        %2666 = vst.msk [vmem:[%s223 + $0x38] sm:$0xff] %vm2658, %v2657
        %vm2667 = vcmp.ge.f32.partialorder %v2643, 0.5
        %vm2668 = vcmp.ge.f32.partialorder %v2645, 0.5
        %vm2669 = vcmp.ge.f32.partialorder %v2647, 0.5
        %vm2670 = vcmp.ge.f32.partialorder %v2649, 0.5
        %vm2671 = vcmp.ge.f32.partialorder %v2651, 0.5
        %vm2672 = vcmp.ge.f32.partialorder %v2653, 0.5
        %vm2673 = vcmp.ge.f32.partialorder %v2655, 0.5
        %vm2674 = vcmp.ge.f32.partialorder %v2657, 0.5
        %v2675 = vsel %vm2667, 1, 0
        %v2676 = vsel %vm2668, 1, 0
        %v2677 = vsel %vm2669, 1, 0
        %v2678 = vsel %vm2670, 1, 0
        %v2679 = vsel %vm2671, 1, 0
        %v2680 = vsel %vm2672, 1, 0
        %v2681 = vsel %vm2673, 1, 0
        %v2682 = vsel %vm2674, 1, 0
        %v2683 = vsel %vm2658, %v2675, 0
        %v2684 = vsel %vm2658, %v2676, 0
        %v2685 = vsel %vm2658, %v2677, 0
        %v2686 = vsel %vm2658, %v2678, 0
        %v2687 = vsel %vm2658, %v2679, 0
        %v2688 = vadd.s32 %v2683, %v2687
        %v2689 = vsel %vm2658, %v2680, 0
        %v2690 = vadd.s32 %v2684, %v2689
        %v2691 = vsel %vm2658, %v2681, 0
        %v2692 = vadd.s32 %v2685, %v2691
        %v2693 = vsel %vm2658, %v2682, 0
        %v2694 = vadd.s32 %v2686, %v2693
        %v2695 = vadd.s32 %v2688, %v2690
        %v2696 = vadd.s32 %v2692, %v2694
        %v2697 = vadd.s32 %v2695, %v2696
        %2698 = vst.msk [vmem:[%s230] sm:$0xff] %vm2658, %v2697
        %s2699 = sand.u32 %s117, 1
        %s2700 = scalar_lea.sflag [#allocation3], %s2699
        %s2701 = sand.u32 %s117, 1
        %s2702 = smul.addr %s2701, 64
        %s2703 = scalar_lea.vmem [#allocation2], %s2702
        %s2704 = sand.u32 %s145, 1
        %s2705 = scalar_lea.sflag [#allocation5], %s2704
        %s2706 = sand.u32 %s145, 1
        %s2707 = smul.addr %s2706, 8
        %s2708 = scalar_lea.vmem [#allocation4], %s2707
        // Predicated region
        $region33: #{dorn_forward.5} parent=31 // pred_check
          %p2709 = pneg %p127
        $region34: #{dorn_forward.5} parent=31 // pred_check_branch
          %2711 = sbr.rel (%p2709) target = $region36
        $region35: #{dorn_forward.5} parent=31 // pred_region
          %s2713 = ssub.s32 1024, 1024
          %2714 = vsyncadd %s2700, %s2713
          %s2715 = smul.addr %s26, 16
          %s2716 = sadd.s32 %s27, %s2715
          %s2717 = smul.addr %s2716, 128
          %s2718 = scalar_lea.hbm %s3, %s2717
          %s2719 = sshll.u32 %s2703, 4
          %s2720 = int_to_ptr.vmem [resolvable:$true] %s2719
          %2725 = dma.vmem_to_hbm [thread:$0]  %s2720, 1024, %s2718, %s2700, 128, 256, 8
        $region36: #{dorn_forward.5} parent=31 // pred_fallthru
          _
        // Predicated region
        $region37: #{dorn_forward.5} parent=31 // pred_check
          %p2726 = pneg %p155
        $region38: #{dorn_forward.5} parent=31 // pred_check_branch
          %2728 = sbr.rel (%p2726) target = $region40
        $region39: #{dorn_forward.5} parent=31 // pred_region
          %s2730 = ssub.s32 128, 128
          %2731 = vsyncadd %s2705, %s2730
          %s2732 = smul.addr %s26, 2
          %s2733 = sadd.s32 %s27, %s2732
          %s2734 = smul.addr %s2733, 128
          %s2735 = scalar_lea.hbm %s4, %s2734
          %s2737 = sshll.u32 %s2708, 4
          %s2738 = int_to_ptr.vmem [resolvable:$true] %s2737
          %2740 = dma.vmem_to_hbm [thread:$0]  %s2738, 128, %s2735, %s2705
        $region40: #{dorn_forward.5} parent=31 // pred_fallthru
          _
      $region32: #{dorn_forward.5} parent=5 // pred_fallthru
        _
      %p2741 = scmp.le.s32.totalorder 2, %s17
      // Predicated region
      $region41: #{dorn_forward.5} parent=5 // pred_check
        %p2742 = pneg %p2741
      $region42: #{dorn_forward.5} parent=5 // pred_check_branch
        %2744 = sbr.rel (%p2742) target = $region44
      $region43: #{dorn_forward.5} parent=5 // pred_region
        %s2745 = ssub.s32 %s17, 2
        // Predicated region
        $region45: #{dorn_forward.5} parent=43 // pred_check
          %p2746 = pneg %p133
        $region46: #{dorn_forward.5} parent=43 // pred_check_branch
          %2748 = sbr.rel (%p2746) target = $region48
        $region47: #{dorn_forward.5} parent=43 // pred_region
          %s2749 = sand.u32 %s118, 1
          %s2750 = scalar_lea.sflag [#allocation3], %s2749
          %s2751 = sand.u32 %s118, 1
          %s2752 = smul.addr %s2751, 64
          %s2753 = scalar_lea.vmem [#allocation2], %s2752
          %2754 = dma.done %s2750, 1024
        $region48: #{dorn_forward.5} parent=43 // pred_fallthru
          _
        // Predicated region
        $region49: #{dorn_forward.5} parent=43 // pred_check
          %p2755 = pneg %p161
        $region50: #{dorn_forward.5} parent=43 // pred_check_branch
          %2757 = sbr.rel (%p2755) target = $region52
        $region51: #{dorn_forward.5} parent=43 // pred_region
          %s2758 = sand.u32 %s146, 1
          %s2759 = scalar_lea.sflag [#allocation5], %s2758
          %s2760 = sand.u32 %s146, 1
          %s2761 = smul.addr %s2760, 8
          %s2762 = scalar_lea.vmem [#allocation4], %s2761
          %2763 = dma.done %s2759, 128
        $region52: #{dorn_forward.5} parent=43 // pred_fallthru
          _
      $region44: #{dorn_forward.5} parent=5 // pred_fallthru
        _
    $region6: #{dorn_forward.5} parent=1 // loop_footer
      %s21 = sadd.s32 1, %s17
    $region7: #{dorn_forward.5} parent=1 // loop_footer_branch
      %16 = sbr.rel target = $region3
    $region8: #{dorn_forward.5} parent=1 // loop_exit
      _
    %2764 = vsyncpa [#allocation3], 1
    %s2765 = scalar_lea.sflag [#allocation3], 1
    %2766 = vsyncpa %s2765, 1
    %2767 = vsyncpa [#allocation5], 1
    %s2768 = scalar_lea.sflag [#allocation5], 1
    %2769 = vsyncpa %s2768, 1

</llo_original>
